<compile_context>
chip_gen: v7x
topology: tpu7x:2x2x1
jax: 0.10.0
libtpu: 0.0.40
codegen_flags: <defaults>
</compile_context>

<pallas_src>
import functools

import numpy as np
import jax
import jax.numpy as jnp
from jax.experimental import pallas as pl
from jax.experimental.pallas import tpu as pltpu


def merge_block_kernel(up_ref, sc_ref, w1u_ref, w1s_ref, b1_ref, w3_ref, b3_ref,
                       o_ref, *, H):
    f32 = jnp.float32
    hi = jax.lax.Precision.HIGHEST

    # conv1x1 over the (virtually concatenated) channels: two block-diagonal,
    # lane-dense matmuls + bias + ReLU.  No in-kernel or XLA concat of the
    # activations is needed.
    h = jnp.dot(up_ref[...], w1u_ref[...], preferred_element_type=f32, precision=hi)
    h = h + jnp.dot(sc_ref[...], w1s_ref[...], preferred_element_type=f32, precision=hi)
    h = jnp.maximum(h + b1_ref[...], 0.0)                       # (R, W*Cout)

    R, wco = h.shape

    # Vertical (ky) taps of the 3x3 conv: +-1 image-row shift via XLU sublane
    # roll + VPU boundary mask.  The mask zeroes the first/last row of every
    # image, which implements both the zero padding in y and batch-boundary
    # isolation when several images are folded into one block.  Exact 0/1
    # selection -> no precision impact, no MXU work, no (R,R) operand.
    row = jax.lax.broadcasted_iota(jnp.int32, (R, wco), 0)
    h_up = jnp.where(row % H == 0, 0.0, pltpu.roll(h, shift=1, axis=0))        # h[y-1]
    h_dn = jnp.where(row % H == H - 1, 0.0, pltpu.roll(h, shift=R - 1, axis=0))  # h[y+1]

    # Horizontal (kx) taps + x zero padding folded into one block-banded
    # (3*W*Cout, W*Cout) weight: a single K=3*W*Cout matmul replaces three
    # K=W*Cout dots and two VPU adds.  The concat is lane-block aligned
    # (each piece is a multiple of 128 lanes), so it is cheap vreg copies.
    hcat = jnp.concatenate([h_up, h, h_dn], axis=-1)            # (R, 3*W*Cout)
    acc = jnp.dot(hcat, w3_ref[...], preferred_element_type=f32, precision=hi)
    o_ref[...] = (acc + b3_ref[...]).astype(o_ref.dtype)        # dense vst


def prepare_merge_params(w1, b1, w3_hwio, b3, *, W, C_up):
    """Host-side (numpy) one-time restructuring of the Conv2d weights.

    w1:      (C_in, C_out)      — torch conv1x1.weight (Cout,Cin,1,1) transposed
    w3_hwio: (3, 3, C_out, C_out) — torch conv3x3.weight in HWIO layout
    """
    w1 = np.asarray(w1, np.float32)
    b1 = np.asarray(b1, np.float32)
    w3 = np.asarray(w3_hwio, np.float32)
    b3 = np.asarray(b3, np.float32)
    C_out = w1.shape[-1]

    eye_w = np.eye(W, dtype=np.float32)
    w1u_big = np.kron(eye_w, w1[:C_up])                         # (W*C_up, W*C_out)
    w1s_big = np.kron(eye_w, w1[C_up:])                         # (W*C_sc, W*C_out)

    def banded(w_ky):
        # Block-banded (W*C, W*C): block (x_in, x_out) = w_ky[x_in - x_out + 1]
        # for |x_in - x_out| <= 1, else 0 (implements the horizontal zero pad).
        return sum(np.kron(np.eye(W, k=-dx, dtype=np.float32), w_ky[dx + 1])
                   for dx in (-1, 0, 1))

    w3_cat = np.concatenate([banded(w3[ky]) for ky in range(3)], axis=0)  # (3*W*Cout, W*Cout)
    b1_t = np.tile(b1, W).reshape(1, W * C_out)
    b3_t = np.tile(b3, W).reshape(1, W * C_out)

    return dict(w1u=jnp.asarray(w1u_big), w1s=jnp.asarray(w1s_big),
                b1=jnp.asarray(b1_t), w3=jnp.asarray(w3_cat),
                b3=jnp.asarray(b3_t))


def merge_block(up, sc, params, *, fold_batch=None):
    """up: (N,H,W,C_up), sc: (N,H,W,C_sc) NHWC; params from prepare_merge_params."""
    N, H, W, C_up = up.shape
    C_sc = sc.shape[-1]
    wcu, wcs = W * C_up, W * C_sc
    wco = params["w1u"].shape[-1]
    C_out = wco // W
    total_r = N * H

    # Fold the whole batch into one grid step while rows are small (bigger
    # matmul M, no duplicated weight DMA, no per-step overhead); only split
    # rows across grid steps / TensorCores once each step keeps a large M.
    if fold_batch is None:
        fold_batch = total_r <= 512
    r_blk = total_r if fold_batch else H

    # Lane-dense slabs (rows, W*C): a pure reshape of contiguous NHWC, no copy.
    up2d = up.reshape(total_r, wcu)
    sc2d = sc.reshape(total_r, wcs)

    flops = 2 * total_r * (wcu * wco + wcs * wco + 3 * wco * wco)
    bytes_accessed = 4 * (total_r * (wcu + wcs + wco)
                          + (wcu + wcs) * wco + 3 * wco * wco + 2 * wco)

    kernel = functools.partial(merge_block_kernel, H=H)
    out2d = pl.pallas_call(
        kernel,
        out_shape=jax.ShapeDtypeStruct((total_r, wco), jnp.float32),
        grid=(total_r // r_blk,),
        in_specs=[
            pl.BlockSpec((r_blk, wcu), lambda i: (i, 0)),
            pl.BlockSpec((r_blk, wcs), lambda i: (i, 0)),
            pl.BlockSpec((wcu, wco), lambda i: (0, 0)),
            pl.BlockSpec((wcs, wco), lambda i: (0, 0)),
            pl.BlockSpec((1, wco), lambda i: (0, 0)),
            pl.BlockSpec((3 * wco, wco), lambda i: (0, 0)),
            pl.BlockSpec((1, wco), lambda i: (0, 0)),
        ],
        out_specs=pl.BlockSpec((r_blk, wco), lambda i: (i, 0)),
        compiler_params=pltpu.CompilerParams(
            dimension_semantics=("parallel",)),
        cost_estimate=pl.CostEstimate(
            flops=flops, transcendentals=0, bytes_accessed=bytes_accessed),
    )(up2d, sc2d, params["w1u"], params["w1s"], params["b1"],
      params["w3"], params["b3"])

    return out2d.reshape(N, H, W, C_out)


def reference(up, sc, w1, b1, w3_hwio, b3):
    hi = jax.lax.Precision.HIGHEST
    x = jnp.concatenate([up, sc], axis=-1)
    y = jnp.einsum('nhwc,co->nhwo', x, w1, precision=hi) + b1
    y = jnp.maximum(y, 0.0)
    z = jax.lax.conv_general_dilated(
        y, w3_hwio, window_strides=(1, 1), padding='SAME',
        dimension_numbers=('NHWC', 'HWIO', 'NHWC'), precision=hi) + b3
    return z


if __name__ == "__main__":
    # Shapes: upsampled (2,16,16,4) + shortcut (2,16,16,4) NHWC
    # (equivalent of torch NCHW inputs (2,4,16,16)) -> in_channels=8, out_channels=8.
    N, H, W = 2, 16, 16
    C_up, C_sc, C_out = 4, 4, 8
    C_in = C_up + C_sc

    key = jax.random.PRNGKey(0)
    k_up, k_sc, k_w1, k_b1, k_w3, k_b3 = jax.random.split(key, 6)

    upsampled = jax.random.normal(k_up, (N, H, W, C_up), dtype=jnp.float32)
    shortcut = jax.random.normal(k_sc, (N, H, W, C_sc), dtype=jnp.float32)

    # Parameters in torch Conv2d shapes, re-laid-out:
    #   conv1x1.weight (C_out, C_in, 1, 1) -> (C_in, C_out)
    #   conv3x3.weight (C_out, C_out, 3, 3) -> HWIO (3, 3, C_out, C_out)
    w1 = 0.1 * jax.random.normal(k_w1, (C_in, C_out), dtype=jnp.float32)
    b1 = 0.1 * jax.random.normal(k_b1, (C_out,), dtype=jnp.float32)
    w3 = 0.1 * jax.random.normal(k_w3, (3, 3, C_out, C_out), dtype=jnp.float32)
    b3 = 0.1 * jax.random.normal(k_b3, (C_out,), dtype=jnp.float32)

    # One-time host-side weight restructuring (not in the per-call path).
    params = prepare_merge_params(w1, b1, w3, b3, W=W, C_up=C_up)

    out = merge_block(upsampled, shortcut, params)
    out = jax.block_until_ready(out)

    ref = reference(upsampled, shortcut, w1, b1, w3, b3)
    assert out.shape == (N, H, W, C_out)
    assert jnp.allclose(out, ref, atol=1e-4, rtol=1e-4), (
        float(jnp.max(jnp.abs(out - ref))))

    print("KERNEL_OK")
</pallas_src>

<mosaic_0001>
module attributes {stable_mosaic.version = 11 : i64} {
  func.func @merge_block_kernel(%arg0: i32, %arg1: memref<32x64xf32, #tpu.memory_space<vmem>>, %arg2: memref<32x64xf32, #tpu.memory_space<vmem>>, %arg3: memref<64x128xf32, #tpu.memory_space<vmem>>, %arg4: memref<64x128xf32, #tpu.memory_space<vmem>>, %arg5: memref<1x128xf32, #tpu.memory_space<vmem>>, %arg6: memref<384x128xf32, #tpu.memory_space<vmem>>, %arg7: memref<1x128xf32, #tpu.memory_space<vmem>>, %arg8: memref<32x128xf32, #tpu.memory_space<vmem>>) attributes {dimension_semantics = [#tpu.dimension_semantics<parallel>], iteration_bounds = array<i64: 1>, scalar_prefetch = 0 : i64, scratch_operands = 0 : i64, tpu.core_type = #tpu.core_type<tc>, window_params = [{transform_indices = @transform_0, window_bounds = array<i64: 32, 64>}, {transform_indices = @transform_1, window_bounds = array<i64: 32, 64>}, {pipeline_mode = #tpu.pipeline_mode<synchronous>, transform_indices = @transform_2, window_bounds = array<i64: 64, 128>}, {pipeline_mode = #tpu.pipeline_mode<synchronous>, transform_indices = @transform_3, window_bounds = array<i64: 64, 128>}, {pipeline_mode = #tpu.pipeline_mode<synchronous>, transform_indices = @transform_4, window_bounds = array<i64: 1, 128>}, {pipeline_mode = #tpu.pipeline_mode<synchronous>, transform_indices = @transform_5, window_bounds = array<i64: 384, 128>}, {pipeline_mode = #tpu.pipeline_mode<synchronous>, transform_indices = @transform_6, window_bounds = array<i64: 1, 128>}, {transform_indices = @transform_7, window_bounds = array<i64: 32, 128>}]} {
    %c0 = arith.constant 0 : index
    %c0_0 = arith.constant 0 : index
    %0 = vector.load %arg1[%c0, %c0_0] : memref<32x64xf32, #tpu.memory_space<vmem>>, vector<32x64xf32>
    %c0_1 = arith.constant 0 : index
    %c0_2 = arith.constant 0 : index
    %1 = vector.load %arg3[%c0_1, %c0_2] : memref<64x128xf32, #tpu.memory_space<vmem>>, vector<64x128xf32>
    %cst = arith.constant dense<0.000000e+00> : vector<32x128xf32>
    %2 = tpu.matmul %0, %1, %cst {dimension_numbers = #tpu.dot_dimension_numbers<[1], [0], [0], [1], [0, 0, 1, 1], [], []>, precision = #tpu.contract_precision<fp32>} : vector<32x64xf32>, vector<64x128xf32>, vector<32x128xf32> -> vector<32x128xf32>
    %c0_3 = arith.constant 0 : index
    %c0_4 = arith.constant 0 : index
    %3 = vector.load %arg2[%c0_3, %c0_4] : memref<32x64xf32, #tpu.memory_space<vmem>>, vector<32x64xf32>
    %c0_5 = arith.constant 0 : index
    %c0_6 = arith.constant 0 : index
    %4 = vector.load %arg4[%c0_5, %c0_6] : memref<64x128xf32, #tpu.memory_space<vmem>>, vector<64x128xf32>
    %cst_7 = arith.constant dense<0.000000e+00> : vector<32x128xf32>
    %5 = tpu.matmul %3, %4, %cst_7 {dimension_numbers = #tpu.dot_dimension_numbers<[1], [0], [0], [1], [0, 0, 1, 1], [], []>, precision = #tpu.contract_precision<fp32>} : vector<32x64xf32>, vector<64x128xf32>, vector<32x128xf32> -> vector<32x128xf32>
    %6 = arith.addf %2, %5 : vector<32x128xf32>
    %c0_8 = arith.constant 0 : index
    %c0_9 = arith.constant 0 : index
    %7 = vector.load %arg5[%c0_8, %c0_9] : memref<1x128xf32, #tpu.memory_space<vmem>>, vector<1x128xf32>
    %8 = vector.broadcast %7 : vector<1x128xf32> to vector<32x128xf32>
    %9 = arith.addf %6, %8 : vector<32x128xf32>
    %cst_10 = arith.constant 0.000000e+00 : f32
    %10 = vector.broadcast %cst_10 : f32 to vector<32x128xf32>
    %11 = arith.maximumf %9, %10 : vector<32x128xf32>
    %12 = tpu.iota {dimensions = array<i32: 0>} : vector<32x128xi32>
    %c16_i32 = arith.constant 16 : i32
    %c0_i32 = arith.constant 0 : i32
    %13 = arith.cmpi eq, %c16_i32, %c0_i32 : i32
    %c1_i32 = arith.constant 1 : i32
    %14 = arith.select %13, %c1_i32, %c16_i32 : i32
    %15 = vector.broadcast %14 : i32 to vector<32x128xi32>
    %16 = arith.remsi %12, %15 : vector<32x128xi32>
    %c0_i32_11 = arith.constant 0 : i32
    %17 = vector.broadcast %c0_i32_11 : i32 to vector<32x128xi32>
    %18 = arith.cmpi ne, %16, %17 : vector<32x128xi32>
    %c0_i32_12 = arith.constant 0 : i32
    %19 = vector.broadcast %c0_i32_12 : i32 to vector<32x128xi32>
    %20 = arith.cmpi slt, %16, %19 : vector<32x128xi32>
    %c0_i32_13 = arith.constant 0 : i32
    %21 = arith.cmpi slt, %14, %c0_i32_13 : i32
    %22 = vector.broadcast %21 : i1 to vector<32x128xi1>
    %23 = vector.broadcast %22 : vector<32x128xi1> to vector<32x128xi1>
    %24 = arith.xori %20, %23 : vector<32x128xi1>
    %25 = arith.andi %24, %18 : vector<32x128xi1>
    %26 = vector.broadcast %14 : i32 to vector<32x128xi32>
    %27 = arith.addi %16, %26 : vector<32x128xi32>
    %28 = arith.select %25, %27, %16 : vector<32x128xi1>, vector<32x128xi32>
    %c0_i32_14 = arith.constant 0 : i32
    %29 = vector.broadcast %c0_i32_14 : i32 to vector<32x128xi32>
    %30 = arith.cmpi eq, %28, %29 : vector<32x128xi32>
    %c1_i32_15 = arith.constant 1 : i32
    %31 = tpu.dynamic_rotate %11 by %c1_i32_15 dim 0 : vector<32x128xf32>, i32 -> vector<32x128xf32>
    %cst_16 = arith.constant 0.000000e+00 : f32
    %32 = vector.broadcast %cst_16 : f32 to vector<32x128xf32>
    %33 = arith.select %30, %32, %31 : vector<32x128xi1>, vector<32x128xf32>
    %c16_i32_17 = arith.constant 16 : i32
    %c0_i32_18 = arith.constant 0 : i32
    %34 = arith.cmpi eq, %c16_i32_17, %c0_i32_18 : i32
    %c1_i32_19 = arith.constant 1 : i32
    %35 = arith.select %34, %c1_i32_19, %c16_i32_17 : i32
    %36 = vector.broadcast %35 : i32 to vector<32x128xi32>
    %37 = arith.remsi %12, %36 : vector<32x128xi32>
    %c0_i32_20 = arith.constant 0 : i32
    %38 = vector.broadcast %c0_i32_20 : i32 to vector<32x128xi32>
    %39 = arith.cmpi ne, %37, %38 : vector<32x128xi32>
    %c0_i32_21 = arith.constant 0 : i32
    %40 = vector.broadcast %c0_i32_21 : i32 to vector<32x128xi32>
    %41 = arith.cmpi slt, %37, %40 : vector<32x128xi32>
    %c0_i32_22 = arith.constant 0 : i32
    %42 = arith.cmpi slt, %35, %c0_i32_22 : i32
    %43 = vector.broadcast %42 : i1 to vector<32x128xi1>
    %44 = vector.broadcast %43 : vector<32x128xi1> to vector<32x128xi1>
    %45 = arith.xori %41, %44 : vector<32x128xi1>
    %46 = arith.andi %45, %39 : vector<32x128xi1>
    %47 = vector.broadcast %35 : i32 to vector<32x128xi32>
    %48 = arith.addi %37, %47 : vector<32x128xi32>
    %49 = arith.select %46, %48, %37 : vector<32x128xi1>, vector<32x128xi32>
    %c15_i32 = arith.constant 15 : i32
    %50 = vector.broadcast %c15_i32 : i32 to vector<32x128xi32>
    %51 = arith.cmpi eq, %49, %50 : vector<32x128xi32>
    %c31_i32 = arith.constant 31 : i32
    %52 = tpu.dynamic_rotate %11 by %c31_i32 dim 0 : vector<32x128xf32>, i32 -> vector<32x128xf32>
    %cst_23 = arith.constant 0.000000e+00 : f32
    %53 = vector.broadcast %cst_23 : f32 to vector<32x128xf32>
    %54 = arith.select %51, %53, %52 : vector<32x128xi1>, vector<32x128xf32>
    %55 = tpu.concatenate %33, %11, %54 in 1 : vector<32x128xf32>, vector<32x128xf32>, vector<32x128xf32> -> vector<32x384xf32>
    %c0_24 = arith.constant 0 : index
    %c0_25 = arith.constant 0 : index
    %56 = vector.load %arg6[%c0_24, %c0_25] : memref<384x128xf32, #tpu.memory_space<vmem>>, vector<384x128xf32>
    %cst_26 = arith.constant dense<0.000000e+00> : vector<32x128xf32>
    %57 = tpu.matmul %55, %56, %cst_26 {dimension_numbers = #tpu.dot_dimension_numbers<[1], [0], [0], [1], [0, 0, 1, 1], [], []>, precision = #tpu.contract_precision<fp32>} : vector<32x384xf32>, vector<384x128xf32>, vector<32x128xf32> -> vector<32x128xf32>
    %c0_27 = arith.constant 0 : index
    %c0_28 = arith.constant 0 : index
    %58 = vector.load %arg7[%c0_27, %c0_28] : memref<1x128xf32, #tpu.memory_space<vmem>>, vector<1x128xf32>
    %59 = vector.broadcast %58 : vector<1x128xf32> to vector<32x128xf32>
    %60 = arith.addf %57, %59 : vector<32x128xf32>
    %c0_29 = arith.constant 0 : index
    %c0_30 = arith.constant 0 : index
    %61 = vector.load %arg8[%c0_29, %c0_30] : memref<32x128xf32, #tpu.memory_space<vmem>>, vector<32x128xf32>
    tpu.vector_store %arg8[%c0_29, %c0_30], %60 {strides = array<i32>} : memref<32x128xf32, #tpu.memory_space<vmem>>, vector<32x128xf32>,
    return
  }
  func.func @transform_0(%arg0: i32) -> (i32, i32) {
    %c0_i32 = arith.constant 0 : i32
    %c0_i32_0 = arith.constant 0 : i32
    return %arg0, %c0_i32 : i32, i32
  }
  func.func @transform_1(%arg0: i32) -> (i32, i32) {
    %c0_i32 = arith.constant 0 : i32
    %c0_i32_0 = arith.constant 0 : i32
    return %arg0, %c0_i32 : i32, i32
  }
  func.func @transform_2(%arg0: i32) -> (i32, i32) {
    %c0_i32 = arith.constant 0 : i32
    %c0_i32_0 = arith.constant 0 : i32
    %c0_i32_1 = arith.constant 0 : i32
    return %c0_i32, %c0_i32_0 : i32, i32
  }
  func.func @transform_3(%arg0: i32) -> (i32, i32) {
    %c0_i32 = arith.constant 0 : i32
    %c0_i32_0 = arith.constant 0 : i32
    %c0_i32_1 = arith.constant 0 : i32
    return %c0_i32, %c0_i32_0 : i32, i32
  }
  func.func @transform_4(%arg0: i32) -> (i32, i32) {
    %c0_i32 = arith.constant 0 : i32
    %c0_i32_0 = arith.constant 0 : i32
    %c0_i32_1 = arith.constant 0 : i32
    return %c0_i32, %c0_i32_0 : i32, i32
  }
  func.func @transform_5(%arg0: i32) -> (i32, i32) {
    %c0_i32 = arith.constant 0 : i32
    %c0_i32_0 = arith.constant 0 : i32
    %c0_i32_1 = arith.constant 0 : i32
    return %c0_i32, %c0_i32_0 : i32, i32
  }
  func.func @transform_6(%arg0: i32) -> (i32, i32) {
    %c0_i32 = arith.constant 0 : i32
    %c0_i32_0 = arith.constant 0 : i32
    %c0_i32_1 = arith.constant 0 : i32
    return %c0_i32, %c0_i32_0 : i32, i32
  }
  func.func @transform_7(%arg0: i32) -> (i32, i32) {
    %c0_i32 = arith.constant 0 : i32
    %c0_i32_0 = arith.constant 0 : i32
    return %arg0, %c0_i32 : i32, i32
  }
}

</mosaic_0001>

<llo_original>
// kernel: tpu_custom_call.1
$region0: #{tpu_custom_call.1}
  #allocation0 [shape = 'u32[]', space=smem, size = 0x4, offset = 0x4, fixed_abs, tag = 'smem constant byte address 0x4 - core index']
  #allocation1 [shape = 'u32[144,128]{1,0:T(1,128)}', space=vmem, size = 0x12000, scoped, tag = 'internal scratch']
  %s0 = inlined_call_operand.hbm [shape: f32[32,64], index: 0, kind: input, shape index: {}]
  %s1 = inlined_call_operand.hbm [shape: f32[32,64], index: 1, kind: input, shape index: {}]
  %s2 = inlined_call_operand.hbm [shape: f32[64,128], index: 2, kind: input, shape index: {}]
  %s3 = inlined_call_operand.hbm [shape: f32[64,128], index: 3, kind: input, shape index: {}]
  %s4 = inlined_call_operand.vmem [shape: f32[1,128], index: 4, kind: input, shape index: {}]
  %s5 = inlined_call_operand.hbm [shape: f32[384,128], index: 5, kind: input, shape index: {}]
  %s6 = inlined_call_operand.vmem [shape: f32[1,128], index: 6, kind: input, shape index: {}]
  %s7 = inlined_call_operand.hbm [shape: f32[32,128], index: 7, kind: output, shape index: {}]
  %s8 = sld [smem:[#allocation0]]
  $region58: #{tpu_custom_call.1} parent=0
    _
  %s10 = ssub.s32 1, %s8
  %s11 = scalar_select 0, %s10, %s8
  $region1: #{tpu_custom_call.1} parent=0
    #allocation2 [shape = 'u8[16384]{0}', space=vmem, size = 0x4000, scoped, tag = 'input window, operand 0, single buffered']
    #allocation3 [shape = 's32[1]{0}', space=sflag, size = 0x4, scoped, tag = 'scoped memory for tpu_custom_call.1']
    #allocation4 [shape = 's32[1]{0}', space=sflag, size = 0x4, scoped, tag = 'scoped memory for tpu_custom_call.1']
    #allocation5 [shape = 'u8[16384]{0}', space=vmem, size = 0x4000, scoped, tag = 'input window, operand 1, single buffered']
    #allocation6 [shape = 's32[1]{0}', space=sflag, size = 0x4, scoped, tag = 'scoped memory for tpu_custom_call.1']
    #allocation7 [shape = 'u8[32768]{0}', space=vmem, size = 0x8000, scoped, tag = 'input window, operand 2, single buffered']
    #allocation8 [shape = 'u8[32768]{0}', space=vmem, size = 0x8000, scoped, tag = 'input window, operand 3, single buffered']
    #allocation9 [shape = 's32[1]{0}', space=sflag, size = 0x4, scoped, tag = 'scoped memory for tpu_custom_call.1']
    #allocation10 [shape = 'u8[196608]{0}', space=vmem, size = 0x30000, scoped, tag = 'input window, operand 5, single buffered']
    #allocation11 [shape = 'u8[16384]{0}', space=vmem, size = 0x4000, scoped, tag = 'output window, operand 0, single buffered']
    %12 = vsyncpa [#allocation3], 0
    %13 = vsyncpa [#allocation6], 0
    %14 = vsyncpa [#allocation9], 0
    %15 = vsyncpa [#allocation4], 0
    // Predicated region
    $region2: #{tpu_custom_call.1} parent=1 // pred_check
      _
    $region3: #{tpu_custom_call.1} parent=1 // pred_check_branch
      %17 = sbr.rel (0) target = $region5
    $region4: #{tpu_custom_call.1} parent=1 // pred_region
      %s19 = ssub.s32 512, 512
      %20 = vsyncadd [#allocation3], %s19
      %s21 = sshll.u32 [#allocation2], 4
      %s22 = int_to_ptr.vmem [resolvable:$true] %s21
      %27 = dma.hbm_to_vmem [thread:$0]  %s0, 512, %s22, [#allocation3], 128, 128, 8
    $region5: #{tpu_custom_call.1} parent=1 // pred_fallthru
      _
    // Predicated region
    $region6: #{tpu_custom_call.1} parent=1 // pred_check
      _
    $region7: #{tpu_custom_call.1} parent=1 // pred_check_branch
      %29 = sbr.rel (0) target = $region9
    $region8: #{tpu_custom_call.1} parent=1 // pred_region
      %s31 = ssub.s32 512, 512
      %32 = vsyncadd [#allocation6], %s31
      %s33 = sshll.u32 [#allocation5], 4
      %s34 = int_to_ptr.vmem [resolvable:$true] %s33
      %39 = dma.hbm_to_vmem [thread:$0]  %s1, 512, %s34, [#allocation6], 128, 128, 8
    $region9: #{tpu_custom_call.1} parent=1 // pred_fallthru
      _
    // Predicated region
    $region10: #{tpu_custom_call.1} parent=1 // pred_check
      _
    $region11: #{tpu_custom_call.1} parent=1 // pred_check_branch
      %41 = sbr.rel (0) target = $region13
    $region12: #{tpu_custom_call.1} parent=1 // pred_region
      %s43 = ssub.s32 1024, 1024
      %44 = vsyncadd [#allocation6], %s43
      %s45 = sshll.u32 [#allocation7], 4
      %s46 = int_to_ptr.vmem [resolvable:$true] %s45
      %51 = dma.hbm_to_vmem [thread:$0]  %s2, 1024, %s46, [#allocation6], 128, 128, 8
    $region13: #{tpu_custom_call.1} parent=1 // pred_fallthru
      _
    // Predicated region
    $region14: #{tpu_custom_call.1} parent=1 // pred_check
      _
    $region15: #{tpu_custom_call.1} parent=1 // pred_check_branch
      %53 = sbr.rel (0) target = $region17
    $region16: #{tpu_custom_call.1} parent=1 // pred_region
      %s55 = ssub.s32 1024, 1024
      %56 = vsyncadd [#allocation9], %s55
      %s57 = sshll.u32 [#allocation8], 4
      %s58 = int_to_ptr.vmem [resolvable:$true] %s57
      %63 = dma.hbm_to_vmem [thread:$0]  %s3, 1024, %s58, [#allocation9], 128, 128, 8
    $region17: #{tpu_custom_call.1} parent=1 // pred_fallthru
      _
    // Predicated region
    $region18: #{tpu_custom_call.1} parent=1 // pred_check
      _
    $region19: #{tpu_custom_call.1} parent=1 // pred_check_branch
      %65 = sbr.rel (0) target = $region21
    $region20: #{tpu_custom_call.1} parent=1 // pred_region
      _
    $region21: #{tpu_custom_call.1} parent=1 // pred_fallthru
      _
    // Predicated region
    $region22: #{tpu_custom_call.1} parent=1 // pred_check
      _
    $region23: #{tpu_custom_call.1} parent=1 // pred_check_branch
      %67 = sbr.rel (0) target = $region25
    $region24: #{tpu_custom_call.1} parent=1 // pred_region
      %s69 = ssub.s32 6144, 6144
      %70 = vsyncadd [#allocation9], %s69
      %s71 = sshll.u32 [#allocation10], 4
      %s72 = int_to_ptr.vmem [resolvable:$true] %s71
      %77 = dma.hbm_to_vmem [thread:$0]  %s5, 6144, %s72, [#allocation9], 128, 128, 8
    $region25: #{tpu_custom_call.1} parent=1 // pred_fallthru
      _
    // Predicated region
    $region26: #{tpu_custom_call.1} parent=1 // pred_check
      _
    $region27: #{tpu_custom_call.1} parent=1 // pred_check_branch
      %79 = sbr.rel (0) target = $region29
    $region28: #{tpu_custom_call.1} parent=1 // pred_region
      _
    $region29: #{tpu_custom_call.1} parent=1 // pred_fallthru
      _
    // Predicated region
    $region30: #{tpu_custom_call.1} parent=1 // pred_check
      _
    $region31: #{tpu_custom_call.1} parent=1 // pred_check_branch
      %81 = sbr.rel (0) target = $region33
    $region32: #{tpu_custom_call.1} parent=1 // pred_region
      %82 = dma.done [#allocation3], 512
    $region33: #{tpu_custom_call.1} parent=1 // pred_fallthru
      _
    // Predicated region
    $region34: #{tpu_custom_call.1} parent=1 // pred_check
      _
    $region35: #{tpu_custom_call.1} parent=1 // pred_check_branch
      %84 = sbr.rel (0) target = $region37
    $region36: #{tpu_custom_call.1} parent=1 // pred_region
      %85 = dma.done [#allocation6], 512
    $region37: #{tpu_custom_call.1} parent=1 // pred_fallthru
      _
    // Predicated region
    $region38: #{tpu_custom_call.1} parent=1 // pred_check
      _
    $region39: #{tpu_custom_call.1} parent=1 // pred_check_branch
      %87 = sbr.rel (0) target = $region41
    $region40: #{tpu_custom_call.1} parent=1 // pred_region
      %88 = dma.done [#allocation6], 1024
    $region41: #{tpu_custom_call.1} parent=1 // pred_fallthru
      _
    // Predicated region
    $region42: #{tpu_custom_call.1} parent=1 // pred_check
      _
    $region43: #{tpu_custom_call.1} parent=1 // pred_check_branch
      %90 = sbr.rel (0) target = $region45
    $region44: #{tpu_custom_call.1} parent=1 // pred_region
      %91 = dma.done [#allocation9], 1024
    $region45: #{tpu_custom_call.1} parent=1 // pred_fallthru
      _
    // Predicated region
    $region46: #{tpu_custom_call.1} parent=1 // pred_check
      _
    $region47: #{tpu_custom_call.1} parent=1 // pred_check_branch
      %93 = sbr.rel (0) target = $region49
    $region48: #{tpu_custom_call.1} parent=1 // pred_region
      %94 = dma.done [#allocation9], 6144
    $region49: #{tpu_custom_call.1} parent=1 // pred_fallthru
      _
    %v95 = vld [vmem:[#allocation2] sm:$0xff]
    %v96 = vld [vmem:[#allocation2 + $0x8] sm:$0xff]
    %v97 = vld [vmem:[#allocation2 + $0x10] sm:$0xff]
    %v98 = vld [vmem:[#allocation2 + $0x18] sm:$0xff]
    %v99 = vld [vmem:[#allocation7] sm:$0xff]
    %v100 = vld [vmem:[#allocation7 + $0x8] sm:$0xff]
    %v101 = vld [vmem:[#allocation7 + $0x10] sm:$0xff]
    %v102 = vld [vmem:[#allocation7 + $0x18] sm:$0xff]
    %v103 = vld [vmem:[#allocation7 + $0x20] sm:$0xff]
    %v104 = vld [vmem:[#allocation7 + $0x28] sm:$0xff]
    %v105 = vld [vmem:[#allocation7 + $0x30] sm:$0xff]
    %v106 = vld [vmem:[#allocation7 + $0x38] sm:$0xff]
    %v107 = vld [vmem:[#allocation5] sm:$0xff]
    %v108 = vld [vmem:[#allocation5 + $0x8] sm:$0xff]
    %v109 = vld [vmem:[#allocation5 + $0x10] sm:$0xff]
    %v110 = vld [vmem:[#allocation5 + $0x18] sm:$0xff]
    %v111 = vld [vmem:[#allocation8] sm:$0xff]
    %v112 = vld [vmem:[#allocation8 + $0x8] sm:$0xff]
    %v113 = vld [vmem:[#allocation8 + $0x10] sm:$0xff]
    %v114 = vld [vmem:[#allocation8 + $0x18] sm:$0xff]
    %v115 = vld [vmem:[#allocation8 + $0x20] sm:$0xff]
    %v116 = vld [vmem:[#allocation8 + $0x28] sm:$0xff]
    %v117 = vld [vmem:[#allocation8 + $0x30] sm:$0xff]
    %v118 = vld [vmem:[#allocation8 + $0x38] sm:$0xff]
    %vm119 = vcmask 523264
    %v121 = vsel %vm119, %v107, 0
    %v124 = vsel %vm119, %v108, 0
    %v127 = vsel %vm119, %v109, 0
    %v130 = vsel %vm119, %v110, 0
    %132 = vmatprep.subr.mxu0 0.0
    %v133 = vand.u32 %v111, 4294901760
    %134 = vmatpush1.msra.mxu0 %v133
    %135 = vmatprep.subr.mxu0 0.0
    %v136 = vand.u32 %v112, 4294901760
    %137 = vmatpush1.msra.mxu0 %v136
    %138 = vmatprep.subr.mxu0 0.0
    %v139 = vand.u32 %v113, 4294901760
    %140 = vmatpush1.msra.mxu0 %v139
    %141 = vmatprep.subr.mxu0 0.0
    %v142 = vand.u32 %v114, 4294901760
    %143 = vmatpush1.msra.mxu0 %v142
    %144 = vmatprep.subr.mxu0 0.0
    %v145 = vand.u32 %v115, 4294901760
    %146 = vmatpush1.msra.mxu0 %v145
    %147 = vmatprep.subr.mxu0 0.0
    %v148 = vand.u32 %v116, 4294901760
    %149 = vmatpush1.msra.mxu0 %v148
    %150 = vmatprep.subr.mxu0 0.0
    %v151 = vand.u32 %v117, 4294901760
    %152 = vmatpush1.msra.mxu0 %v151
    %153 = vmatprep.subr.mxu0 0.0
    %v154 = vand.u32 %v118, 4294901760
    %155 = vmatpush1.msra.mxu0 %v154
    %156 = vmatprep.subr.mxu0 0.0
    %157 = vmatpush1.msra.mxu0 0.0
    %158 = vmatprep.subr.mxu0 0.0
    %159 = vmatpush1.msra.mxu0 0.0
    %160 = vmatprep.subr.mxu0 0.0
    %161 = vmatpush1.msra.mxu0 0.0
    %162 = vmatprep.subr.mxu0 0.0
    %163 = vmatpush1.msra.mxu0 0.0
    %164 = vmatprep.subr.mxu0 0.0
    %165 = vmatpush1.msra.mxu0 0.0
    %166 = vmatprep.subr.mxu0 0.0
    %167 = vmatpush1.msra.mxu0 0.0
    %168 = vmatprep.subr.mxu0 0.0
    %169 = vmatpush1.msra.mxu0 0.0
    %170 = vmatprep.subr.mxu0 0.0
    %171 = vmatpush1.msra.mxu0 0.0
    %172 = vmatprep.subr.mxu0 0.0
    %173 = vmatpush1.msra.mxu0 0.0
    %174 = vmatprep.subr.mxu0 0.0
    %175 = vmatpush1.msra.mxu0 0.0
    %176 = vmatprep.subr.mxu0 0.0
    %177 = vmatpush1.msra.mxu0 0.0
    %178 = vmatprep.subr.mxu0 0.0
    %179 = vmatpush1.msra.mxu0 0.0
    %180 = vmatprep.subr.mxu0 0.0
    %181 = vmatpush1.msra.mxu0 0.0
    %182 = vmatprep.subr.mxu0 0.0
    %183 = vmatpush1.msra.mxu0 0.0
    %184 = vmatprep.subr.mxu0 0.0
    %185 = vmatpush1.msra.mxu0 0.0
    %186 = vmatprep.subr.mxu0 0.0
    %187 = vmatpush1.msra.mxu0 0.0
    %188 = vmatprep.subr.mxu0 0.0
    %189 = vmatpush1.msra.mxu0 0.0
    %190 = vmatprep.subr.mxu0 0.0
    %191 = vmatpush1.msra.mxu0 0.0
    %192 = vmatprep.subr.mxu0 0.0
    %193 = vmatpush1.msra.mxu0 0.0
    %194 = vmatprep.subr.mxu0 0.0
    %195 = vmatpush1.msra.mxu0 0.0
    %196 = vmatprep.subr.mxu0 0.0
    %197 = vmatpush1.msra.mxu0 0.0
    %198 = vmatprep.subr.mxu0 0.0
    %199 = vmatpush1.msra.mxu0 0.0
    %200 = vmatprep.subr.mxu0 0.0
    %201 = vmatpush1.msra.mxu0 0.0
    %202 = vmatprep.subr.mxu0 0.0
    %203 = vmatpush1.msra.mxu0 0.0
    %204 = vmatprep.mubr.f32.mxu0 0.0
    %v205 = vand.u32 %v121, 4294901760
    %v206 = vsub.f32 %v121, %v205
    %v207 = vand.u32 %v206, 4294901760
    %v208 = vsub.f32 %v206, %v207
    %v209 = vand.u32 %v208, 4294901760
    %210 = vmatmul.mubr.f32.gmra.mrb[0].mxu0 %v209
    %v211 = vpop.f32.mrb[0].mxu0
    %v212 = vadd.f32 0.0, %v211
    %v213 = vpop.f32.mrb[0].mxu0
    %214 = vmatprep.mubr.f32.mxu0 0.0
    %v215 = vand.u32 %v124, 4294901760
    %v216 = vsub.f32 %v124, %v215
    %v217 = vand.u32 %v216, 4294901760
    %v218 = vsub.f32 %v216, %v217
    %v219 = vand.u32 %v218, 4294901760
    %220 = vmatmul.mubr.f32.gmra.mrb[0].mxu0 %v219
    %v221 = vpop.f32.mrb[0].mxu0
    %v222 = vadd.f32 0.0, %v221
    %v223 = vpop.f32.mrb[0].mxu0
    %224 = vmatprep.mubr.f32.mxu0 0.0
    %v225 = vand.u32 %v127, 4294901760
    %v226 = vsub.f32 %v127, %v225
    %v227 = vand.u32 %v226, 4294901760
    %v228 = vsub.f32 %v226, %v227
    %v229 = vand.u32 %v228, 4294901760
    %230 = vmatmul.mubr.f32.gmra.mrb[0].mxu0 %v229
    %v231 = vpop.f32.mrb[0].mxu0
    %v232 = vadd.f32 0.0, %v231
    %v233 = vpop.f32.mrb[0].mxu0
    %234 = vmatprep.mubr.f32.mxu0 0.0
    %v235 = vand.u32 %v130, 4294901760
    %v236 = vsub.f32 %v130, %v235
    %v237 = vand.u32 %v236, 4294901760
    %v238 = vsub.f32 %v236, %v237
    %v239 = vand.u32 %v238, 4294901760
    %240 = vmatmul.mubr.f32.gmra.mrb[0].mxu0 %v239
    %v241 = vpop.f32.mrb[0].mxu0
    %v242 = vadd.f32 0.0, %v241
    %v243 = vpop.f32.mrb[0].mxu0
    %244 = vdwg.mxu0
    %245 = vmatprep.subr.mxu0 0.0
    %v246 = vand.u32 %v111, 4294901760
    %v247 = vsub.f32 %v111, %v246
    %v248 = vand.u32 %v247, 4294901760
    %v249 = vsub.f32 %v247, %v248
    %v250 = vand.u32 %v249, 4294901760
    %251 = vmatpush1.msra.mxu0 %v250
    %252 = vmatprep.subr.mxu0 0.0
    %v253 = vand.u32 %v112, 4294901760
    %v254 = vsub.f32 %v112, %v253
    %v255 = vand.u32 %v254, 4294901760
    %v256 = vsub.f32 %v254, %v255
    %v257 = vand.u32 %v256, 4294901760
    %258 = vmatpush1.msra.mxu0 %v257
    %259 = vmatprep.subr.mxu0 0.0
    %v260 = vand.u32 %v113, 4294901760
    %v261 = vsub.f32 %v113, %v260
    %v262 = vand.u32 %v261, 4294901760
    %v263 = vsub.f32 %v261, %v262
    %v264 = vand.u32 %v263, 4294901760
    %265 = vmatpush1.msra.mxu0 %v264
    %266 = vmatprep.subr.mxu0 0.0
    %v267 = vand.u32 %v114, 4294901760
    %v268 = vsub.f32 %v114, %v267
    %v269 = vand.u32 %v268, 4294901760
    %v270 = vsub.f32 %v268, %v269
    %v271 = vand.u32 %v270, 4294901760
    %272 = vmatpush1.msra.mxu0 %v271
    %273 = vmatprep.subr.mxu0 0.0
    %v274 = vand.u32 %v115, 4294901760
    %v275 = vsub.f32 %v115, %v274
    %v276 = vand.u32 %v275, 4294901760
    %v277 = vsub.f32 %v275, %v276
    %v278 = vand.u32 %v277, 4294901760
    %279 = vmatpush1.msra.mxu0 %v278
    %280 = vmatprep.subr.mxu0 0.0
    %v281 = vand.u32 %v116, 4294901760
    %v282 = vsub.f32 %v116, %v281
    %v283 = vand.u32 %v282, 4294901760
    %v284 = vsub.f32 %v282, %v283
    %v285 = vand.u32 %v284, 4294901760
    %286 = vmatpush1.msra.mxu0 %v285
    %287 = vmatprep.subr.mxu0 0.0
    %v288 = vand.u32 %v117, 4294901760
    %v289 = vsub.f32 %v117, %v288
    %v290 = vand.u32 %v289, 4294901760
    %v291 = vsub.f32 %v289, %v290
    %v292 = vand.u32 %v291, 4294901760
    %293 = vmatpush1.msra.mxu0 %v292
    %294 = vmatprep.subr.mxu0 0.0
    %v295 = vand.u32 %v118, 4294901760
    %v296 = vsub.f32 %v118, %v295
    %v297 = vand.u32 %v296, 4294901760
    %v298 = vsub.f32 %v296, %v297
    %v299 = vand.u32 %v298, 4294901760
    %300 = vmatpush1.msra.mxu0 %v299
    %301 = vmatprep.subr.mxu0 0.0
    %302 = vmatpush1.msra.mxu0 0.0
    %303 = vmatprep.subr.mxu0 0.0
    %304 = vmatpush1.msra.mxu0 0.0
    %305 = vmatprep.subr.mxu0 0.0
    %306 = vmatpush1.msra.mxu0 0.0
    %307 = vmatprep.subr.mxu0 0.0
    %308 = vmatpush1.msra.mxu0 0.0
    %309 = vmatprep.subr.mxu0 0.0
    %310 = vmatpush1.msra.mxu0 0.0
    %311 = vmatprep.subr.mxu0 0.0
    %312 = vmatpush1.msra.mxu0 0.0
    %313 = vmatprep.subr.mxu0 0.0
    %314 = vmatpush1.msra.mxu0 0.0
    %315 = vmatprep.subr.mxu0 0.0
    %316 = vmatpush1.msra.mxu0 0.0
    %317 = vmatprep.subr.mxu0 0.0
    %318 = vmatpush1.msra.mxu0 0.0
    %319 = vmatprep.subr.mxu0 0.0
    %320 = vmatpush1.msra.mxu0 0.0
    %321 = vmatprep.subr.mxu0 0.0
    %322 = vmatpush1.msra.mxu0 0.0
    %323 = vmatprep.subr.mxu0 0.0
    %324 = vmatpush1.msra.mxu0 0.0
    %325 = vmatprep.subr.mxu0 0.0
    %326 = vmatpush1.msra.mxu0 0.0
    %327 = vmatprep.subr.mxu0 0.0
    %328 = vmatpush1.msra.mxu0 0.0
    %329 = vmatprep.subr.mxu0 0.0
    %330 = vmatpush1.msra.mxu0 0.0
    %331 = vmatprep.subr.mxu0 0.0
    %332 = vmatpush1.msra.mxu0 0.0
    %333 = vmatprep.subr.mxu0 0.0
    %334 = vmatpush1.msra.mxu0 0.0
    %335 = vmatprep.subr.mxu0 0.0
    %336 = vmatpush1.msra.mxu0 0.0
    %337 = vmatprep.subr.mxu0 0.0
    %338 = vmatpush1.msra.mxu0 0.0
    %339 = vmatprep.subr.mxu0 0.0
    %340 = vmatpush1.msra.mxu0 0.0
    %341 = vmatprep.subr.mxu0 0.0
    %342 = vmatpush1.msra.mxu0 0.0
    %343 = vmatprep.subr.mxu0 0.0
    %344 = vmatpush1.msra.mxu0 0.0
    %345 = vmatprep.subr.mxu0 0.0
    %346 = vmatpush1.msra.mxu0 0.0
    %347 = vmatprep.subr.mxu0 0.0
    %348 = vmatpush1.msra.mxu0 0.0
    %349 = vmatprep.mubr.f32.mxu0 0.0
    %v350 = vand.u32 %v121, 4294901760
    %351 = vmatmul.mubr.f32.gmra.mrb[0].mxu0 %v350
    %v352 = vpop.f32.mrb[0].mxu0
    %v353 = vadd.f32 %v212, %v352
    %v354 = vpop.f32.mrb[0].mxu0
    %355 = vmatprep.mubr.f32.mxu0 0.0
    %v356 = vand.u32 %v124, 4294901760
    %357 = vmatmul.mubr.f32.gmra.mrb[0].mxu0 %v356
    %v358 = vpop.f32.mrb[0].mxu0
    %v359 = vadd.f32 %v222, %v358
    %v360 = vpop.f32.mrb[0].mxu0
    %361 = vmatprep.mubr.f32.mxu0 0.0
    %v362 = vand.u32 %v127, 4294901760
    %363 = vmatmul.mubr.f32.gmra.mrb[0].mxu0 %v362
    %v364 = vpop.f32.mrb[0].mxu0
    %v365 = vadd.f32 %v232, %v364
    %v366 = vpop.f32.mrb[0].mxu0
    %367 = vmatprep.mubr.f32.mxu0 0.0
    %v368 = vand.u32 %v130, 4294901760
    %369 = vmatmul.mubr.f32.gmra.mrb[0].mxu0 %v368
    %v370 = vpop.f32.mrb[0].mxu0
    %v371 = vadd.f32 %v242, %v370
    %v372 = vpop.f32.mrb[0].mxu0
    %373 = vdwg.mxu0
    %374 = vmatprep.subr.mxu0 0.0
    %v375 = vand.u32 %v111, 4294901760
    %v376 = vsub.f32 %v111, %v375
    %377 = vmatpush1.msra.mxu0 %v376
    %378 = vmatprep.subr.mxu0 0.0
    %v379 = vand.u32 %v112, 4294901760
    %v380 = vsub.f32 %v112, %v379
    %381 = vmatpush1.msra.mxu0 %v380
    %382 = vmatprep.subr.mxu0 0.0
    %v383 = vand.u32 %v113, 4294901760
    %v384 = vsub.f32 %v113, %v383
    %385 = vmatpush1.msra.mxu0 %v384
    %386 = vmatprep.subr.mxu0 0.0
    %v387 = vand.u32 %v114, 4294901760
    %v388 = vsub.f32 %v114, %v387
    %389 = vmatpush1.msra.mxu0 %v388
    %390 = vmatprep.subr.mxu0 0.0
    %v391 = vand.u32 %v115, 4294901760
    %v392 = vsub.f32 %v115, %v391
    %393 = vmatpush1.msra.mxu0 %v392
    %394 = vmatprep.subr.mxu0 0.0
    %v395 = vand.u32 %v116, 4294901760
    %v396 = vsub.f32 %v116, %v395
    %397 = vmatpush1.msra.mxu0 %v396
    %398 = vmatprep.subr.mxu0 0.0
    %v399 = vand.u32 %v117, 4294901760
    %v400 = vsub.f32 %v117, %v399
    %401 = vmatpush1.msra.mxu0 %v400
    %402 = vmatprep.subr.mxu0 0.0
    %v403 = vand.u32 %v118, 4294901760
    %v404 = vsub.f32 %v118, %v403
    %405 = vmatpush1.msra.mxu0 %v404
    %406 = vmatprep.subr.mxu0 0.0
    %407 = vmatpush1.msra.mxu0 0.0
    %408 = vmatprep.subr.mxu0 0.0
    %409 = vmatpush1.msra.mxu0 0.0
    %410 = vmatprep.subr.mxu0 0.0
    %411 = vmatpush1.msra.mxu0 0.0
    %412 = vmatprep.subr.mxu0 0.0
    %413 = vmatpush1.msra.mxu0 0.0
    %414 = vmatprep.subr.mxu0 0.0
    %415 = vmatpush1.msra.mxu0 0.0
    %416 = vmatprep.subr.mxu0 0.0
    %417 = vmatpush1.msra.mxu0 0.0
    %418 = vmatprep.subr.mxu0 0.0
    %419 = vmatpush1.msra.mxu0 0.0
    %420 = vmatprep.subr.mxu0 0.0
    %421 = vmatpush1.msra.mxu0 0.0
    %422 = vmatprep.subr.mxu0 0.0
    %423 = vmatpush1.msra.mxu0 0.0
    %424 = vmatprep.subr.mxu0 0.0
    %425 = vmatpush1.msra.mxu0 0.0
    %426 = vmatprep.subr.mxu0 0.0
    %427 = vmatpush1.msra.mxu0 0.0
    %428 = vmatprep.subr.mxu0 0.0
    %429 = vmatpush1.msra.mxu0 0.0
    %430 = vmatprep.subr.mxu0 0.0
    %431 = vmatpush1.msra.mxu0 0.0
    %432 = vmatprep.subr.mxu0 0.0
    %433 = vmatpush1.msra.mxu0 0.0
    %434 = vmatprep.subr.mxu0 0.0
    %435 = vmatpush1.msra.mxu0 0.0
    %436 = vmatprep.subr.mxu0 0.0
    %437 = vmatpush1.msra.mxu0 0.0
    %438 = vmatprep.subr.mxu0 0.0
    %439 = vmatpush1.msra.mxu0 0.0
    %440 = vmatprep.subr.mxu0 0.0
    %441 = vmatpush1.msra.mxu0 0.0
    %442 = vmatprep.subr.mxu0 0.0
    %443 = vmatpush1.msra.mxu0 0.0
    %444 = vmatprep.subr.mxu0 0.0
    %445 = vmatpush1.msra.mxu0 0.0
    %446 = vmatprep.subr.mxu0 0.0
    %447 = vmatpush1.msra.mxu0 0.0
    %448 = vmatprep.subr.mxu0 0.0
    %449 = vmatpush1.msra.mxu0 0.0
    %450 = vmatprep.subr.mxu0 0.0
    %451 = vmatpush1.msra.mxu0 0.0
    %452 = vmatprep.subr.mxu0 0.0
    %453 = vmatpush1.msra.mxu0 0.0
    %454 = vmatprep.mubr.f32.mxu0 0.0
    %v455 = vand.u32 %v121, 4294901760
    %v456 = vsub.f32 %v121, %v455
    %457 = vmatmul.mubr.f32.gmra.mrb[0].mxu0 %v456
    %v458 = vpop.f32.mrb[0].mxu0
    %v459 = vadd.f32 %v353, %v458
    %v460 = vpop.f32.mrb[0].mxu0
    %461 = vmatprep.mubr.f32.mxu0 0.0
    %v462 = vand.u32 %v124, 4294901760
    %v463 = vsub.f32 %v124, %v462
    %464 = vmatmul.mubr.f32.gmra.mrb[0].mxu0 %v463
    %v465 = vpop.f32.mrb[0].mxu0
    %v466 = vadd.f32 %v359, %v465
    %v467 = vpop.f32.mrb[0].mxu0
    %468 = vmatprep.mubr.f32.mxu0 0.0
    %v469 = vand.u32 %v127, 4294901760
    %v470 = vsub.f32 %v127, %v469
    %471 = vmatmul.mubr.f32.gmra.mrb[0].mxu0 %v470
    %v472 = vpop.f32.mrb[0].mxu0
    %v473 = vadd.f32 %v365, %v472
    %v474 = vpop.f32.mrb[0].mxu0
    %475 = vmatprep.mubr.f32.mxu0 0.0
    %v476 = vand.u32 %v130, 4294901760
    %v477 = vsub.f32 %v130, %v476
    %478 = vmatmul.mubr.f32.gmra.mrb[0].mxu0 %v477
    %v479 = vpop.f32.mrb[0].mxu0
    %v480 = vadd.f32 %v371, %v479
    %v481 = vpop.f32.mrb[0].mxu0
    %482 = vdwg.mxu0
    %483 = vmatprep.subr.mxu0 0.0
    %v484 = vand.u32 %v111, 4294901760
    %485 = vmatpush1.msra.mxu0 %v484
    %486 = vmatprep.subr.mxu0 0.0
    %v487 = vand.u32 %v112, 4294901760
    %488 = vmatpush1.msra.mxu0 %v487
    %489 = vmatprep.subr.mxu0 0.0
    %v490 = vand.u32 %v113, 4294901760
    %491 = vmatpush1.msra.mxu0 %v490
    %492 = vmatprep.subr.mxu0 0.0
    %v493 = vand.u32 %v114, 4294901760
    %494 = vmatpush1.msra.mxu0 %v493
    %495 = vmatprep.subr.mxu0 0.0
    %v496 = vand.u32 %v115, 4294901760
    %497 = vmatpush1.msra.mxu0 %v496
    %498 = vmatprep.subr.mxu0 0.0
    %v499 = vand.u32 %v116, 4294901760
    %500 = vmatpush1.msra.mxu0 %v499
    %501 = vmatprep.subr.mxu0 0.0
    %v502 = vand.u32 %v117, 4294901760
    %503 = vmatpush1.msra.mxu0 %v502
    %504 = vmatprep.subr.mxu0 0.0
    %v505 = vand.u32 %v118, 4294901760
    %506 = vmatpush1.msra.mxu0 %v505
    %507 = vmatprep.subr.mxu0 0.0
    %508 = vmatpush1.msra.mxu0 0.0
    %509 = vmatprep.subr.mxu0 0.0
    %510 = vmatpush1.msra.mxu0 0.0
    %511 = vmatprep.subr.mxu0 0.0
    %512 = vmatpush1.msra.mxu0 0.0
    %513 = vmatprep.subr.mxu0 0.0
    %514 = vmatpush1.msra.mxu0 0.0
    %515 = vmatprep.subr.mxu0 0.0
    %516 = vmatpush1.msra.mxu0 0.0
    %517 = vmatprep.subr.mxu0 0.0
    %518 = vmatpush1.msra.mxu0 0.0
    %519 = vmatprep.subr.mxu0 0.0
    %520 = vmatpush1.msra.mxu0 0.0
    %521 = vmatprep.subr.mxu0 0.0
    %522 = vmatpush1.msra.mxu0 0.0
    %523 = vmatprep.subr.mxu0 0.0
    %524 = vmatpush1.msra.mxu0 0.0
    %525 = vmatprep.subr.mxu0 0.0
    %526 = vmatpush1.msra.mxu0 0.0
    %527 = vmatprep.subr.mxu0 0.0
    %528 = vmatpush1.msra.mxu0 0.0
    %529 = vmatprep.subr.mxu0 0.0
    %530 = vmatpush1.msra.mxu0 0.0
    %531 = vmatprep.subr.mxu0 0.0
    %532 = vmatpush1.msra.mxu0 0.0
    %533 = vmatprep.subr.mxu0 0.0
    %534 = vmatpush1.msra.mxu0 0.0
    %535 = vmatprep.subr.mxu0 0.0
    %536 = vmatpush1.msra.mxu0 0.0
    %537 = vmatprep.subr.mxu0 0.0
    %538 = vmatpush1.msra.mxu0 0.0
    %539 = vmatprep.subr.mxu0 0.0
    %540 = vmatpush1.msra.mxu0 0.0
    %541 = vmatprep.subr.mxu0 0.0
    %542 = vmatpush1.msra.mxu0 0.0
    %543 = vmatprep.subr.mxu0 0.0
    %544 = vmatpush1.msra.mxu0 0.0
    %545 = vmatprep.subr.mxu0 0.0
    %546 = vmatpush1.msra.mxu0 0.0
    %547 = vmatprep.subr.mxu0 0.0
    %548 = vmatpush1.msra.mxu0 0.0
    %549 = vmatprep.subr.mxu0 0.0
    %550 = vmatpush1.msra.mxu0 0.0
    %551 = vmatprep.subr.mxu0 0.0
    %552 = vmatpush1.msra.mxu0 0.0
    %553 = vmatprep.subr.mxu0 0.0
    %554 = vmatpush1.msra.mxu0 0.0
    %555 = vmatprep.mubr.f32.mxu0 0.0
    %v556 = vand.u32 %v121, 4294901760
    %v557 = vsub.f32 %v121, %v556
    %v558 = vand.u32 %v557, 4294901760
    %559 = vmatmul.mubr.f32.gmra.mrb[0].mxu0 %v558
    %v560 = vpop.f32.mrb[0].mxu0
    %v561 = vadd.f32 %v459, %v560
    %v562 = vpop.f32.mrb[0].mxu0
    %563 = vmatprep.mubr.f32.mxu0 0.0
    %v564 = vand.u32 %v124, 4294901760
    %v565 = vsub.f32 %v124, %v564
    %v566 = vand.u32 %v565, 4294901760
    %567 = vmatmul.mubr.f32.gmra.mrb[0].mxu0 %v566
    %v568 = vpop.f32.mrb[0].mxu0
    %v569 = vadd.f32 %v466, %v568
    %v570 = vpop.f32.mrb[0].mxu0
    %571 = vmatprep.mubr.f32.mxu0 0.0
    %v572 = vand.u32 %v127, 4294901760
    %v573 = vsub.f32 %v127, %v572
    %v574 = vand.u32 %v573, 4294901760
    %575 = vmatmul.mubr.f32.gmra.mrb[0].mxu0 %v574
    %v576 = vpop.f32.mrb[0].mxu0
    %v577 = vadd.f32 %v473, %v576
    %v578 = vpop.f32.mrb[0].mxu0
    %579 = vmatprep.mubr.f32.mxu0 0.0
    %v580 = vand.u32 %v130, 4294901760
    %v581 = vsub.f32 %v130, %v580
    %v582 = vand.u32 %v581, 4294901760
    %583 = vmatmul.mubr.f32.gmra.mrb[0].mxu0 %v582
    %v584 = vpop.f32.mrb[0].mxu0
    %v585 = vadd.f32 %v480, %v584
    %v586 = vpop.f32.mrb[0].mxu0
    %587 = vdwg.mxu0
    %588 = vmatprep.subr.mxu0 0.0
    %v589 = vand.u32 %v111, 4294901760
    %v590 = vsub.f32 %v111, %v589
    %v591 = vand.u32 %v590, 4294901760
    %592 = vmatpush1.msra.mxu0 %v591
    %593 = vmatprep.subr.mxu0 0.0
    %v594 = vand.u32 %v112, 4294901760
    %v595 = vsub.f32 %v112, %v594
    %v596 = vand.u32 %v595, 4294901760
    %597 = vmatpush1.msra.mxu0 %v596
    %598 = vmatprep.subr.mxu0 0.0
    %v599 = vand.u32 %v113, 4294901760
    %v600 = vsub.f32 %v113, %v599
    %v601 = vand.u32 %v600, 4294901760
    %602 = vmatpush1.msra.mxu0 %v601
    %603 = vmatprep.subr.mxu0 0.0
    %v604 = vand.u32 %v114, 4294901760
    %v605 = vsub.f32 %v114, %v604
    %v606 = vand.u32 %v605, 4294901760
    %607 = vmatpush1.msra.mxu0 %v606
    %608 = vmatprep.subr.mxu0 0.0
    %v609 = vand.u32 %v115, 4294901760
    %v610 = vsub.f32 %v115, %v609
    %v611 = vand.u32 %v610, 4294901760
    %612 = vmatpush1.msra.mxu0 %v611
    %613 = vmatprep.subr.mxu0 0.0
    %v614 = vand.u32 %v116, 4294901760
    %v615 = vsub.f32 %v116, %v614
    %v616 = vand.u32 %v615, 4294901760
    %617 = vmatpush1.msra.mxu0 %v616
    %618 = vmatprep.subr.mxu0 0.0
    %v619 = vand.u32 %v117, 4294901760
    %v620 = vsub.f32 %v117, %v619
    %v621 = vand.u32 %v620, 4294901760
    %622 = vmatpush1.msra.mxu0 %v621
    %623 = vmatprep.subr.mxu0 0.0
    %v624 = vand.u32 %v118, 4294901760
    %v625 = vsub.f32 %v118, %v624
    %v626 = vand.u32 %v625, 4294901760
    %627 = vmatpush1.msra.mxu0 %v626
    %628 = vmatprep.subr.mxu0 0.0
    %629 = vmatpush1.msra.mxu0 0.0
    %630 = vmatprep.subr.mxu0 0.0
    %631 = vmatpush1.msra.mxu0 0.0
    %632 = vmatprep.subr.mxu0 0.0
    %633 = vmatpush1.msra.mxu0 0.0
    %634 = vmatprep.subr.mxu0 0.0
    %635 = vmatpush1.msra.mxu0 0.0
    %636 = vmatprep.subr.mxu0 0.0
    %637 = vmatpush1.msra.mxu0 0.0
    %638 = vmatprep.subr.mxu0 0.0
    %639 = vmatpush1.msra.mxu0 0.0
    %640 = vmatprep.subr.mxu0 0.0
    %641 = vmatpush1.msra.mxu0 0.0
    %642 = vmatprep.subr.mxu0 0.0
    %643 = vmatpush1.msra.mxu0 0.0
    %644 = vmatprep.subr.mxu0 0.0
    %645 = vmatpush1.msra.mxu0 0.0
    %646 = vmatprep.subr.mxu0 0.0
    %647 = vmatpush1.msra.mxu0 0.0
    %648 = vmatprep.subr.mxu0 0.0
    %649 = vmatpush1.msra.mxu0 0.0
    %650 = vmatprep.subr.mxu0 0.0
    %651 = vmatpush1.msra.mxu0 0.0
    %652 = vmatprep.subr.mxu0 0.0
    %653 = vmatpush1.msra.mxu0 0.0
    %654 = vmatprep.subr.mxu0 0.0
    %655 = vmatpush1.msra.mxu0 0.0
    %656 = vmatprep.subr.mxu0 0.0
    %657 = vmatpush1.msra.mxu0 0.0
    %658 = vmatprep.subr.mxu0 0.0
    %659 = vmatpush1.msra.mxu0 0.0
    %660 = vmatprep.subr.mxu0 0.0
    %661 = vmatpush1.msra.mxu0 0.0
    %662 = vmatprep.subr.mxu0 0.0
    %663 = vmatpush1.msra.mxu0 0.0
    %664 = vmatprep.subr.mxu0 0.0
    %665 = vmatpush1.msra.mxu0 0.0
    %666 = vmatprep.subr.mxu0 0.0
    %667 = vmatpush1.msra.mxu0 0.0
    %668 = vmatprep.subr.mxu0 0.0
    %669 = vmatpush1.msra.mxu0 0.0
    %670 = vmatprep.subr.mxu0 0.0
    %671 = vmatpush1.msra.mxu0 0.0
    %672 = vmatprep.subr.mxu0 0.0
    %673 = vmatpush1.msra.mxu0 0.0
    %674 = vmatprep.subr.mxu0 0.0
    %675 = vmatpush1.msra.mxu0 0.0
    %676 = vmatprep.mubr.f32.mxu0 0.0
    %v677 = vand.u32 %v121, 4294901760
    %678 = vmatmul.mubr.f32.gmra.mrb[0].mxu0 %v677
    %v679 = vpop.f32.mrb[0].mxu0
    %v680 = vadd.f32 %v561, %v679
    %v681 = vpop.f32.mrb[0].mxu0
    %682 = vmatprep.mubr.f32.mxu0 0.0
    %v683 = vand.u32 %v124, 4294901760
    %684 = vmatmul.mubr.f32.gmra.mrb[0].mxu0 %v683
    %v685 = vpop.f32.mrb[0].mxu0
    %v686 = vadd.f32 %v569, %v685
    %v687 = vpop.f32.mrb[0].mxu0
    %688 = vmatprep.mubr.f32.mxu0 0.0
    %v689 = vand.u32 %v127, 4294901760
    %690 = vmatmul.mubr.f32.gmra.mrb[0].mxu0 %v689
    %v691 = vpop.f32.mrb[0].mxu0
    %v692 = vadd.f32 %v577, %v691
    %v693 = vpop.f32.mrb[0].mxu0
    %694 = vmatprep.mubr.f32.mxu0 0.0
    %v695 = vand.u32 %v130, 4294901760
    %696 = vmatmul.mubr.f32.gmra.mrb[0].mxu0 %v695
    %v697 = vpop.f32.mrb[0].mxu0
    %v698 = vadd.f32 %v585, %v697
    %v699 = vpop.f32.mrb[0].mxu0
    %700 = vdwg.mxu0
    %701 = vmatprep.subr.mxu0 0.0
    %v702 = vand.u32 %v111, 4294901760
    %703 = vmatpush1.msra.mxu0 %v702
    %704 = vmatprep.subr.mxu0 0.0
    %v705 = vand.u32 %v112, 4294901760
    %706 = vmatpush1.msra.mxu0 %v705
    %707 = vmatprep.subr.mxu0 0.0
    %v708 = vand.u32 %v113, 4294901760
    %709 = vmatpush1.msra.mxu0 %v708
    %710 = vmatprep.subr.mxu0 0.0
    %v711 = vand.u32 %v114, 4294901760
    %712 = vmatpush1.msra.mxu0 %v711
    %713 = vmatprep.subr.mxu0 0.0
    %v714 = vand.u32 %v115, 4294901760
    %715 = vmatpush1.msra.mxu0 %v714
    %716 = vmatprep.subr.mxu0 0.0
    %v717 = vand.u32 %v116, 4294901760
    %718 = vmatpush1.msra.mxu0 %v717
    %719 = vmatprep.subr.mxu0 0.0
    %v720 = vand.u32 %v117, 4294901760
    %721 = vmatpush1.msra.mxu0 %v720
    %722 = vmatprep.subr.mxu0 0.0
    %v723 = vand.u32 %v118, 4294901760
    %724 = vmatpush1.msra.mxu0 %v723
    %725 = vmatprep.subr.mxu0 0.0
    %726 = vmatpush1.msra.mxu0 0.0
    %727 = vmatprep.subr.mxu0 0.0
    %728 = vmatpush1.msra.mxu0 0.0
    %729 = vmatprep.subr.mxu0 0.0
    %730 = vmatpush1.msra.mxu0 0.0
    %731 = vmatprep.subr.mxu0 0.0
    %732 = vmatpush1.msra.mxu0 0.0
    %733 = vmatprep.subr.mxu0 0.0
    %734 = vmatpush1.msra.mxu0 0.0
    %735 = vmatprep.subr.mxu0 0.0
    %736 = vmatpush1.msra.mxu0 0.0
    %737 = vmatprep.subr.mxu0 0.0
    %738 = vmatpush1.msra.mxu0 0.0
    %739 = vmatprep.subr.mxu0 0.0
    %740 = vmatpush1.msra.mxu0 0.0
    %741 = vmatprep.subr.mxu0 0.0
    %742 = vmatpush1.msra.mxu0 0.0
    %743 = vmatprep.subr.mxu0 0.0
    %744 = vmatpush1.msra.mxu0 0.0
    %745 = vmatprep.subr.mxu0 0.0
    %746 = vmatpush1.msra.mxu0 0.0
    %747 = vmatprep.subr.mxu0 0.0
    %748 = vmatpush1.msra.mxu0 0.0
    %749 = vmatprep.subr.mxu0 0.0
    %750 = vmatpush1.msra.mxu0 0.0
    %751 = vmatprep.subr.mxu0 0.0
    %752 = vmatpush1.msra.mxu0 0.0
    %753 = vmatprep.subr.mxu0 0.0
    %754 = vmatpush1.msra.mxu0 0.0
    %755 = vmatprep.subr.mxu0 0.0
    %756 = vmatpush1.msra.mxu0 0.0
    %757 = vmatprep.subr.mxu0 0.0
    %758 = vmatpush1.msra.mxu0 0.0
    %759 = vmatprep.subr.mxu0 0.0
    %760 = vmatpush1.msra.mxu0 0.0
    %761 = vmatprep.subr.mxu0 0.0
    %762 = vmatpush1.msra.mxu0 0.0
    %763 = vmatprep.subr.mxu0 0.0
    %764 = vmatpush1.msra.mxu0 0.0
    %765 = vmatprep.subr.mxu0 0.0
    %766 = vmatpush1.msra.mxu0 0.0
    %767 = vmatprep.subr.mxu0 0.0
    %768 = vmatpush1.msra.mxu0 0.0
    %769 = vmatprep.subr.mxu0 0.0
    %770 = vmatpush1.msra.mxu0 0.0
    %771 = vmatprep.subr.mxu0 0.0
    %772 = vmatpush1.msra.mxu0 0.0
    %773 = vmatprep.mubr.f32.mxu0 0.0
    %v774 = vand.u32 %v121, 4294901760
    %775 = vmatmul.mubr.f32.gmra.mrb[0].mxu0 %v774
    %v776 = vpop.f32.mrb[0].mxu0
    %v777 = vadd.f32 %v680, %v776
    %v778 = vpop.f32.mrb[0].mxu0
    %779 = vmatprep.mubr.f32.mxu0 0.0
    %v780 = vand.u32 %v124, 4294901760
    %781 = vmatmul.mubr.f32.gmra.mrb[0].mxu0 %v780
    %v782 = vpop.f32.mrb[0].mxu0
    %v783 = vadd.f32 %v686, %v782
    %v784 = vpop.f32.mrb[0].mxu0
    %785 = vmatprep.mubr.f32.mxu0 0.0
    %v786 = vand.u32 %v127, 4294901760
    %787 = vmatmul.mubr.f32.gmra.mrb[0].mxu0 %v786
    %v788 = vpop.f32.mrb[0].mxu0
    %v789 = vadd.f32 %v692, %v788
    %v790 = vpop.f32.mrb[0].mxu0
    %791 = vmatprep.mubr.f32.mxu0 0.0
    %v792 = vand.u32 %v130, 4294901760
    %793 = vmatmul.mubr.f32.gmra.mrb[0].mxu0 %v792
    %v794 = vpop.f32.mrb[0].mxu0
    %v795 = vadd.f32 %v698, %v794
    %v796 = vpop.f32.mrb[0].mxu0
    %797 = vdwg.mxu0
    %v799 = vsel %vm119, %v95, 0
    %v802 = vsel %vm119, %v96, 0
    %v805 = vsel %vm119, %v97, 0
    %v808 = vsel %vm119, %v98, 0
    %810 = vmatprep.subr.mxu0 0.0
    %v811 = vand.u32 %v99, 4294901760
    %812 = vmatpush1.msra.mxu0 %v811
    %813 = vmatprep.subr.mxu0 0.0
    %v814 = vand.u32 %v100, 4294901760
    %815 = vmatpush1.msra.mxu0 %v814
    %816 = vmatprep.subr.mxu0 0.0
    %v817 = vand.u32 %v101, 4294901760
    %818 = vmatpush1.msra.mxu0 %v817
    %819 = vmatprep.subr.mxu0 0.0
    %v820 = vand.u32 %v102, 4294901760
    %821 = vmatpush1.msra.mxu0 %v820
    %822 = vmatprep.subr.mxu0 0.0
    %v823 = vand.u32 %v103, 4294901760
    %824 = vmatpush1.msra.mxu0 %v823
    %825 = vmatprep.subr.mxu0 0.0
    %v826 = vand.u32 %v104, 4294901760
    %827 = vmatpush1.msra.mxu0 %v826
    %828 = vmatprep.subr.mxu0 0.0
    %v829 = vand.u32 %v105, 4294901760
    %830 = vmatpush1.msra.mxu0 %v829
    %831 = vmatprep.subr.mxu0 0.0
    %v832 = vand.u32 %v106, 4294901760
    %833 = vmatpush1.msra.mxu0 %v832
    %834 = vmatprep.subr.mxu0 0.0
    %835 = vmatpush1.msra.mxu0 0.0
    %836 = vmatprep.subr.mxu0 0.0
    %837 = vmatpush1.msra.mxu0 0.0
    %838 = vmatprep.subr.mxu0 0.0
    %839 = vmatpush1.msra.mxu0 0.0
    %840 = vmatprep.subr.mxu0 0.0
    %841 = vmatpush1.msra.mxu0 0.0
    %842 = vmatprep.subr.mxu0 0.0
    %843 = vmatpush1.msra.mxu0 0.0
    %844 = vmatprep.subr.mxu0 0.0
    %845 = vmatpush1.msra.mxu0 0.0
    %846 = vmatprep.subr.mxu0 0.0
    %847 = vmatpush1.msra.mxu0 0.0
    %848 = vmatprep.subr.mxu0 0.0
    %849 = vmatpush1.msra.mxu0 0.0
    %850 = vmatprep.subr.mxu0 0.0
    %851 = vmatpush1.msra.mxu0 0.0
    %852 = vmatprep.subr.mxu0 0.0
    %853 = vmatpush1.msra.mxu0 0.0
    %854 = vmatprep.subr.mxu0 0.0
    %855 = vmatpush1.msra.mxu0 0.0
    %856 = vmatprep.subr.mxu0 0.0
    %857 = vmatpush1.msra.mxu0 0.0
    %858 = vmatprep.subr.mxu0 0.0
    %859 = vmatpush1.msra.mxu0 0.0
    %860 = vmatprep.subr.mxu0 0.0
    %861 = vmatpush1.msra.mxu0 0.0
    %862 = vmatprep.subr.mxu0 0.0
    %863 = vmatpush1.msra.mxu0 0.0
    %864 = vmatprep.subr.mxu0 0.0
    %865 = vmatpush1.msra.mxu0 0.0
    %866 = vmatprep.subr.mxu0 0.0
    %867 = vmatpush1.msra.mxu0 0.0
    %868 = vmatprep.subr.mxu0 0.0
    %869 = vmatpush1.msra.mxu0 0.0
    %870 = vmatprep.subr.mxu0 0.0
    %871 = vmatpush1.msra.mxu0 0.0
    %872 = vmatprep.subr.mxu0 0.0
    %873 = vmatpush1.msra.mxu0 0.0
    %874 = vmatprep.subr.mxu0 0.0
    %875 = vmatpush1.msra.mxu0 0.0
    %876 = vmatprep.subr.mxu0 0.0
    %877 = vmatpush1.msra.mxu0 0.0
    %878 = vmatprep.subr.mxu0 0.0
    %879 = vmatpush1.msra.mxu0 0.0
    %880 = vmatprep.subr.mxu0 0.0
    %881 = vmatpush1.msra.mxu0 0.0
    %882 = vmatprep.mubr.f32.mxu0 0.0
    %v883 = vand.u32 %v799, 4294901760
    %v884 = vsub.f32 %v799, %v883
    %v885 = vand.u32 %v884, 4294901760
    %v886 = vsub.f32 %v884, %v885
    %v887 = vand.u32 %v886, 4294901760
    %888 = vmatmul.mubr.f32.gmra.mrb[0].mxu0 %v887
    %v889 = vpop.f32.mrb[0].mxu0
    %v890 = vadd.f32 %v777, %v889
    %v891 = vpop.f32.mrb[0].mxu0
    %892 = vmatprep.mubr.f32.mxu0 0.0
    %v893 = vand.u32 %v802, 4294901760
    %v894 = vsub.f32 %v802, %v893
    %v895 = vand.u32 %v894, 4294901760
    %v896 = vsub.f32 %v894, %v895
    %v897 = vand.u32 %v896, 4294901760
    %898 = vmatmul.mubr.f32.gmra.mrb[0].mxu0 %v897
    %v899 = vpop.f32.mrb[0].mxu0
    %v900 = vadd.f32 %v783, %v899
    %v901 = vpop.f32.mrb[0].mxu0
    %902 = vmatprep.mubr.f32.mxu0 0.0
    %v903 = vand.u32 %v805, 4294901760
    %v904 = vsub.f32 %v805, %v903
    %v905 = vand.u32 %v904, 4294901760
    %v906 = vsub.f32 %v904, %v905
    %v907 = vand.u32 %v906, 4294901760
    %908 = vmatmul.mubr.f32.gmra.mrb[0].mxu0 %v907
    %v909 = vpop.f32.mrb[0].mxu0
    %v910 = vadd.f32 %v789, %v909
    %v911 = vpop.f32.mrb[0].mxu0
    %912 = vmatprep.mubr.f32.mxu0 0.0
    %v913 = vand.u32 %v808, 4294901760
    %v914 = vsub.f32 %v808, %v913
    %v915 = vand.u32 %v914, 4294901760
    %v916 = vsub.f32 %v914, %v915
    %v917 = vand.u32 %v916, 4294901760
    %918 = vmatmul.mubr.f32.gmra.mrb[0].mxu0 %v917
    %v919 = vpop.f32.mrb[0].mxu0
    %v920 = vadd.f32 %v795, %v919
    %v921 = vpop.f32.mrb[0].mxu0
    %922 = vdwg.mxu0
    %923 = vmatprep.subr.mxu0 0.0
    %v924 = vand.u32 %v99, 4294901760
    %v925 = vsub.f32 %v99, %v924
    %v926 = vand.u32 %v925, 4294901760
    %v927 = vsub.f32 %v925, %v926
    %v928 = vand.u32 %v927, 4294901760
    %929 = vmatpush1.msra.mxu0 %v928
    %930 = vmatprep.subr.mxu0 0.0
    %v931 = vand.u32 %v100, 4294901760
    %v932 = vsub.f32 %v100, %v931
    %v933 = vand.u32 %v932, 4294901760
    %v934 = vsub.f32 %v932, %v933
    %v935 = vand.u32 %v934, 4294901760
    %936 = vmatpush1.msra.mxu0 %v935
    %937 = vmatprep.subr.mxu0 0.0
    %v938 = vand.u32 %v101, 4294901760
    %v939 = vsub.f32 %v101, %v938
    %v940 = vand.u32 %v939, 4294901760
    %v941 = vsub.f32 %v939, %v940
    %v942 = vand.u32 %v941, 4294901760
    %943 = vmatpush1.msra.mxu0 %v942
    %944 = vmatprep.subr.mxu0 0.0
    %v945 = vand.u32 %v102, 4294901760
    %v946 = vsub.f32 %v102, %v945
    %v947 = vand.u32 %v946, 4294901760
    %v948 = vsub.f32 %v946, %v947
    %v949 = vand.u32 %v948, 4294901760
    %950 = vmatpush1.msra.mxu0 %v949
    %951 = vmatprep.subr.mxu0 0.0
    %v952 = vand.u32 %v103, 4294901760
    %v953 = vsub.f32 %v103, %v952
    %v954 = vand.u32 %v953, 4294901760
    %v955 = vsub.f32 %v953, %v954
    %v956 = vand.u32 %v955, 4294901760
    %957 = vmatpush1.msra.mxu0 %v956
    %958 = vmatprep.subr.mxu0 0.0
    %v959 = vand.u32 %v104, 4294901760
    %v960 = vsub.f32 %v104, %v959
    %v961 = vand.u32 %v960, 4294901760
    %v962 = vsub.f32 %v960, %v961
    %v963 = vand.u32 %v962, 4294901760
    %964 = vmatpush1.msra.mxu0 %v963
    %965 = vmatprep.subr.mxu0 0.0
    %v966 = vand.u32 %v105, 4294901760
    %v967 = vsub.f32 %v105, %v966
    %v968 = vand.u32 %v967, 4294901760
    %v969 = vsub.f32 %v967, %v968
    %v970 = vand.u32 %v969, 4294901760
    %971 = vmatpush1.msra.mxu0 %v970
    %972 = vmatprep.subr.mxu0 0.0
    %v973 = vand.u32 %v106, 4294901760
    %v974 = vsub.f32 %v106, %v973
    %v975 = vand.u32 %v974, 4294901760
    %v976 = vsub.f32 %v974, %v975
    %v977 = vand.u32 %v976, 4294901760
    %978 = vmatpush1.msra.mxu0 %v977
    %979 = vmatprep.subr.mxu0 0.0
    %980 = vmatpush1.msra.mxu0 0.0
    %981 = vmatprep.subr.mxu0 0.0
    %982 = vmatpush1.msra.mxu0 0.0
    %983 = vmatprep.subr.mxu0 0.0
    %984 = vmatpush1.msra.mxu0 0.0
    %985 = vmatprep.subr.mxu0 0.0
    %986 = vmatpush1.msra.mxu0 0.0
    %987 = vmatprep.subr.mxu0 0.0
    %988 = vmatpush1.msra.mxu0 0.0
    %989 = vmatprep.subr.mxu0 0.0
    %990 = vmatpush1.msra.mxu0 0.0
    %991 = vmatprep.subr.mxu0 0.0
    %992 = vmatpush1.msra.mxu0 0.0
    %993 = vmatprep.subr.mxu0 0.0
    %994 = vmatpush1.msra.mxu0 0.0
    %995 = vmatprep.subr.mxu0 0.0
    %996 = vmatpush1.msra.mxu0 0.0
    %997 = vmatprep.subr.mxu0 0.0
    %998 = vmatpush1.msra.mxu0 0.0
    %999 = vmatprep.subr.mxu0 0.0
    %1000 = vmatpush1.msra.mxu0 0.0
    %1001 = vmatprep.subr.mxu0 0.0
    %1002 = vmatpush1.msra.mxu0 0.0
    %1003 = vmatprep.subr.mxu0 0.0
    %1004 = vmatpush1.msra.mxu0 0.0
    %1005 = vmatprep.subr.mxu0 0.0
    %1006 = vmatpush1.msra.mxu0 0.0
    %1007 = vmatprep.subr.mxu0 0.0
    %1008 = vmatpush1.msra.mxu0 0.0
    %1009 = vmatprep.subr.mxu0 0.0
    %1010 = vmatpush1.msra.mxu0 0.0
    %1011 = vmatprep.subr.mxu0 0.0
    %1012 = vmatpush1.msra.mxu0 0.0
    %1013 = vmatprep.subr.mxu0 0.0
    %1014 = vmatpush1.msra.mxu0 0.0
    %1015 = vmatprep.subr.mxu0 0.0
    %1016 = vmatpush1.msra.mxu0 0.0
    %1017 = vmatprep.subr.mxu0 0.0
    %1018 = vmatpush1.msra.mxu0 0.0
    %1019 = vmatprep.subr.mxu0 0.0
    %1020 = vmatpush1.msra.mxu0 0.0
    %1021 = vmatprep.subr.mxu0 0.0
    %1022 = vmatpush1.msra.mxu0 0.0
    %1023 = vmatprep.subr.mxu0 0.0
    %1024 = vmatpush1.msra.mxu0 0.0
    %1025 = vmatprep.subr.mxu0 0.0
    %1026 = vmatpush1.msra.mxu0 0.0
    %1027 = vmatprep.mubr.f32.mxu0 0.0
    %v1028 = vand.u32 %v799, 4294901760
    %1029 = vmatmul.mubr.f32.gmra.mrb[0].mxu0 %v1028
    %v1030 = vpop.f32.mrb[0].mxu0
    %v1031 = vadd.f32 %v890, %v1030
    %v1032 = vpop.f32.mrb[0].mxu0
    %1033 = vmatprep.mubr.f32.mxu0 0.0
    %v1034 = vand.u32 %v802, 4294901760
    %1035 = vmatmul.mubr.f32.gmra.mrb[0].mxu0 %v1034
    %v1036 = vpop.f32.mrb[0].mxu0
    %v1037 = vadd.f32 %v900, %v1036
    %v1038 = vpop.f32.mrb[0].mxu0
    %1039 = vmatprep.mubr.f32.mxu0 0.0
    %v1040 = vand.u32 %v805, 4294901760
    %1041 = vmatmul.mubr.f32.gmra.mrb[0].mxu0 %v1040
    %v1042 = vpop.f32.mrb[0].mxu0
    %v1043 = vadd.f32 %v910, %v1042
    %v1044 = vpop.f32.mrb[0].mxu0
    %1045 = vmatprep.mubr.f32.mxu0 0.0
    %v1046 = vand.u32 %v808, 4294901760
    %1047 = vmatmul.mubr.f32.gmra.mrb[0].mxu0 %v1046
    %v1048 = vpop.f32.mrb[0].mxu0
    %v1049 = vadd.f32 %v920, %v1048
    %v1050 = vpop.f32.mrb[0].mxu0
    %1051 = vdwg.mxu0
    %1052 = vmatprep.subr.mxu0 0.0
    %v1053 = vand.u32 %v99, 4294901760
    %v1054 = vsub.f32 %v99, %v1053
    %1055 = vmatpush1.msra.mxu0 %v1054
    %1056 = vmatprep.subr.mxu0 0.0
    %v1057 = vand.u32 %v100, 4294901760
    %v1058 = vsub.f32 %v100, %v1057
    %1059 = vmatpush1.msra.mxu0 %v1058
    %1060 = vmatprep.subr.mxu0 0.0
    %v1061 = vand.u32 %v101, 4294901760
    %v1062 = vsub.f32 %v101, %v1061
    %1063 = vmatpush1.msra.mxu0 %v1062
    %1064 = vmatprep.subr.mxu0 0.0
    %v1065 = vand.u32 %v102, 4294901760
    %v1066 = vsub.f32 %v102, %v1065
    %1067 = vmatpush1.msra.mxu0 %v1066
    %1068 = vmatprep.subr.mxu0 0.0
    %v1069 = vand.u32 %v103, 4294901760
    %v1070 = vsub.f32 %v103, %v1069
    %1071 = vmatpush1.msra.mxu0 %v1070
    %1072 = vmatprep.subr.mxu0 0.0
    %v1073 = vand.u32 %v104, 4294901760
    %v1074 = vsub.f32 %v104, %v1073
    %1075 = vmatpush1.msra.mxu0 %v1074
    %1076 = vmatprep.subr.mxu0 0.0
    %v1077 = vand.u32 %v105, 4294901760
    %v1078 = vsub.f32 %v105, %v1077
    %1079 = vmatpush1.msra.mxu0 %v1078
    %1080 = vmatprep.subr.mxu0 0.0
    %v1081 = vand.u32 %v106, 4294901760
    %v1082 = vsub.f32 %v106, %v1081
    %1083 = vmatpush1.msra.mxu0 %v1082
    %1084 = vmatprep.subr.mxu0 0.0
    %1085 = vmatpush1.msra.mxu0 0.0
    %1086 = vmatprep.subr.mxu0 0.0
    %1087 = vmatpush1.msra.mxu0 0.0
    %1088 = vmatprep.subr.mxu0 0.0
    %1089 = vmatpush1.msra.mxu0 0.0
    %1090 = vmatprep.subr.mxu0 0.0
    %1091 = vmatpush1.msra.mxu0 0.0
    %1092 = vmatprep.subr.mxu0 0.0
    %1093 = vmatpush1.msra.mxu0 0.0
    %1094 = vmatprep.subr.mxu0 0.0
    %1095 = vmatpush1.msra.mxu0 0.0
    %1096 = vmatprep.subr.mxu0 0.0
    %1097 = vmatpush1.msra.mxu0 0.0
    %1098 = vmatprep.subr.mxu0 0.0
    %1099 = vmatpush1.msra.mxu0 0.0
    %1100 = vmatprep.subr.mxu0 0.0
    %1101 = vmatpush1.msra.mxu0 0.0
    %1102 = vmatprep.subr.mxu0 0.0
    %1103 = vmatpush1.msra.mxu0 0.0
    %1104 = vmatprep.subr.mxu0 0.0
    %1105 = vmatpush1.msra.mxu0 0.0
    %1106 = vmatprep.subr.mxu0 0.0
    %1107 = vmatpush1.msra.mxu0 0.0
    %1108 = vmatprep.subr.mxu0 0.0
    %1109 = vmatpush1.msra.mxu0 0.0
    %1110 = vmatprep.subr.mxu0 0.0
    %1111 = vmatpush1.msra.mxu0 0.0
    %1112 = vmatprep.subr.mxu0 0.0
    %1113 = vmatpush1.msra.mxu0 0.0
    %1114 = vmatprep.subr.mxu0 0.0
    %1115 = vmatpush1.msra.mxu0 0.0
    %1116 = vmatprep.subr.mxu0 0.0
    %1117 = vmatpush1.msra.mxu0 0.0
    %1118 = vmatprep.subr.mxu0 0.0
    %1119 = vmatpush1.msra.mxu0 0.0
    %1120 = vmatprep.subr.mxu0 0.0
    %1121 = vmatpush1.msra.mxu0 0.0
    %1122 = vmatprep.subr.mxu0 0.0
    %1123 = vmatpush1.msra.mxu0 0.0
    %1124 = vmatprep.subr.mxu0 0.0
    %1125 = vmatpush1.msra.mxu0 0.0
    %1126 = vmatprep.subr.mxu0 0.0
    %1127 = vmatpush1.msra.mxu0 0.0
    %1128 = vmatprep.subr.mxu0 0.0
    %1129 = vmatpush1.msra.mxu0 0.0
    %1130 = vmatprep.subr.mxu0 0.0
    %1131 = vmatpush1.msra.mxu0 0.0
    %1132 = vmatprep.mubr.f32.mxu0 0.0
    %v1133 = vand.u32 %v799, 4294901760
    %v1134 = vsub.f32 %v799, %v1133
    %1135 = vmatmul.mubr.f32.gmra.mrb[0].mxu0 %v1134
    %v1136 = vpop.f32.mrb[0].mxu0
    %v1137 = vadd.f32 %v1031, %v1136
    %v1138 = vpop.f32.mrb[0].mxu0
    %1139 = vmatprep.mubr.f32.mxu0 0.0
    %v1140 = vand.u32 %v802, 4294901760
    %v1141 = vsub.f32 %v802, %v1140
    %1142 = vmatmul.mubr.f32.gmra.mrb[0].mxu0 %v1141
    %v1143 = vpop.f32.mrb[0].mxu0
    %v1144 = vadd.f32 %v1037, %v1143
    %v1145 = vpop.f32.mrb[0].mxu0
    %1146 = vmatprep.mubr.f32.mxu0 0.0
    %v1147 = vand.u32 %v805, 4294901760
    %v1148 = vsub.f32 %v805, %v1147
    %1149 = vmatmul.mubr.f32.gmra.mrb[0].mxu0 %v1148
    %v1150 = vpop.f32.mrb[0].mxu0
    %v1151 = vadd.f32 %v1043, %v1150
    %v1152 = vpop.f32.mrb[0].mxu0
    %1153 = vmatprep.mubr.f32.mxu0 0.0
    %v1154 = vand.u32 %v808, 4294901760
    %v1155 = vsub.f32 %v808, %v1154
    %1156 = vmatmul.mubr.f32.gmra.mrb[0].mxu0 %v1155
    %v1157 = vpop.f32.mrb[0].mxu0
    %v1158 = vadd.f32 %v1049, %v1157
    %v1159 = vpop.f32.mrb[0].mxu0
    %1160 = vdwg.mxu0
    %1161 = vmatprep.subr.mxu0 0.0
    %v1162 = vand.u32 %v99, 4294901760
    %1163 = vmatpush1.msra.mxu0 %v1162
    %1164 = vmatprep.subr.mxu0 0.0
    %v1165 = vand.u32 %v100, 4294901760
    %1166 = vmatpush1.msra.mxu0 %v1165
    %1167 = vmatprep.subr.mxu0 0.0
    %v1168 = vand.u32 %v101, 4294901760
    %1169 = vmatpush1.msra.mxu0 %v1168
    %1170 = vmatprep.subr.mxu0 0.0
    %v1171 = vand.u32 %v102, 4294901760
    %1172 = vmatpush1.msra.mxu0 %v1171
    %1173 = vmatprep.subr.mxu0 0.0
    %v1174 = vand.u32 %v103, 4294901760
    %1175 = vmatpush1.msra.mxu0 %v1174
    %1176 = vmatprep.subr.mxu0 0.0
    %v1177 = vand.u32 %v104, 4294901760
    %1178 = vmatpush1.msra.mxu0 %v1177
    %1179 = vmatprep.subr.mxu0 0.0
    %v1180 = vand.u32 %v105, 4294901760
    %1181 = vmatpush1.msra.mxu0 %v1180
    %1182 = vmatprep.subr.mxu0 0.0
    %v1183 = vand.u32 %v106, 4294901760
    %1184 = vmatpush1.msra.mxu0 %v1183
    %1185 = vmatprep.subr.mxu0 0.0
    %1186 = vmatpush1.msra.mxu0 0.0
    %1187 = vmatprep.subr.mxu0 0.0
    %1188 = vmatpush1.msra.mxu0 0.0
    %1189 = vmatprep.subr.mxu0 0.0
    %1190 = vmatpush1.msra.mxu0 0.0
    %1191 = vmatprep.subr.mxu0 0.0
    %1192 = vmatpush1.msra.mxu0 0.0
    %1193 = vmatprep.subr.mxu0 0.0
    %1194 = vmatpush1.msra.mxu0 0.0
    %1195 = vmatprep.subr.mxu0 0.0
    %1196 = vmatpush1.msra.mxu0 0.0
    %1197 = vmatprep.subr.mxu0 0.0
    %1198 = vmatpush1.msra.mxu0 0.0
    %1199 = vmatprep.subr.mxu0 0.0
    %1200 = vmatpush1.msra.mxu0 0.0
    %1201 = vmatprep.subr.mxu0 0.0
    %1202 = vmatpush1.msra.mxu0 0.0
    %1203 = vmatprep.subr.mxu0 0.0
    %1204 = vmatpush1.msra.mxu0 0.0
    %1205 = vmatprep.subr.mxu0 0.0
    %1206 = vmatpush1.msra.mxu0 0.0
    %1207 = vmatprep.subr.mxu0 0.0
    %1208 = vmatpush1.msra.mxu0 0.0
    %1209 = vmatprep.subr.mxu0 0.0
    %1210 = vmatpush1.msra.mxu0 0.0
    %1211 = vmatprep.subr.mxu0 0.0
    %1212 = vmatpush1.msra.mxu0 0.0
    %1213 = vmatprep.subr.mxu0 0.0
    %1214 = vmatpush1.msra.mxu0 0.0
    %1215 = vmatprep.subr.mxu0 0.0
    %1216 = vmatpush1.msra.mxu0 0.0
    %1217 = vmatprep.subr.mxu0 0.0
    %1218 = vmatpush1.msra.mxu0 0.0
    %1219 = vmatprep.subr.mxu0 0.0
    %1220 = vmatpush1.msra.mxu0 0.0
    %1221 = vmatprep.subr.mxu0 0.0
    %1222 = vmatpush1.msra.mxu0 0.0
    %1223 = vmatprep.subr.mxu0 0.0
    %1224 = vmatpush1.msra.mxu0 0.0
    %1225 = vmatprep.subr.mxu0 0.0
    %1226 = vmatpush1.msra.mxu0 0.0
    %1227 = vmatprep.subr.mxu0 0.0
    %1228 = vmatpush1.msra.mxu0 0.0
    %1229 = vmatprep.subr.mxu0 0.0
    %1230 = vmatpush1.msra.mxu0 0.0
    %1231 = vmatprep.subr.mxu0 0.0
    %1232 = vmatpush1.msra.mxu0 0.0
    %1233 = vmatprep.mubr.f32.mxu0 0.0
    %v1234 = vand.u32 %v799, 4294901760
    %v1235 = vsub.f32 %v799, %v1234
    %v1236 = vand.u32 %v1235, 4294901760
    %1237 = vmatmul.mubr.f32.gmra.mrb[0].mxu0 %v1236
    %v1238 = vpop.f32.mrb[0].mxu0
    %v1239 = vadd.f32 %v1137, %v1238
    %v1240 = vpop.f32.mrb[0].mxu0
    %1241 = vmatprep.mubr.f32.mxu0 0.0
    %v1242 = vand.u32 %v802, 4294901760
    %v1243 = vsub.f32 %v802, %v1242
    %v1244 = vand.u32 %v1243, 4294901760
    %1245 = vmatmul.mubr.f32.gmra.mrb[0].mxu0 %v1244
    %v1246 = vpop.f32.mrb[0].mxu0
    %v1247 = vadd.f32 %v1144, %v1246
    %v1248 = vpop.f32.mrb[0].mxu0
    %1249 = vmatprep.mubr.f32.mxu0 0.0
    %v1250 = vand.u32 %v805, 4294901760
    %v1251 = vsub.f32 %v805, %v1250
    %v1252 = vand.u32 %v1251, 4294901760
    %1253 = vmatmul.mubr.f32.gmra.mrb[0].mxu0 %v1252
    %v1254 = vpop.f32.mrb[0].mxu0
    %v1255 = vadd.f32 %v1151, %v1254
    %v1256 = vpop.f32.mrb[0].mxu0
    %1257 = vmatprep.mubr.f32.mxu0 0.0
    %v1258 = vand.u32 %v808, 4294901760
    %v1259 = vsub.f32 %v808, %v1258
    %v1260 = vand.u32 %v1259, 4294901760
    %1261 = vmatmul.mubr.f32.gmra.mrb[0].mxu0 %v1260
    %v1262 = vpop.f32.mrb[0].mxu0
    %v1263 = vadd.f32 %v1158, %v1262
    %v1264 = vpop.f32.mrb[0].mxu0
    %1265 = vdwg.mxu0
    %1266 = vmatprep.subr.mxu0 0.0
    %v1267 = vand.u32 %v99, 4294901760
    %v1268 = vsub.f32 %v99, %v1267
    %v1269 = vand.u32 %v1268, 4294901760
    %1270 = vmatpush1.msra.mxu0 %v1269
    %1271 = vmatprep.subr.mxu0 0.0
    %v1272 = vand.u32 %v100, 4294901760
    %v1273 = vsub.f32 %v100, %v1272
    %v1274 = vand.u32 %v1273, 4294901760
    %1275 = vmatpush1.msra.mxu0 %v1274
    %1276 = vmatprep.subr.mxu0 0.0
    %v1277 = vand.u32 %v101, 4294901760
    %v1278 = vsub.f32 %v101, %v1277
    %v1279 = vand.u32 %v1278, 4294901760
    %1280 = vmatpush1.msra.mxu0 %v1279
    %1281 = vmatprep.subr.mxu0 0.0
    %v1282 = vand.u32 %v102, 4294901760
    %v1283 = vsub.f32 %v102, %v1282
    %v1284 = vand.u32 %v1283, 4294901760
    %1285 = vmatpush1.msra.mxu0 %v1284
    %1286 = vmatprep.subr.mxu0 0.0
    %v1287 = vand.u32 %v103, 4294901760
    %v1288 = vsub.f32 %v103, %v1287
    %v1289 = vand.u32 %v1288, 4294901760
    %1290 = vmatpush1.msra.mxu0 %v1289
    %1291 = vmatprep.subr.mxu0 0.0
    %v1292 = vand.u32 %v104, 4294901760
    %v1293 = vsub.f32 %v104, %v1292
    %v1294 = vand.u32 %v1293, 4294901760
    %1295 = vmatpush1.msra.mxu0 %v1294
    %1296 = vmatprep.subr.mxu0 0.0
    %v1297 = vand.u32 %v105, 4294901760
    %v1298 = vsub.f32 %v105, %v1297
    %v1299 = vand.u32 %v1298, 4294901760
    %1300 = vmatpush1.msra.mxu0 %v1299
    %1301 = vmatprep.subr.mxu0 0.0
    %v1302 = vand.u32 %v106, 4294901760
    %v1303 = vsub.f32 %v106, %v1302
    %v1304 = vand.u32 %v1303, 4294901760
    %1305 = vmatpush1.msra.mxu0 %v1304
    %1306 = vmatprep.subr.mxu0 0.0
    %1307 = vmatpush1.msra.mxu0 0.0
    %1308 = vmatprep.subr.mxu0 0.0
    %1309 = vmatpush1.msra.mxu0 0.0
    %1310 = vmatprep.subr.mxu0 0.0
    %1311 = vmatpush1.msra.mxu0 0.0
    %1312 = vmatprep.subr.mxu0 0.0
    %1313 = vmatpush1.msra.mxu0 0.0
    %1314 = vmatprep.subr.mxu0 0.0
    %1315 = vmatpush1.msra.mxu0 0.0
    %1316 = vmatprep.subr.mxu0 0.0
    %1317 = vmatpush1.msra.mxu0 0.0
    %1318 = vmatprep.subr.mxu0 0.0
    %1319 = vmatpush1.msra.mxu0 0.0
    %1320 = vmatprep.subr.mxu0 0.0
    %1321 = vmatpush1.msra.mxu0 0.0
    %1322 = vmatprep.subr.mxu0 0.0
    %1323 = vmatpush1.msra.mxu0 0.0
    %1324 = vmatprep.subr.mxu0 0.0
    %1325 = vmatpush1.msra.mxu0 0.0
    %1326 = vmatprep.subr.mxu0 0.0
    %1327 = vmatpush1.msra.mxu0 0.0
    %1328 = vmatprep.subr.mxu0 0.0
    %1329 = vmatpush1.msra.mxu0 0.0
    %1330 = vmatprep.subr.mxu0 0.0
    %1331 = vmatpush1.msra.mxu0 0.0
    %1332 = vmatprep.subr.mxu0 0.0
    %1333 = vmatpush1.msra.mxu0 0.0
    %1334 = vmatprep.subr.mxu0 0.0
    %1335 = vmatpush1.msra.mxu0 0.0
    %1336 = vmatprep.subr.mxu0 0.0
    %1337 = vmatpush1.msra.mxu0 0.0
    %1338 = vmatprep.subr.mxu0 0.0
    %1339 = vmatpush1.msra.mxu0 0.0
    %1340 = vmatprep.subr.mxu0 0.0
    %1341 = vmatpush1.msra.mxu0 0.0
    %1342 = vmatprep.subr.mxu0 0.0
    %1343 = vmatpush1.msra.mxu0 0.0
    %1344 = vmatprep.subr.mxu0 0.0
    %1345 = vmatpush1.msra.mxu0 0.0
    %1346 = vmatprep.subr.mxu0 0.0
    %1347 = vmatpush1.msra.mxu0 0.0
    %1348 = vmatprep.subr.mxu0 0.0
    %1349 = vmatpush1.msra.mxu0 0.0
    %1350 = vmatprep.subr.mxu0 0.0
    %1351 = vmatpush1.msra.mxu0 0.0
    %1352 = vmatprep.subr.mxu0 0.0
    %1353 = vmatpush1.msra.mxu0 0.0
    %1354 = vmatprep.mubr.f32.mxu0 0.0
    %v1355 = vand.u32 %v799, 4294901760
    %1356 = vmatmul.mubr.f32.gmra.mrb[0].mxu0 %v1355
    %v1357 = vpop.f32.mrb[0].mxu0
    %v1358 = vadd.f32 %v1239, %v1357
    %v1359 = vpop.f32.mrb[0].mxu0
    %1360 = vmatprep.mubr.f32.mxu0 0.0
    %v1361 = vand.u32 %v802, 4294901760
    %1362 = vmatmul.mubr.f32.gmra.mrb[0].mxu0 %v1361
    %v1363 = vpop.f32.mrb[0].mxu0
    %v1364 = vadd.f32 %v1247, %v1363
    %v1365 = vpop.f32.mrb[0].mxu0
    %1366 = vmatprep.mubr.f32.mxu0 0.0
    %v1367 = vand.u32 %v805, 4294901760
    %1368 = vmatmul.mubr.f32.gmra.mrb[0].mxu0 %v1367
    %v1369 = vpop.f32.mrb[0].mxu0
    %v1370 = vadd.f32 %v1255, %v1369
    %v1371 = vpop.f32.mrb[0].mxu0
    %1372 = vmatprep.mubr.f32.mxu0 0.0
    %v1373 = vand.u32 %v808, 4294901760
    %1374 = vmatmul.mubr.f32.gmra.mrb[0].mxu0 %v1373
    %v1375 = vpop.f32.mrb[0].mxu0
    %v1376 = vadd.f32 %v1263, %v1375
    %v1377 = vpop.f32.mrb[0].mxu0
    %1378 = vdwg.mxu0
    %1379 = vmatprep.subr.mxu0 0.0
    %v1380 = vand.u32 %v99, 4294901760
    %1381 = vmatpush1.msra.mxu0 %v1380
    %1382 = vmatprep.subr.mxu0 0.0
    %v1383 = vand.u32 %v100, 4294901760
    %1384 = vmatpush1.msra.mxu0 %v1383
    %1385 = vmatprep.subr.mxu0 0.0
    %v1386 = vand.u32 %v101, 4294901760
    %1387 = vmatpush1.msra.mxu0 %v1386
    %1388 = vmatprep.subr.mxu0 0.0
    %v1389 = vand.u32 %v102, 4294901760
    %1390 = vmatpush1.msra.mxu0 %v1389
    %1391 = vmatprep.subr.mxu0 0.0
    %v1392 = vand.u32 %v103, 4294901760
    %1393 = vmatpush1.msra.mxu0 %v1392
    %1394 = vmatprep.subr.mxu0 0.0
    %v1395 = vand.u32 %v104, 4294901760
    %1396 = vmatpush1.msra.mxu0 %v1395
    %1397 = vmatprep.subr.mxu0 0.0
    %v1398 = vand.u32 %v105, 4294901760
    %1399 = vmatpush1.msra.mxu0 %v1398
    %1400 = vmatprep.subr.mxu0 0.0
    %v1401 = vand.u32 %v106, 4294901760
    %1402 = vmatpush1.msra.mxu0 %v1401
    %1403 = vmatprep.subr.mxu0 0.0
    %1404 = vmatpush1.msra.mxu0 0.0
    %1405 = vmatprep.subr.mxu0 0.0
    %1406 = vmatpush1.msra.mxu0 0.0
    %1407 = vmatprep.subr.mxu0 0.0
    %1408 = vmatpush1.msra.mxu0 0.0
    %1409 = vmatprep.subr.mxu0 0.0
    %1410 = vmatpush1.msra.mxu0 0.0
    %1411 = vmatprep.subr.mxu0 0.0
    %1412 = vmatpush1.msra.mxu0 0.0
    %1413 = vmatprep.subr.mxu0 0.0
    %1414 = vmatpush1.msra.mxu0 0.0
    %1415 = vmatprep.subr.mxu0 0.0
    %1416 = vmatpush1.msra.mxu0 0.0
    %1417 = vmatprep.subr.mxu0 0.0
    %1418 = vmatpush1.msra.mxu0 0.0
    %1419 = vmatprep.subr.mxu0 0.0
    %1420 = vmatpush1.msra.mxu0 0.0
    %1421 = vmatprep.subr.mxu0 0.0
    %1422 = vmatpush1.msra.mxu0 0.0
    %1423 = vmatprep.subr.mxu0 0.0
    %1424 = vmatpush1.msra.mxu0 0.0
    %1425 = vmatprep.subr.mxu0 0.0
    %1426 = vmatpush1.msra.mxu0 0.0
    %1427 = vmatprep.subr.mxu0 0.0
    %1428 = vmatpush1.msra.mxu0 0.0
    %1429 = vmatprep.subr.mxu0 0.0
    %1430 = vmatpush1.msra.mxu0 0.0
    %1431 = vmatprep.subr.mxu0 0.0
    %1432 = vmatpush1.msra.mxu0 0.0
    %1433 = vmatprep.subr.mxu0 0.0
    %1434 = vmatpush1.msra.mxu0 0.0
    %1435 = vmatprep.subr.mxu0 0.0
    %1436 = vmatpush1.msra.mxu0 0.0
    %1437 = vmatprep.subr.mxu0 0.0
    %1438 = vmatpush1.msra.mxu0 0.0
    %1439 = vmatprep.subr.mxu0 0.0
    %1440 = vmatpush1.msra.mxu0 0.0
    %1441 = vmatprep.subr.mxu0 0.0
    %1442 = vmatpush1.msra.mxu0 0.0
    %1443 = vmatprep.subr.mxu0 0.0
    %1444 = vmatpush1.msra.mxu0 0.0
    %1445 = vmatprep.subr.mxu0 0.0
    %1446 = vmatpush1.msra.mxu0 0.0
    %1447 = vmatprep.subr.mxu0 0.0
    %1448 = vmatpush1.msra.mxu0 0.0
    %1449 = vmatprep.subr.mxu0 0.0
    %1450 = vmatpush1.msra.mxu0 0.0
    %1451 = vmatprep.mubr.f32.mxu0 0.0
    %v1452 = vand.u32 %v799, 4294901760
    %1453 = vmatmul.mubr.f32.gmra.mrb[0].mxu0 %v1452
    %v1454 = vpop.f32.mrb[0].mxu0
    %v1455 = vadd.f32 %v1358, %v1454
    %v1456 = vpop.f32.mrb[0].mxu0
    %1457 = vmatprep.mubr.f32.mxu0 0.0
    %v1458 = vand.u32 %v802, 4294901760
    %1459 = vmatmul.mubr.f32.gmra.mrb[0].mxu0 %v1458
    %v1460 = vpop.f32.mrb[0].mxu0
    %v1461 = vadd.f32 %v1364, %v1460
    %v1462 = vpop.f32.mrb[0].mxu0
    %1463 = vmatprep.mubr.f32.mxu0 0.0
    %v1464 = vand.u32 %v805, 4294901760
    %1465 = vmatmul.mubr.f32.gmra.mrb[0].mxu0 %v1464
    %v1466 = vpop.f32.mrb[0].mxu0
    %v1467 = vadd.f32 %v1370, %v1466
    %v1468 = vpop.f32.mrb[0].mxu0
    %1469 = vmatprep.mubr.f32.mxu0 0.0
    %v1470 = vand.u32 %v808, 4294901760
    %1471 = vmatmul.mubr.f32.gmra.mrb[0].mxu0 %v1470
    %v1472 = vpop.f32.mrb[0].mxu0
    %v1473 = vadd.f32 %v1376, %v1472
    %v1474 = vpop.f32.mrb[0].mxu0
    %1475 = vdwg.mxu0
    %v1476 = vld [vmem:[%s4] sm:$0x1]
    %v1478 = vlaneseq
    %v1479 = vshrl.u32 %v1478, 7
    %v1480 = vsub.s32 0, %v1479
    %v1481 = vrot.slane %v1476, %v1480
    %v1483 = vadd.f32 %v1455, %v1481
    %v1484 = vadd.f32 %v1461, %v1481
    %v1485 = vadd.f32 %v1467, %v1481
    %v1486 = vadd.f32 %v1473, %v1481
    %v1487 = vmax.f32 %v1483, 0.0
    %v1488 = vmax.f32 %v1484, 0.0
    %v1489 = vmax.f32 %v1485, 0.0
    %v1490 = vmax.f32 %v1486, 0.0
    %v1491 = vlaneseq
    %v1492 = vshrl.u32 %v1491, 7
    %v1493 = vadd.s32 %v1492, 8
    %v1494 = vadd.s32 %v1492, 16
    %v1495 = vadd.s32 %v1492, 24
    %vm1496 = vcmp.lt.s32.totalorder %v1492, 0
    %v1497 = vsub.s32 0, %v1492
    %v1498 = vsel %vm1496, %v1497, %v1492
    %v1499 = vshrl.u32 %v1498, 4
    %v1500 = vand.u32 %v1498, 15
    %v1501 = vsub.s32 0, %v1500
    %v1502 = vsel %vm1496, %v1501, %v1500
    %vm1503 = vcmp.lt.s32.totalorder %v1493, 0
    %v1504 = vsub.s32 0, %v1493
    %v1505 = vsel %vm1503, %v1504, %v1493
    %v1506 = vshrl.u32 %v1505, 4
    %v1507 = vand.u32 %v1505, 15
    %v1508 = vsub.s32 0, %v1507
    %v1509 = vsel %vm1503, %v1508, %v1507
    %vm1510 = vcmp.lt.s32.totalorder %v1494, 0
    %v1511 = vsub.s32 0, %v1494
    %v1512 = vsel %vm1510, %v1511, %v1494
    %v1513 = vshrl.u32 %v1512, 4
    %v1514 = vand.u32 %v1512, 15
    %v1515 = vsub.s32 0, %v1514
    %v1516 = vsel %vm1510, %v1515, %v1514
    %vm1517 = vcmp.lt.s32.totalorder %v1495, 0
    %v1518 = vsub.s32 0, %v1495
    %v1519 = vsel %vm1517, %v1518, %v1495
    %v1520 = vshrl.u32 %v1519, 4
    %v1521 = vand.u32 %v1519, 15
    %v1522 = vsub.s32 0, %v1521
    %v1523 = vsel %vm1517, %v1522, %v1521
    %vm1524 = vcmp.ne.s32.totalorder %v1502, 0
    %vm1525 = vcmp.ne.s32.totalorder %v1509, 0
    %vm1526 = vcmp.ne.s32.totalorder %v1516, 0
    %vm1527 = vcmp.ne.s32.totalorder %v1523, 0
    %vm1528 = vcmp.lt.s32.totalorder %v1502, 0
    %vm1529 = vcmp.lt.s32.totalorder %v1509, 0
    %vm1530 = vcmp.lt.s32.totalorder %v1516, 0
    %vm1531 = vcmp.lt.s32.totalorder %v1523, 0
    %vm1532 = vmand %vm1528, %vm1524
    %vm1533 = vmand %vm1529, %vm1525
    %vm1534 = vmand %vm1530, %vm1526
    %vm1535 = vmand %vm1531, %vm1527
    %v1536 = vadd.s32 %v1502, 16
    %v1537 = vadd.s32 %v1509, 16
    %v1538 = vadd.s32 %v1516, 16
    %v1539 = vadd.s32 %v1523, 16
    %v1540 = vsel %vm1532, %v1536, %v1502
    %v1541 = vsel %vm1533, %v1537, %v1509
    %v1542 = vsel %vm1534, %v1538, %v1516
    %v1543 = vsel %vm1535, %v1539, %v1523
    %vm1544 = vcmp.eq.s32.totalorder %v1540, 0
    %vm1545 = vcmp.eq.s32.totalorder %v1541, 0
    %vm1546 = vcmp.eq.s32.totalorder %v1542, 0
    %vm1547 = vcmp.eq.s32.totalorder %v1543, 0
    %v1548 = vrot.slane %v1487, 7
    %v1549 = vrot.slane %v1488, 7
    %v1550 = vrot.slane %v1489, 7
    %v1551 = vrot.slane %v1490, 7
    %vm1552 = vcmp.lt.s32.totalorder %v1492, 1
    %v1553 = vsel %vm1552, %v1550, %v1551
    %v1554 = vsel %vm1552, %v1549, %v1550
    %v1555 = vsel %vm1552, %v1548, %v1549
    %v1556 = vsel %vm1552, %v1551, %v1548
    %v1557 = vsel %vm1544, 0.0, %v1556
    %v1558 = vsel %vm1545, 0.0, %v1555
    %v1559 = vsel %vm1546, 0.0, %v1554
    %v1560 = vsel %vm1547, 0.0, %v1553
    %vm1561 = vcmp.eq.s32.totalorder %v1540, 15
    %vm1562 = vcmp.eq.s32.totalorder %v1541, 15
    %vm1563 = vcmp.eq.s32.totalorder %v1542, 15
    %vm1564 = vcmp.eq.s32.totalorder %v1543, 15
    %v1565 = vrot.slane %v1487, 1
    %v1566 = vrot.slane %v1488, 1
    %v1567 = vrot.slane %v1489, 1
    %v1568 = vrot.slane %v1490, 1
    %vm1569 = vcmp.lt.s32.totalorder %v1492, 7
    %v1570 = vsel %vm1569, %v1567, %v1568
    %v1571 = vsel %vm1569, %v1566, %v1567
    %v1572 = vsel %vm1569, %v1565, %v1566
    %v1573 = vsel %vm1569, %v1568, %v1565
    %v1574 = vsel %vm1561, 0.0, %v1572
    %v1575 = vsel %vm1562, 0.0, %v1571
    %v1576 = vsel %vm1563, 0.0, %v1570
    %v1577 = vsel %vm1564, 0.0, %v1573
    %v1578 = vld [vmem:[#allocation10] sm:$0xff]
    %v1579 = vld [vmem:[#allocation10 + $0x8] sm:$0xff]
    %v1580 = vld [vmem:[#allocation10 + $0x10] sm:$0xff]
    %v1581 = vld [vmem:[#allocation10 + $0x18] sm:$0xff]
    %v1582 = vld [vmem:[#allocation10 + $0x20] sm:$0xff]
    %v1583 = vld [vmem:[#allocation10 + $0x28] sm:$0xff]
    %v1584 = vld [vmem:[#allocation10 + $0x30] sm:$0xff]
    %v1585 = vld [vmem:[#allocation10 + $0x38] sm:$0xff]
    %v1586 = vld [vmem:[#allocation10 + $0x40] sm:$0xff]
    %v1587 = vld [vmem:[#allocation10 + $0x48] sm:$0xff]
    %v1588 = vld [vmem:[#allocation10 + $0x50] sm:$0xff]
    %v1589 = vld [vmem:[#allocation10 + $0x58] sm:$0xff]
    %v1590 = vld [vmem:[#allocation10 + $0x60] sm:$0xff]
    %v1591 = vld [vmem:[#allocation10 + $0x68] sm:$0xff]
    %v1592 = vld [vmem:[#allocation10 + $0x70] sm:$0xff]
    %v1593 = vld [vmem:[#allocation10 + $0x78] sm:$0xff]
    %v1594 = vld [vmem:[#allocation10 + $0x80] sm:$0xff]
    %v1595 = vld [vmem:[#allocation10 + $0x88] sm:$0xff]
    %v1596 = vld [vmem:[#allocation10 + $0x90] sm:$0xff]
    %v1597 = vld [vmem:[#allocation10 + $0x98] sm:$0xff]
    %v1598 = vld [vmem:[#allocation10 + $0xa0] sm:$0xff]
    %v1599 = vld [vmem:[#allocation10 + $0xa8] sm:$0xff]
    %v1600 = vld [vmem:[#allocation10 + $0xb0] sm:$0xff]
    %v1601 = vld [vmem:[#allocation10 + $0xb8] sm:$0xff]
    %v1602 = vld [vmem:[#allocation10 + $0xc0] sm:$0xff]
    %v1603 = vld [vmem:[#allocation10 + $0xc8] sm:$0xff]
    %v1604 = vld [vmem:[#allocation10 + $0xd0] sm:$0xff]
    %v1605 = vld [vmem:[#allocation10 + $0xd8] sm:$0xff]
    %v1606 = vld [vmem:[#allocation10 + $0xe0] sm:$0xff]
    %v1607 = vld [vmem:[#allocation10 + $0xe8] sm:$0xff]
    %v1608 = vld [vmem:[#allocation10 + $0xf0] sm:$0xff]
    %v1609 = vld [vmem:[#allocation10 + $0xf8] sm:$0xff]
    %v1610 = vld [vmem:[#allocation10 + $0x100] sm:$0xff]
    %v1611 = vld [vmem:[#allocation10 + $0x108] sm:$0xff]
    %v1612 = vld [vmem:[#allocation10 + $0x110] sm:$0xff]
    %v1613 = vld [vmem:[#allocation10 + $0x118] sm:$0xff]
    %v1614 = vld [vmem:[#allocation10 + $0x120] sm:$0xff]
    %v1615 = vld [vmem:[#allocation10 + $0x128] sm:$0xff]
    %v1616 = vld [vmem:[#allocation10 + $0x130] sm:$0xff]
    %v1617 = vld [vmem:[#allocation10 + $0x138] sm:$0xff]
    %v1618 = vld [vmem:[#allocation10 + $0x140] sm:$0xff]
    %v1619 = vld [vmem:[#allocation10 + $0x148] sm:$0xff]
    %v1620 = vld [vmem:[#allocation10 + $0x150] sm:$0xff]
    %v1621 = vld [vmem:[#allocation10 + $0x158] sm:$0xff]
    %v1622 = vld [vmem:[#allocation10 + $0x160] sm:$0xff]
    %v1623 = vld [vmem:[#allocation10 + $0x168] sm:$0xff]
    %v1624 = vld [vmem:[#allocation10 + $0x170] sm:$0xff]
    %v1625 = vld [vmem:[#allocation10 + $0x178] sm:$0xff]
    %v1626 = vld [vmem:[%s6] sm:$0x1]
    %v1628 = vlaneseq
    %v1629 = vshrl.u32 %v1628, 7
    %v1630 = vsub.s32 0, %v1629
    %v1631 = vrot.slane %v1626, %v1630
    %1633 = vmatprep.subr.mxu0 0.0
    %v1634 = vand.u32 %v1578, 4294901760
    %1635 = vmatpush1.msra.mxu0 %v1634
    %1636 = vmatprep.subr.mxu0 0.0
    %v1637 = vand.u32 %v1579, 4294901760
    %1638 = vmatpush1.msra.mxu0 %v1637
    %1639 = vmatprep.subr.mxu0 0.0
    %v1640 = vand.u32 %v1580, 4294901760
    %1641 = vmatpush1.msra.mxu0 %v1640
    %1642 = vmatprep.subr.mxu0 0.0
    %v1643 = vand.u32 %v1581, 4294901760
    %1644 = vmatpush1.msra.mxu0 %v1643
    %1645 = vmatprep.subr.mxu0 0.0
    %v1646 = vand.u32 %v1582, 4294901760
    %1647 = vmatpush1.msra.mxu0 %v1646
    %1648 = vmatprep.subr.mxu0 0.0
    %v1649 = vand.u32 %v1583, 4294901760
    %1650 = vmatpush1.msra.mxu0 %v1649
    %1651 = vmatprep.subr.mxu0 0.0
    %v1652 = vand.u32 %v1584, 4294901760
    %1653 = vmatpush1.msra.mxu0 %v1652
    %1654 = vmatprep.subr.mxu0 0.0
    %v1655 = vand.u32 %v1585, 4294901760
    %1656 = vmatpush1.msra.mxu0 %v1655
    %1657 = vmatprep.subr.mxu0 0.0
    %v1658 = vand.u32 %v1586, 4294901760
    %1659 = vmatpush1.msra.mxu0 %v1658
    %1660 = vmatprep.subr.mxu0 0.0
    %v1661 = vand.u32 %v1587, 4294901760
    %1662 = vmatpush1.msra.mxu0 %v1661
    %1663 = vmatprep.subr.mxu0 0.0
    %v1664 = vand.u32 %v1588, 4294901760
    %1665 = vmatpush1.msra.mxu0 %v1664
    %1666 = vmatprep.subr.mxu0 0.0
    %v1667 = vand.u32 %v1589, 4294901760
    %1668 = vmatpush1.msra.mxu0 %v1667
    %1669 = vmatprep.subr.mxu0 0.0
    %v1670 = vand.u32 %v1590, 4294901760
    %1671 = vmatpush1.msra.mxu0 %v1670
    %1672 = vmatprep.subr.mxu0 0.0
    %v1673 = vand.u32 %v1591, 4294901760
    %1674 = vmatpush1.msra.mxu0 %v1673
    %1675 = vmatprep.subr.mxu0 0.0
    %v1676 = vand.u32 %v1592, 4294901760
    %1677 = vmatpush1.msra.mxu0 %v1676
    %1678 = vmatprep.subr.mxu0 0.0
    %v1679 = vand.u32 %v1593, 4294901760
    %1680 = vmatpush1.msra.mxu0 %v1679
    %1681 = vmatprep.subr.mxu0 0.0
    %v1682 = vand.u32 %v1594, 4294901760
    %1683 = vmatpush1.msra.mxu0 %v1682
    %1684 = vmatprep.subr.mxu0 0.0
    %v1685 = vand.u32 %v1595, 4294901760
    %1686 = vmatpush1.msra.mxu0 %v1685
    %1687 = vmatprep.subr.mxu0 0.0
    %v1688 = vand.u32 %v1596, 4294901760
    %1689 = vmatpush1.msra.mxu0 %v1688
    %1690 = vmatprep.subr.mxu0 0.0
    %v1691 = vand.u32 %v1597, 4294901760
    %1692 = vmatpush1.msra.mxu0 %v1691
    %1693 = vmatprep.subr.mxu0 0.0
    %v1694 = vand.u32 %v1598, 4294901760
    %1695 = vmatpush1.msra.mxu0 %v1694
    %1696 = vmatprep.subr.mxu0 0.0
    %v1697 = vand.u32 %v1599, 4294901760
    %1698 = vmatpush1.msra.mxu0 %v1697
    %1699 = vmatprep.subr.mxu0 0.0
    %v1700 = vand.u32 %v1600, 4294901760
    %1701 = vmatpush1.msra.mxu0 %v1700
    %1702 = vmatprep.subr.mxu0 0.0
    %v1703 = vand.u32 %v1601, 4294901760
    %1704 = vmatpush1.msra.mxu0 %v1703
    %1705 = vmatprep.subr.mxu0 0.0
    %v1706 = vand.u32 %v1602, 4294901760
    %1707 = vmatpush1.msra.mxu0 %v1706
    %1708 = vmatprep.subr.mxu0 0.0
    %v1709 = vand.u32 %v1603, 4294901760
    %1710 = vmatpush1.msra.mxu0 %v1709
    %1711 = vmatprep.subr.mxu0 0.0
    %v1712 = vand.u32 %v1604, 4294901760
    %1713 = vmatpush1.msra.mxu0 %v1712
    %1714 = vmatprep.subr.mxu0 0.0
    %v1715 = vand.u32 %v1605, 4294901760
    %1716 = vmatpush1.msra.mxu0 %v1715
    %1717 = vmatprep.subr.mxu0 0.0
    %v1718 = vand.u32 %v1606, 4294901760
    %1719 = vmatpush1.msra.mxu0 %v1718
    %1720 = vmatprep.subr.mxu0 0.0
    %v1721 = vand.u32 %v1607, 4294901760
    %1722 = vmatpush1.msra.mxu0 %v1721
    %1723 = vmatprep.subr.mxu0 0.0
    %v1724 = vand.u32 %v1608, 4294901760
    %1725 = vmatpush1.msra.mxu0 %v1724
    %1726 = vmatprep.subr.mxu0 0.0
    %v1727 = vand.u32 %v1609, 4294901760
    %1728 = vmatpush1.msra.mxu0 %v1727
    %v1729 = vand.u32 %v1487, 4294901760
    %v1730 = vsub.f32 %v1487, %v1729
    %v1731 = vand.u32 %v1730, 4294901760
    %v1732 = vsub.f32 %v1730, %v1731
    %v1733 = vand.u32 %v1732, 4294901760
    %1734 = vmatprep.mubr.f32.mxu0 %v1733
    %v1735 = vand.u32 %v1557, 4294901760
    %v1736 = vsub.f32 %v1557, %v1735
    %v1737 = vand.u32 %v1736, 4294901760
    %v1738 = vsub.f32 %v1736, %v1737
    %v1739 = vand.u32 %v1738, 4294901760
    %1740 = vmatmul.mubr.f32.gmra.mrb[0].mxu0 %v1739
    %v1741 = vpop.f32.mrb[0].mxu0
    %v1742 = vadd.f32 %v1631, %v1741
    %v1743 = vpop.f32.mrb[0].mxu0
    %v1744 = vand.u32 %v1488, 4294901760
    %v1745 = vsub.f32 %v1488, %v1744
    %v1746 = vand.u32 %v1745, 4294901760
    %v1747 = vsub.f32 %v1745, %v1746
    %v1748 = vand.u32 %v1747, 4294901760
    %1749 = vmatprep.mubr.f32.mxu0 %v1748
    %v1750 = vand.u32 %v1558, 4294901760
    %v1751 = vsub.f32 %v1558, %v1750
    %v1752 = vand.u32 %v1751, 4294901760
    %v1753 = vsub.f32 %v1751, %v1752
    %v1754 = vand.u32 %v1753, 4294901760
    %1755 = vmatmul.mubr.f32.gmra.mrb[0].mxu0 %v1754
    %v1756 = vpop.f32.mrb[0].mxu0
    %v1757 = vadd.f32 %v1631, %v1756
    %v1758 = vpop.f32.mrb[0].mxu0
    %v1759 = vand.u32 %v1489, 4294901760
    %v1760 = vsub.f32 %v1489, %v1759
    %v1761 = vand.u32 %v1760, 4294901760
    %v1762 = vsub.f32 %v1760, %v1761
    %v1763 = vand.u32 %v1762, 4294901760
    %1764 = vmatprep.mubr.f32.mxu0 %v1763
    %v1765 = vand.u32 %v1559, 4294901760
    %v1766 = vsub.f32 %v1559, %v1765
    %v1767 = vand.u32 %v1766, 4294901760
    %v1768 = vsub.f32 %v1766, %v1767
    %v1769 = vand.u32 %v1768, 4294901760
    %1770 = vmatmul.mubr.f32.gmra.mrb[0].mxu0 %v1769
    %v1771 = vpop.f32.mrb[0].mxu0
    %v1772 = vadd.f32 %v1631, %v1771
    %v1773 = vpop.f32.mrb[0].mxu0
    %v1774 = vand.u32 %v1490, 4294901760
    %v1775 = vsub.f32 %v1490, %v1774
    %v1776 = vand.u32 %v1775, 4294901760
    %v1777 = vsub.f32 %v1775, %v1776
    %v1778 = vand.u32 %v1777, 4294901760
    %1779 = vmatprep.mubr.f32.mxu0 %v1778
    %v1780 = vand.u32 %v1560, 4294901760
    %v1781 = vsub.f32 %v1560, %v1780
    %v1782 = vand.u32 %v1781, 4294901760
    %v1783 = vsub.f32 %v1781, %v1782
    %v1784 = vand.u32 %v1783, 4294901760
    %1785 = vmatmul.mubr.f32.gmra.mrb[0].mxu0 %v1784
    %v1786 = vpop.f32.mrb[0].mxu0
    %v1787 = vadd.f32 %v1631, %v1786
    %v1788 = vpop.f32.mrb[0].mxu0
    %1789 = vdwg.mxu0
    %1790 = vmatprep.subr.mxu0 0.0
    %v1791 = vand.u32 %v1578, 4294901760
    %v1792 = vsub.f32 %v1578, %v1791
    %v1793 = vand.u32 %v1792, 4294901760
    %v1794 = vsub.f32 %v1792, %v1793
    %v1795 = vand.u32 %v1794, 4294901760
    %1796 = vmatpush1.msra.mxu0 %v1795
    %1797 = vmatprep.subr.mxu0 0.0
    %v1798 = vand.u32 %v1579, 4294901760
    %v1799 = vsub.f32 %v1579, %v1798
    %v1800 = vand.u32 %v1799, 4294901760
    %v1801 = vsub.f32 %v1799, %v1800
    %v1802 = vand.u32 %v1801, 4294901760
    %1803 = vmatpush1.msra.mxu0 %v1802
    %1804 = vmatprep.subr.mxu0 0.0
    %v1805 = vand.u32 %v1580, 4294901760
    %v1806 = vsub.f32 %v1580, %v1805
    %v1807 = vand.u32 %v1806, 4294901760
    %v1808 = vsub.f32 %v1806, %v1807
    %v1809 = vand.u32 %v1808, 4294901760
    %1810 = vmatpush1.msra.mxu0 %v1809
    %1811 = vmatprep.subr.mxu0 0.0
    %v1812 = vand.u32 %v1581, 4294901760
    %v1813 = vsub.f32 %v1581, %v1812
    %v1814 = vand.u32 %v1813, 4294901760
    %v1815 = vsub.f32 %v1813, %v1814
    %v1816 = vand.u32 %v1815, 4294901760
    %1817 = vmatpush1.msra.mxu0 %v1816
    %1818 = vmatprep.subr.mxu0 0.0
    %v1819 = vand.u32 %v1582, 4294901760
    %v1820 = vsub.f32 %v1582, %v1819
    %v1821 = vand.u32 %v1820, 4294901760
    %v1822 = vsub.f32 %v1820, %v1821
    %v1823 = vand.u32 %v1822, 4294901760
    %1824 = vmatpush1.msra.mxu0 %v1823
    %1825 = vmatprep.subr.mxu0 0.0
    %v1826 = vand.u32 %v1583, 4294901760
    %v1827 = vsub.f32 %v1583, %v1826
    %v1828 = vand.u32 %v1827, 4294901760
    %v1829 = vsub.f32 %v1827, %v1828
    %v1830 = vand.u32 %v1829, 4294901760
    %1831 = vmatpush1.msra.mxu0 %v1830
    %1832 = vmatprep.subr.mxu0 0.0
    %v1833 = vand.u32 %v1584, 4294901760
    %v1834 = vsub.f32 %v1584, %v1833
    %v1835 = vand.u32 %v1834, 4294901760
    %v1836 = vsub.f32 %v1834, %v1835
    %v1837 = vand.u32 %v1836, 4294901760
    %1838 = vmatpush1.msra.mxu0 %v1837
    %1839 = vmatprep.subr.mxu0 0.0
    %v1840 = vand.u32 %v1585, 4294901760
    %v1841 = vsub.f32 %v1585, %v1840
    %v1842 = vand.u32 %v1841, 4294901760
    %v1843 = vsub.f32 %v1841, %v1842
    %v1844 = vand.u32 %v1843, 4294901760
    %1845 = vmatpush1.msra.mxu0 %v1844
    %1846 = vmatprep.subr.mxu0 0.0
    %v1847 = vand.u32 %v1586, 4294901760
    %v1848 = vsub.f32 %v1586, %v1847
    %v1849 = vand.u32 %v1848, 4294901760
    %v1850 = vsub.f32 %v1848, %v1849
    %v1851 = vand.u32 %v1850, 4294901760
    %1852 = vmatpush1.msra.mxu0 %v1851
    %1853 = vmatprep.subr.mxu0 0.0
    %v1854 = vand.u32 %v1587, 4294901760
    %v1855 = vsub.f32 %v1587, %v1854
    %v1856 = vand.u32 %v1855, 4294901760
    %v1857 = vsub.f32 %v1855, %v1856
    %v1858 = vand.u32 %v1857, 4294901760
    %1859 = vmatpush1.msra.mxu0 %v1858
    %1860 = vmatprep.subr.mxu0 0.0
    %v1861 = vand.u32 %v1588, 4294901760
    %v1862 = vsub.f32 %v1588, %v1861
    %v1863 = vand.u32 %v1862, 4294901760
    %v1864 = vsub.f32 %v1862, %v1863
    %v1865 = vand.u32 %v1864, 4294901760
    %1866 = vmatpush1.msra.mxu0 %v1865
    %1867 = vmatprep.subr.mxu0 0.0
    %v1868 = vand.u32 %v1589, 4294901760
    %v1869 = vsub.f32 %v1589, %v1868
    %v1870 = vand.u32 %v1869, 4294901760
    %v1871 = vsub.f32 %v1869, %v1870
    %v1872 = vand.u32 %v1871, 4294901760
    %1873 = vmatpush1.msra.mxu0 %v1872
    %1874 = vmatprep.subr.mxu0 0.0
    %v1875 = vand.u32 %v1590, 4294901760
    %v1876 = vsub.f32 %v1590, %v1875
    %v1877 = vand.u32 %v1876, 4294901760
    %v1878 = vsub.f32 %v1876, %v1877
    %v1879 = vand.u32 %v1878, 4294901760
    %1880 = vmatpush1.msra.mxu0 %v1879
    %1881 = vmatprep.subr.mxu0 0.0
    %v1882 = vand.u32 %v1591, 4294901760
    %v1883 = vsub.f32 %v1591, %v1882
    %v1884 = vand.u32 %v1883, 4294901760
    %v1885 = vsub.f32 %v1883, %v1884
    %v1886 = vand.u32 %v1885, 4294901760
    %1887 = vmatpush1.msra.mxu0 %v1886
    %1888 = vmatprep.subr.mxu0 0.0
    %v1889 = vand.u32 %v1592, 4294901760
    %v1890 = vsub.f32 %v1592, %v1889
    %v1891 = vand.u32 %v1890, 4294901760
    %v1892 = vsub.f32 %v1890, %v1891
    %v1893 = vand.u32 %v1892, 4294901760
    %1894 = vmatpush1.msra.mxu0 %v1893
    %1895 = vmatprep.subr.mxu0 0.0
    %v1896 = vand.u32 %v1593, 4294901760
    %v1897 = vsub.f32 %v1593, %v1896
    %v1898 = vand.u32 %v1897, 4294901760
    %v1899 = vsub.f32 %v1897, %v1898
    %v1900 = vand.u32 %v1899, 4294901760
    %1901 = vmatpush1.msra.mxu0 %v1900
    %1902 = vmatprep.subr.mxu0 0.0
    %v1903 = vand.u32 %v1594, 4294901760
    %v1904 = vsub.f32 %v1594, %v1903
    %v1905 = vand.u32 %v1904, 4294901760
    %v1906 = vsub.f32 %v1904, %v1905
    %v1907 = vand.u32 %v1906, 4294901760
    %1908 = vmatpush1.msra.mxu0 %v1907
    %1909 = vmatprep.subr.mxu0 0.0
    %v1910 = vand.u32 %v1595, 4294901760
    %v1911 = vsub.f32 %v1595, %v1910
    %v1912 = vand.u32 %v1911, 4294901760
    %v1913 = vsub.f32 %v1911, %v1912
    %v1914 = vand.u32 %v1913, 4294901760
    %1915 = vmatpush1.msra.mxu0 %v1914
    %1916 = vmatprep.subr.mxu0 0.0
    %v1917 = vand.u32 %v1596, 4294901760
    %v1918 = vsub.f32 %v1596, %v1917
    %v1919 = vand.u32 %v1918, 4294901760
    %v1920 = vsub.f32 %v1918, %v1919
    %v1921 = vand.u32 %v1920, 4294901760
    %1922 = vmatpush1.msra.mxu0 %v1921
    %1923 = vmatprep.subr.mxu0 0.0
    %v1924 = vand.u32 %v1597, 4294901760
    %v1925 = vsub.f32 %v1597, %v1924
    %v1926 = vand.u32 %v1925, 4294901760
    %v1927 = vsub.f32 %v1925, %v1926
    %v1928 = vand.u32 %v1927, 4294901760
    %1929 = vmatpush1.msra.mxu0 %v1928
    %1930 = vmatprep.subr.mxu0 0.0
    %v1931 = vand.u32 %v1598, 4294901760
    %v1932 = vsub.f32 %v1598, %v1931
    %v1933 = vand.u32 %v1932, 4294901760
    %v1934 = vsub.f32 %v1932, %v1933
    %v1935 = vand.u32 %v1934, 4294901760
    %1936 = vmatpush1.msra.mxu0 %v1935
    %1937 = vmatprep.subr.mxu0 0.0
    %v1938 = vand.u32 %v1599, 4294901760
    %v1939 = vsub.f32 %v1599, %v1938
    %v1940 = vand.u32 %v1939, 4294901760
    %v1941 = vsub.f32 %v1939, %v1940
    %v1942 = vand.u32 %v1941, 4294901760
    %1943 = vmatpush1.msra.mxu0 %v1942
    %1944 = vmatprep.subr.mxu0 0.0
    %v1945 = vand.u32 %v1600, 4294901760
    %v1946 = vsub.f32 %v1600, %v1945
    %v1947 = vand.u32 %v1946, 4294901760
    %v1948 = vsub.f32 %v1946, %v1947
    %v1949 = vand.u32 %v1948, 4294901760
    %1950 = vmatpush1.msra.mxu0 %v1949
    %1951 = vmatprep.subr.mxu0 0.0
    %v1952 = vand.u32 %v1601, 4294901760
    %v1953 = vsub.f32 %v1601, %v1952
    %v1954 = vand.u32 %v1953, 4294901760
    %v1955 = vsub.f32 %v1953, %v1954
    %v1956 = vand.u32 %v1955, 4294901760
    %1957 = vmatpush1.msra.mxu0 %v1956
    %1958 = vmatprep.subr.mxu0 0.0
    %v1959 = vand.u32 %v1602, 4294901760
    %v1960 = vsub.f32 %v1602, %v1959
    %v1961 = vand.u32 %v1960, 4294901760
    %v1962 = vsub.f32 %v1960, %v1961
    %v1963 = vand.u32 %v1962, 4294901760
    %1964 = vmatpush1.msra.mxu0 %v1963
    %1965 = vmatprep.subr.mxu0 0.0
    %v1966 = vand.u32 %v1603, 4294901760
    %v1967 = vsub.f32 %v1603, %v1966
    %v1968 = vand.u32 %v1967, 4294901760
    %v1969 = vsub.f32 %v1967, %v1968
    %v1970 = vand.u32 %v1969, 4294901760
    %1971 = vmatpush1.msra.mxu0 %v1970
    %1972 = vmatprep.subr.mxu0 0.0
    %v1973 = vand.u32 %v1604, 4294901760
    %v1974 = vsub.f32 %v1604, %v1973
    %v1975 = vand.u32 %v1974, 4294901760
    %v1976 = vsub.f32 %v1974, %v1975
    %v1977 = vand.u32 %v1976, 4294901760
    %1978 = vmatpush1.msra.mxu0 %v1977
    %1979 = vmatprep.subr.mxu0 0.0
    %v1980 = vand.u32 %v1605, 4294901760
    %v1981 = vsub.f32 %v1605, %v1980
    %v1982 = vand.u32 %v1981, 4294901760
    %v1983 = vsub.f32 %v1981, %v1982
    %v1984 = vand.u32 %v1983, 4294901760
    %1985 = vmatpush1.msra.mxu0 %v1984
    %1986 = vmatprep.subr.mxu0 0.0
    %v1987 = vand.u32 %v1606, 4294901760
    %v1988 = vsub.f32 %v1606, %v1987
    %v1989 = vand.u32 %v1988, 4294901760
    %v1990 = vsub.f32 %v1988, %v1989
    %v1991 = vand.u32 %v1990, 4294901760
    %1992 = vmatpush1.msra.mxu0 %v1991
    %1993 = vmatprep.subr.mxu0 0.0
    %v1994 = vand.u32 %v1607, 4294901760
    %v1995 = vsub.f32 %v1607, %v1994
    %v1996 = vand.u32 %v1995, 4294901760
    %v1997 = vsub.f32 %v1995, %v1996
    %v1998 = vand.u32 %v1997, 4294901760
    %1999 = vmatpush1.msra.mxu0 %v1998
    %2000 = vmatprep.subr.mxu0 0.0
    %v2001 = vand.u32 %v1608, 4294901760
    %v2002 = vsub.f32 %v1608, %v2001
    %v2003 = vand.u32 %v2002, 4294901760
    %v2004 = vsub.f32 %v2002, %v2003
    %v2005 = vand.u32 %v2004, 4294901760
    %2006 = vmatpush1.msra.mxu0 %v2005
    %2007 = vmatprep.subr.mxu0 0.0
    %v2008 = vand.u32 %v1609, 4294901760
    %v2009 = vsub.f32 %v1609, %v2008
    %v2010 = vand.u32 %v2009, 4294901760
    %v2011 = vsub.f32 %v2009, %v2010
    %v2012 = vand.u32 %v2011, 4294901760
    %2013 = vmatpush1.msra.mxu0 %v2012
    %v2014 = vand.u32 %v1487, 4294901760
    %2015 = vmatprep.mubr.f32.mxu0 %v2014
    %v2016 = vand.u32 %v1557, 4294901760
    %2017 = vmatmul.mubr.f32.gmra.mrb[0].mxu0 %v2016
    %v2018 = vpop.f32.mrb[0].mxu0
    %v2019 = vadd.f32 %v1742, %v2018
    %v2020 = vpop.f32.mrb[0].mxu0
    %v2021 = vand.u32 %v1488, 4294901760
    %2022 = vmatprep.mubr.f32.mxu0 %v2021
    %v2023 = vand.u32 %v1558, 4294901760
    %2024 = vmatmul.mubr.f32.gmra.mrb[0].mxu0 %v2023
    %v2025 = vpop.f32.mrb[0].mxu0
    %v2026 = vadd.f32 %v1757, %v2025
    %v2027 = vpop.f32.mrb[0].mxu0
    %v2028 = vand.u32 %v1489, 4294901760
    %2029 = vmatprep.mubr.f32.mxu0 %v2028
    %v2030 = vand.u32 %v1559, 4294901760
    %2031 = vmatmul.mubr.f32.gmra.mrb[0].mxu0 %v2030
    %v2032 = vpop.f32.mrb[0].mxu0
    %v2033 = vadd.f32 %v1772, %v2032
    %v2034 = vpop.f32.mrb[0].mxu0
    %v2035 = vand.u32 %v1490, 4294901760
    %2036 = vmatprep.mubr.f32.mxu0 %v2035
    %v2037 = vand.u32 %v1560, 4294901760
    %2038 = vmatmul.mubr.f32.gmra.mrb[0].mxu0 %v2037
    %v2039 = vpop.f32.mrb[0].mxu0
    %v2040 = vadd.f32 %v1787, %v2039
    %v2041 = vpop.f32.mrb[0].mxu0
    %2042 = vdwg.mxu0
    %2043 = vmatprep.subr.mxu0 0.0
    %v2044 = vand.u32 %v1578, 4294901760
    %v2045 = vsub.f32 %v1578, %v2044
    %2046 = vmatpush1.msra.mxu0 %v2045
    %2047 = vmatprep.subr.mxu0 0.0
    %v2048 = vand.u32 %v1579, 4294901760
    %v2049 = vsub.f32 %v1579, %v2048
    %2050 = vmatpush1.msra.mxu0 %v2049
    %2051 = vmatprep.subr.mxu0 0.0
    %v2052 = vand.u32 %v1580, 4294901760
    %v2053 = vsub.f32 %v1580, %v2052
    %2054 = vmatpush1.msra.mxu0 %v2053
    %2055 = vmatprep.subr.mxu0 0.0
    %v2056 = vand.u32 %v1581, 4294901760
    %v2057 = vsub.f32 %v1581, %v2056
    %2058 = vmatpush1.msra.mxu0 %v2057
    %2059 = vmatprep.subr.mxu0 0.0
    %v2060 = vand.u32 %v1582, 4294901760
    %v2061 = vsub.f32 %v1582, %v2060
    %2062 = vmatpush1.msra.mxu0 %v2061
    %2063 = vmatprep.subr.mxu0 0.0
    %v2064 = vand.u32 %v1583, 4294901760
    %v2065 = vsub.f32 %v1583, %v2064
    %2066 = vmatpush1.msra.mxu0 %v2065
    %2067 = vmatprep.subr.mxu0 0.0
    %v2068 = vand.u32 %v1584, 4294901760
    %v2069 = vsub.f32 %v1584, %v2068
    %2070 = vmatpush1.msra.mxu0 %v2069
    %2071 = vmatprep.subr.mxu0 0.0
    %v2072 = vand.u32 %v1585, 4294901760
    %v2073 = vsub.f32 %v1585, %v2072
    %2074 = vmatpush1.msra.mxu0 %v2073
    %2075 = vmatprep.subr.mxu0 0.0
    %v2076 = vand.u32 %v1586, 4294901760
    %v2077 = vsub.f32 %v1586, %v2076
    %2078 = vmatpush1.msra.mxu0 %v2077
    %2079 = vmatprep.subr.mxu0 0.0
    %v2080 = vand.u32 %v1587, 4294901760
    %v2081 = vsub.f32 %v1587, %v2080
    %2082 = vmatpush1.msra.mxu0 %v2081
    %2083 = vmatprep.subr.mxu0 0.0
    %v2084 = vand.u32 %v1588, 4294901760
    %v2085 = vsub.f32 %v1588, %v2084
    %2086 = vmatpush1.msra.mxu0 %v2085
    %2087 = vmatprep.subr.mxu0 0.0
    %v2088 = vand.u32 %v1589, 4294901760
    %v2089 = vsub.f32 %v1589, %v2088
    %2090 = vmatpush1.msra.mxu0 %v2089
    %2091 = vmatprep.subr.mxu0 0.0
    %v2092 = vand.u32 %v1590, 4294901760
    %v2093 = vsub.f32 %v1590, %v2092
    %2094 = vmatpush1.msra.mxu0 %v2093
    %2095 = vmatprep.subr.mxu0 0.0
    %v2096 = vand.u32 %v1591, 4294901760
    %v2097 = vsub.f32 %v1591, %v2096
    %2098 = vmatpush1.msra.mxu0 %v2097
    %2099 = vmatprep.subr.mxu0 0.0
    %v2100 = vand.u32 %v1592, 4294901760
    %v2101 = vsub.f32 %v1592, %v2100
    %2102 = vmatpush1.msra.mxu0 %v2101
    %2103 = vmatprep.subr.mxu0 0.0
    %v2104 = vand.u32 %v1593, 4294901760
    %v2105 = vsub.f32 %v1593, %v2104
    %2106 = vmatpush1.msra.mxu0 %v2105
    %2107 = vmatprep.subr.mxu0 0.0
    %v2108 = vand.u32 %v1594, 4294901760
    %v2109 = vsub.f32 %v1594, %v2108
    %2110 = vmatpush1.msra.mxu0 %v2109
    %2111 = vmatprep.subr.mxu0 0.0
    %v2112 = vand.u32 %v1595, 4294901760
    %v2113 = vsub.f32 %v1595, %v2112
    %2114 = vmatpush1.msra.mxu0 %v2113
    %2115 = vmatprep.subr.mxu0 0.0
    %v2116 = vand.u32 %v1596, 4294901760
    %v2117 = vsub.f32 %v1596, %v2116
    %2118 = vmatpush1.msra.mxu0 %v2117
    %2119 = vmatprep.subr.mxu0 0.0
    %v2120 = vand.u32 %v1597, 4294901760
    %v2121 = vsub.f32 %v1597, %v2120
    %2122 = vmatpush1.msra.mxu0 %v2121
    %2123 = vmatprep.subr.mxu0 0.0
    %v2124 = vand.u32 %v1598, 4294901760
    %v2125 = vsub.f32 %v1598, %v2124
    %2126 = vmatpush1.msra.mxu0 %v2125
    %2127 = vmatprep.subr.mxu0 0.0
    %v2128 = vand.u32 %v1599, 4294901760
    %v2129 = vsub.f32 %v1599, %v2128
    %2130 = vmatpush1.msra.mxu0 %v2129
    %2131 = vmatprep.subr.mxu0 0.0
    %v2132 = vand.u32 %v1600, 4294901760
    %v2133 = vsub.f32 %v1600, %v2132
    %2134 = vmatpush1.msra.mxu0 %v2133
    %2135 = vmatprep.subr.mxu0 0.0
    %v2136 = vand.u32 %v1601, 4294901760
    %v2137 = vsub.f32 %v1601, %v2136
    %2138 = vmatpush1.msra.mxu0 %v2137
    %2139 = vmatprep.subr.mxu0 0.0
    %v2140 = vand.u32 %v1602, 4294901760
    %v2141 = vsub.f32 %v1602, %v2140
    %2142 = vmatpush1.msra.mxu0 %v2141
    %2143 = vmatprep.subr.mxu0 0.0
    %v2144 = vand.u32 %v1603, 4294901760
    %v2145 = vsub.f32 %v1603, %v2144
    %2146 = vmatpush1.msra.mxu0 %v2145
    %2147 = vmatprep.subr.mxu0 0.0
    %v2148 = vand.u32 %v1604, 4294901760
    %v2149 = vsub.f32 %v1604, %v2148
    %2150 = vmatpush1.msra.mxu0 %v2149
    %2151 = vmatprep.subr.mxu0 0.0
    %v2152 = vand.u32 %v1605, 4294901760
    %v2153 = vsub.f32 %v1605, %v2152
    %2154 = vmatpush1.msra.mxu0 %v2153
    %2155 = vmatprep.subr.mxu0 0.0
    %v2156 = vand.u32 %v1606, 4294901760
    %v2157 = vsub.f32 %v1606, %v2156
    %2158 = vmatpush1.msra.mxu0 %v2157
    %2159 = vmatprep.subr.mxu0 0.0
    %v2160 = vand.u32 %v1607, 4294901760
    %v2161 = vsub.f32 %v1607, %v2160
    %2162 = vmatpush1.msra.mxu0 %v2161
    %2163 = vmatprep.subr.mxu0 0.0
    %v2164 = vand.u32 %v1608, 4294901760
    %v2165 = vsub.f32 %v1608, %v2164
    %2166 = vmatpush1.msra.mxu0 %v2165
    %2167 = vmatprep.subr.mxu0 0.0
    %v2168 = vand.u32 %v1609, 4294901760
    %v2169 = vsub.f32 %v1609, %v2168
    %2170 = vmatpush1.msra.mxu0 %v2169
    %v2171 = vand.u32 %v1487, 4294901760
    %v2172 = vsub.f32 %v1487, %v2171
    %2173 = vmatprep.mubr.f32.mxu0 %v2172
    %v2174 = vand.u32 %v1557, 4294901760
    %v2175 = vsub.f32 %v1557, %v2174
    %2176 = vmatmul.mubr.f32.gmra.mrb[0].mxu0 %v2175
    %v2177 = vpop.f32.mrb[0].mxu0
    %v2178 = vadd.f32 %v2019, %v2177
    %v2179 = vpop.f32.mrb[0].mxu0
    %v2180 = vand.u32 %v1488, 4294901760
    %v2181 = vsub.f32 %v1488, %v2180
    %2182 = vmatprep.mubr.f32.mxu0 %v2181
    %v2183 = vand.u32 %v1558, 4294901760
    %v2184 = vsub.f32 %v1558, %v2183
    %2185 = vmatmul.mubr.f32.gmra.mrb[0].mxu0 %v2184
    %v2186 = vpop.f32.mrb[0].mxu0
    %v2187 = vadd.f32 %v2026, %v2186
    %v2188 = vpop.f32.mrb[0].mxu0
    %v2189 = vand.u32 %v1489, 4294901760
    %v2190 = vsub.f32 %v1489, %v2189
    %2191 = vmatprep.mubr.f32.mxu0 %v2190
    %v2192 = vand.u32 %v1559, 4294901760
    %v2193 = vsub.f32 %v1559, %v2192
    %2194 = vmatmul.mubr.f32.gmra.mrb[0].mxu0 %v2193
    %v2195 = vpop.f32.mrb[0].mxu0
    %v2196 = vadd.f32 %v2033, %v2195
    %v2197 = vpop.f32.mrb[0].mxu0
    %v2198 = vand.u32 %v1490, 4294901760
    %v2199 = vsub.f32 %v1490, %v2198
    %2200 = vmatprep.mubr.f32.mxu0 %v2199
    %v2201 = vand.u32 %v1560, 4294901760
    %v2202 = vsub.f32 %v1560, %v2201
    %2203 = vmatmul.mubr.f32.gmra.mrb[0].mxu0 %v2202
    %v2204 = vpop.f32.mrb[0].mxu0
    %v2205 = vadd.f32 %v2040, %v2204
    %v2206 = vpop.f32.mrb[0].mxu0
    %2207 = vdwg.mxu0
    %2208 = vmatprep.subr.mxu0 0.0
    %v2209 = vand.u32 %v1578, 4294901760
    %2210 = vmatpush1.msra.mxu0 %v2209
    %2211 = vmatprep.subr.mxu0 0.0
    %v2212 = vand.u32 %v1579, 4294901760
    %2213 = vmatpush1.msra.mxu0 %v2212
    %2214 = vmatprep.subr.mxu0 0.0
    %v2215 = vand.u32 %v1580, 4294901760
    %2216 = vmatpush1.msra.mxu0 %v2215
    %2217 = vmatprep.subr.mxu0 0.0
    %v2218 = vand.u32 %v1581, 4294901760
    %2219 = vmatpush1.msra.mxu0 %v2218
    %2220 = vmatprep.subr.mxu0 0.0
    %v2221 = vand.u32 %v1582, 4294901760
    %2222 = vmatpush1.msra.mxu0 %v2221
    %2223 = vmatprep.subr.mxu0 0.0
    %v2224 = vand.u32 %v1583, 4294901760
    %2225 = vmatpush1.msra.mxu0 %v2224
    %2226 = vmatprep.subr.mxu0 0.0
    %v2227 = vand.u32 %v1584, 4294901760
    %2228 = vmatpush1.msra.mxu0 %v2227
    %2229 = vmatprep.subr.mxu0 0.0
    %v2230 = vand.u32 %v1585, 4294901760
    %2231 = vmatpush1.msra.mxu0 %v2230
    %2232 = vmatprep.subr.mxu0 0.0
    %v2233 = vand.u32 %v1586, 4294901760
    %2234 = vmatpush1.msra.mxu0 %v2233
    %2235 = vmatprep.subr.mxu0 0.0
    %v2236 = vand.u32 %v1587, 4294901760
    %2237 = vmatpush1.msra.mxu0 %v2236
    %2238 = vmatprep.subr.mxu0 0.0
    %v2239 = vand.u32 %v1588, 4294901760
    %2240 = vmatpush1.msra.mxu0 %v2239
    %2241 = vmatprep.subr.mxu0 0.0
    %v2242 = vand.u32 %v1589, 4294901760
    %2243 = vmatpush1.msra.mxu0 %v2242
    %2244 = vmatprep.subr.mxu0 0.0
    %v2245 = vand.u32 %v1590, 4294901760
    %2246 = vmatpush1.msra.mxu0 %v2245
    %2247 = vmatprep.subr.mxu0 0.0
    %v2248 = vand.u32 %v1591, 4294901760
    %2249 = vmatpush1.msra.mxu0 %v2248
    %2250 = vmatprep.subr.mxu0 0.0
    %v2251 = vand.u32 %v1592, 4294901760
    %2252 = vmatpush1.msra.mxu0 %v2251
    %2253 = vmatprep.subr.mxu0 0.0
    %v2254 = vand.u32 %v1593, 4294901760
    %2255 = vmatpush1.msra.mxu0 %v2254
    %2256 = vmatprep.subr.mxu0 0.0
    %v2257 = vand.u32 %v1594, 4294901760
    %2258 = vmatpush1.msra.mxu0 %v2257
    %2259 = vmatprep.subr.mxu0 0.0
    %v2260 = vand.u32 %v1595, 4294901760
    %2261 = vmatpush1.msra.mxu0 %v2260
    %2262 = vmatprep.subr.mxu0 0.0
    %v2263 = vand.u32 %v1596, 4294901760
    %2264 = vmatpush1.msra.mxu0 %v2263
    %2265 = vmatprep.subr.mxu0 0.0
    %v2266 = vand.u32 %v1597, 4294901760
    %2267 = vmatpush1.msra.mxu0 %v2266
    %2268 = vmatprep.subr.mxu0 0.0
    %v2269 = vand.u32 %v1598, 4294901760
    %2270 = vmatpush1.msra.mxu0 %v2269
    %2271 = vmatprep.subr.mxu0 0.0
    %v2272 = vand.u32 %v1599, 4294901760
    %2273 = vmatpush1.msra.mxu0 %v2272
    %2274 = vmatprep.subr.mxu0 0.0
    %v2275 = vand.u32 %v1600, 4294901760
    %2276 = vmatpush1.msra.mxu0 %v2275
    %2277 = vmatprep.subr.mxu0 0.0
    %v2278 = vand.u32 %v1601, 4294901760
    %2279 = vmatpush1.msra.mxu0 %v2278
    %2280 = vmatprep.subr.mxu0 0.0
    %v2281 = vand.u32 %v1602, 4294901760
    %2282 = vmatpush1.msra.mxu0 %v2281
    %2283 = vmatprep.subr.mxu0 0.0
    %v2284 = vand.u32 %v1603, 4294901760
    %2285 = vmatpush1.msra.mxu0 %v2284
    %2286 = vmatprep.subr.mxu0 0.0
    %v2287 = vand.u32 %v1604, 4294901760
    %2288 = vmatpush1.msra.mxu0 %v2287
    %2289 = vmatprep.subr.mxu0 0.0
    %v2290 = vand.u32 %v1605, 4294901760
    %2291 = vmatpush1.msra.mxu0 %v2290
    %2292 = vmatprep.subr.mxu0 0.0
    %v2293 = vand.u32 %v1606, 4294901760
    %2294 = vmatpush1.msra.mxu0 %v2293
    %2295 = vmatprep.subr.mxu0 0.0
    %v2296 = vand.u32 %v1607, 4294901760
    %2297 = vmatpush1.msra.mxu0 %v2296
    %2298 = vmatprep.subr.mxu0 0.0
    %v2299 = vand.u32 %v1608, 4294901760
    %2300 = vmatpush1.msra.mxu0 %v2299
    %2301 = vmatprep.subr.mxu0 0.0
    %v2302 = vand.u32 %v1609, 4294901760
    %2303 = vmatpush1.msra.mxu0 %v2302
    %v2304 = vand.u32 %v1487, 4294901760
    %v2305 = vsub.f32 %v1487, %v2304
    %v2306 = vand.u32 %v2305, 4294901760
    %2307 = vmatprep.mubr.f32.mxu0 %v2306
    %v2308 = vand.u32 %v1557, 4294901760
    %v2309 = vsub.f32 %v1557, %v2308
    %v2310 = vand.u32 %v2309, 4294901760
    %2311 = vmatmul.mubr.f32.gmra.mrb[0].mxu0 %v2310
    %v2312 = vpop.f32.mrb[0].mxu0
    %v2313 = vadd.f32 %v2178, %v2312
    %v2314 = vpop.f32.mrb[0].mxu0
    %v2315 = vand.u32 %v1488, 4294901760
    %v2316 = vsub.f32 %v1488, %v2315
    %v2317 = vand.u32 %v2316, 4294901760
    %2318 = vmatprep.mubr.f32.mxu0 %v2317
    %v2319 = vand.u32 %v1558, 4294901760
    %v2320 = vsub.f32 %v1558, %v2319
    %v2321 = vand.u32 %v2320, 4294901760
    %2322 = vmatmul.mubr.f32.gmra.mrb[0].mxu0 %v2321
    %v2323 = vpop.f32.mrb[0].mxu0
    %v2324 = vadd.f32 %v2187, %v2323
    %v2325 = vpop.f32.mrb[0].mxu0
    %v2326 = vand.u32 %v1489, 4294901760
    %v2327 = vsub.f32 %v1489, %v2326
    %v2328 = vand.u32 %v2327, 4294901760
    %2329 = vmatprep.mubr.f32.mxu0 %v2328
    %v2330 = vand.u32 %v1559, 4294901760
    %v2331 = vsub.f32 %v1559, %v2330
    %v2332 = vand.u32 %v2331, 4294901760
    %2333 = vmatmul.mubr.f32.gmra.mrb[0].mxu0 %v2332
    %v2334 = vpop.f32.mrb[0].mxu0
    %v2335 = vadd.f32 %v2196, %v2334
    %v2336 = vpop.f32.mrb[0].mxu0
    %v2337 = vand.u32 %v1490, 4294901760
    %v2338 = vsub.f32 %v1490, %v2337
    %v2339 = vand.u32 %v2338, 4294901760
    %2340 = vmatprep.mubr.f32.mxu0 %v2339
    %v2341 = vand.u32 %v1560, 4294901760
    %v2342 = vsub.f32 %v1560, %v2341
    %v2343 = vand.u32 %v2342, 4294901760
    %2344 = vmatmul.mubr.f32.gmra.mrb[0].mxu0 %v2343
    %v2345 = vpop.f32.mrb[0].mxu0
    %v2346 = vadd.f32 %v2205, %v2345
    %v2347 = vpop.f32.mrb[0].mxu0
    %2348 = vdwg.mxu0
    %2349 = vmatprep.subr.mxu0 0.0
    %v2350 = vand.u32 %v1578, 4294901760
    %v2351 = vsub.f32 %v1578, %v2350
    %v2352 = vand.u32 %v2351, 4294901760
    %2353 = vmatpush1.msra.mxu0 %v2352
    %2354 = vmatprep.subr.mxu0 0.0
    %v2355 = vand.u32 %v1579, 4294901760
    %v2356 = vsub.f32 %v1579, %v2355
    %v2357 = vand.u32 %v2356, 4294901760
    %2358 = vmatpush1.msra.mxu0 %v2357
    %2359 = vmatprep.subr.mxu0 0.0
    %v2360 = vand.u32 %v1580, 4294901760
    %v2361 = vsub.f32 %v1580, %v2360
    %v2362 = vand.u32 %v2361, 4294901760
    %2363 = vmatpush1.msra.mxu0 %v2362
    %2364 = vmatprep.subr.mxu0 0.0
    %v2365 = vand.u32 %v1581, 4294901760
    %v2366 = vsub.f32 %v1581, %v2365
    %v2367 = vand.u32 %v2366, 4294901760
    %2368 = vmatpush1.msra.mxu0 %v2367
    %2369 = vmatprep.subr.mxu0 0.0
    %v2370 = vand.u32 %v1582, 4294901760
    %v2371 = vsub.f32 %v1582, %v2370
    %v2372 = vand.u32 %v2371, 4294901760
    %2373 = vmatpush1.msra.mxu0 %v2372
    %2374 = vmatprep.subr.mxu0 0.0
    %v2375 = vand.u32 %v1583, 4294901760
    %v2376 = vsub.f32 %v1583, %v2375
    %v2377 = vand.u32 %v2376, 4294901760
    %2378 = vmatpush1.msra.mxu0 %v2377
    %2379 = vmatprep.subr.mxu0 0.0
    %v2380 = vand.u32 %v1584, 4294901760
    %v2381 = vsub.f32 %v1584, %v2380
    %v2382 = vand.u32 %v2381, 4294901760
    %2383 = vmatpush1.msra.mxu0 %v2382
    %2384 = vmatprep.subr.mxu0 0.0
    %v2385 = vand.u32 %v1585, 4294901760
    %v2386 = vsub.f32 %v1585, %v2385
    %v2387 = vand.u32 %v2386, 4294901760
    %2388 = vmatpush1.msra.mxu0 %v2387
    %2389 = vmatprep.subr.mxu0 0.0
    %v2390 = vand.u32 %v1586, 4294901760
    %v2391 = vsub.f32 %v1586, %v2390
    %v2392 = vand.u32 %v2391, 4294901760
    %2393 = vmatpush1.msra.mxu0 %v2392
    %2394 = vmatprep.subr.mxu0 0.0
    %v2395 = vand.u32 %v1587, 4294901760
    %v2396 = vsub.f32 %v1587, %v2395
    %v2397 = vand.u32 %v2396, 4294901760
    %2398 = vmatpush1.msra.mxu0 %v2397
    %2399 = vmatprep.subr.mxu0 0.0
    %v2400 = vand.u32 %v1588, 4294901760
    %v2401 = vsub.f32 %v1588, %v2400
    %v2402 = vand.u32 %v2401, 4294901760
    %2403 = vmatpush1.msra.mxu0 %v2402
    %2404 = vmatprep.subr.mxu0 0.0
    %v2405 = vand.u32 %v1589, 4294901760
    %v2406 = vsub.f32 %v1589, %v2405
    %v2407 = vand.u32 %v2406, 4294901760
    %2408 = vmatpush1.msra.mxu0 %v2407
    %2409 = vmatprep.subr.mxu0 0.0
    %v2410 = vand.u32 %v1590, 4294901760
    %v2411 = vsub.f32 %v1590, %v2410
    %v2412 = vand.u32 %v2411, 4294901760
    %2413 = vmatpush1.msra.mxu0 %v2412
    %2414 = vmatprep.subr.mxu0 0.0
    %v2415 = vand.u32 %v1591, 4294901760
    %v2416 = vsub.f32 %v1591, %v2415
    %v2417 = vand.u32 %v2416, 4294901760
    %2418 = vmatpush1.msra.mxu0 %v2417
    %2419 = vmatprep.subr.mxu0 0.0
    %v2420 = vand.u32 %v1592, 4294901760
    %v2421 = vsub.f32 %v1592, %v2420
    %v2422 = vand.u32 %v2421, 4294901760
    %2423 = vmatpush1.msra.mxu0 %v2422
    %2424 = vmatprep.subr.mxu0 0.0
    %v2425 = vand.u32 %v1593, 4294901760
    %v2426 = vsub.f32 %v1593, %v2425
    %v2427 = vand.u32 %v2426, 4294901760
    %2428 = vmatpush1.msra.mxu0 %v2427
    %2429 = vmatprep.subr.mxu0 0.0
    %v2430 = vand.u32 %v1594, 4294901760
    %v2431 = vsub.f32 %v1594, %v2430
    %v2432 = vand.u32 %v2431, 4294901760
    %2433 = vmatpush1.msra.mxu0 %v2432
    %2434 = vmatprep.subr.mxu0 0.0
    %v2435 = vand.u32 %v1595, 4294901760
    %v2436 = vsub.f32 %v1595, %v2435
    %v2437 = vand.u32 %v2436, 4294901760
    %2438 = vmatpush1.msra.mxu0 %v2437
    %2439 = vmatprep.subr.mxu0 0.0
    %v2440 = vand.u32 %v1596, 4294901760
    %v2441 = vsub.f32 %v1596, %v2440
    %v2442 = vand.u32 %v2441, 4294901760
    %2443 = vmatpush1.msra.mxu0 %v2442
    %2444 = vmatprep.subr.mxu0 0.0
    %v2445 = vand.u32 %v1597, 4294901760
    %v2446 = vsub.f32 %v1597, %v2445
    %v2447 = vand.u32 %v2446, 4294901760
    %2448 = vmatpush1.msra.mxu0 %v2447
    %2449 = vmatprep.subr.mxu0 0.0
    %v2450 = vand.u32 %v1598, 4294901760
    %v2451 = vsub.f32 %v1598, %v2450
    %v2452 = vand.u32 %v2451, 4294901760
    %2453 = vmatpush1.msra.mxu0 %v2452
    %2454 = vmatprep.subr.mxu0 0.0
    %v2455 = vand.u32 %v1599, 4294901760
    %v2456 = vsub.f32 %v1599, %v2455
    %v2457 = vand.u32 %v2456, 4294901760
    %2458 = vmatpush1.msra.mxu0 %v2457
    %2459 = vmatprep.subr.mxu0 0.0
    %v2460 = vand.u32 %v1600, 4294901760
    %v2461 = vsub.f32 %v1600, %v2460
    %v2462 = vand.u32 %v2461, 4294901760
    %2463 = vmatpush1.msra.mxu0 %v2462
    %2464 = vmatprep.subr.mxu0 0.0
    %v2465 = vand.u32 %v1601, 4294901760
    %v2466 = vsub.f32 %v1601, %v2465
    %v2467 = vand.u32 %v2466, 4294901760
    %2468 = vmatpush1.msra.mxu0 %v2467
    %2469 = vmatprep.subr.mxu0 0.0
    %v2470 = vand.u32 %v1602, 4294901760
    %v2471 = vsub.f32 %v1602, %v2470
    %v2472 = vand.u32 %v2471, 4294901760
    %2473 = vmatpush1.msra.mxu0 %v2472
    %2474 = vmatprep.subr.mxu0 0.0
    %v2475 = vand.u32 %v1603, 4294901760
    %v2476 = vsub.f32 %v1603, %v2475
    %v2477 = vand.u32 %v2476, 4294901760
    %2478 = vmatpush1.msra.mxu0 %v2477
    %2479 = vmatprep.subr.mxu0 0.0
    %v2480 = vand.u32 %v1604, 4294901760
    %v2481 = vsub.f32 %v1604, %v2480
    %v2482 = vand.u32 %v2481, 4294901760
    %2483 = vmatpush1.msra.mxu0 %v2482
    %2484 = vmatprep.subr.mxu0 0.0
    %v2485 = vand.u32 %v1605, 4294901760
    %v2486 = vsub.f32 %v1605, %v2485
    %v2487 = vand.u32 %v2486, 4294901760
    %2488 = vmatpush1.msra.mxu0 %v2487
    %2489 = vmatprep.subr.mxu0 0.0
    %v2490 = vand.u32 %v1606, 4294901760
    %v2491 = vsub.f32 %v1606, %v2490
    %v2492 = vand.u32 %v2491, 4294901760
    %2493 = vmatpush1.msra.mxu0 %v2492
    %2494 = vmatprep.subr.mxu0 0.0
    %v2495 = vand.u32 %v1607, 4294901760
    %v2496 = vsub.f32 %v1607, %v2495
    %v2497 = vand.u32 %v2496, 4294901760
    %2498 = vmatpush1.msra.mxu0 %v2497
    %2499 = vmatprep.subr.mxu0 0.0
    %v2500 = vand.u32 %v1608, 4294901760
    %v2501 = vsub.f32 %v1608, %v2500
    %v2502 = vand.u32 %v2501, 4294901760
    %2503 = vmatpush1.msra.mxu0 %v2502
    %2504 = vmatprep.subr.mxu0 0.0
    %v2505 = vand.u32 %v1609, 4294901760
    %v2506 = vsub.f32 %v1609, %v2505
    %v2507 = vand.u32 %v2506, 4294901760
    %2508 = vmatpush1.msra.mxu0 %v2507
    %v2509 = vand.u32 %v1487, 4294901760
    %2510 = vmatprep.mubr.f32.mxu0 %v2509
    %v2511 = vand.u32 %v1557, 4294901760
    %2512 = vmatmul.mubr.f32.gmra.mrb[0].mxu0 %v2511
    %v2513 = vpop.f32.mrb[0].mxu0
    %v2514 = vadd.f32 %v2313, %v2513
    %v2515 = vpop.f32.mrb[0].mxu0
    %v2516 = vand.u32 %v1488, 4294901760
    %2517 = vmatprep.mubr.f32.mxu0 %v2516
    %v2518 = vand.u32 %v1558, 4294901760
    %2519 = vmatmul.mubr.f32.gmra.mrb[0].mxu0 %v2518
    %v2520 = vpop.f32.mrb[0].mxu0
    %v2521 = vadd.f32 %v2324, %v2520
    %v2522 = vpop.f32.mrb[0].mxu0
    %v2523 = vand.u32 %v1489, 4294901760
    %2524 = vmatprep.mubr.f32.mxu0 %v2523
    %v2525 = vand.u32 %v1559, 4294901760
    %2526 = vmatmul.mubr.f32.gmra.mrb[0].mxu0 %v2525
    %v2527 = vpop.f32.mrb[0].mxu0
    %v2528 = vadd.f32 %v2335, %v2527
    %v2529 = vpop.f32.mrb[0].mxu0
    %v2530 = vand.u32 %v1490, 4294901760
    %2531 = vmatprep.mubr.f32.mxu0 %v2530
    %v2532 = vand.u32 %v1560, 4294901760
    %2533 = vmatmul.mubr.f32.gmra.mrb[0].mxu0 %v2532
    %v2534 = vpop.f32.mrb[0].mxu0
    %v2535 = vadd.f32 %v2346, %v2534
    %v2536 = vpop.f32.mrb[0].mxu0
    %2537 = vdwg.mxu0
    %2538 = vmatprep.subr.mxu0 0.0
    %v2539 = vand.u32 %v1578, 4294901760
    %2540 = vmatpush1.msra.mxu0 %v2539
    %2541 = vmatprep.subr.mxu0 0.0
    %v2542 = vand.u32 %v1579, 4294901760
    %2543 = vmatpush1.msra.mxu0 %v2542
    %2544 = vmatprep.subr.mxu0 0.0
    %v2545 = vand.u32 %v1580, 4294901760
    %2546 = vmatpush1.msra.mxu0 %v2545
    %2547 = vmatprep.subr.mxu0 0.0
    %v2548 = vand.u32 %v1581, 4294901760
    %2549 = vmatpush1.msra.mxu0 %v2548
    %2550 = vmatprep.subr.mxu0 0.0
    %v2551 = vand.u32 %v1582, 4294901760
    %2552 = vmatpush1.msra.mxu0 %v2551
    %2553 = vmatprep.subr.mxu0 0.0
    %v2554 = vand.u32 %v1583, 4294901760
    %2555 = vmatpush1.msra.mxu0 %v2554
    %2556 = vmatprep.subr.mxu0 0.0
    %v2557 = vand.u32 %v1584, 4294901760
    %2558 = vmatpush1.msra.mxu0 %v2557
    %2559 = vmatprep.subr.mxu0 0.0
    %v2560 = vand.u32 %v1585, 4294901760
    %2561 = vmatpush1.msra.mxu0 %v2560
    %2562 = vmatprep.subr.mxu0 0.0
    %v2563 = vand.u32 %v1586, 4294901760
    %2564 = vmatpush1.msra.mxu0 %v2563
    %2565 = vmatprep.subr.mxu0 0.0
    %v2566 = vand.u32 %v1587, 4294901760
    %2567 = vmatpush1.msra.mxu0 %v2566
    %2568 = vmatprep.subr.mxu0 0.0
    %v2569 = vand.u32 %v1588, 4294901760
    %2570 = vmatpush1.msra.mxu0 %v2569
    %2571 = vmatprep.subr.mxu0 0.0
    %v2572 = vand.u32 %v1589, 4294901760
    %2573 = vmatpush1.msra.mxu0 %v2572
    %2574 = vmatprep.subr.mxu0 0.0
    %v2575 = vand.u32 %v1590, 4294901760
    %2576 = vmatpush1.msra.mxu0 %v2575
    %2577 = vmatprep.subr.mxu0 0.0
    %v2578 = vand.u32 %v1591, 4294901760
    %2579 = vmatpush1.msra.mxu0 %v2578
    %2580 = vmatprep.subr.mxu0 0.0
    %v2581 = vand.u32 %v1592, 4294901760
    %2582 = vmatpush1.msra.mxu0 %v2581
    %2583 = vmatprep.subr.mxu0 0.0
    %v2584 = vand.u32 %v1593, 4294901760
    %2585 = vmatpush1.msra.mxu0 %v2584
    %2586 = vmatprep.subr.mxu0 0.0
    %v2587 = vand.u32 %v1594, 4294901760
    %2588 = vmatpush1.msra.mxu0 %v2587
    %2589 = vmatprep.subr.mxu0 0.0
    %v2590 = vand.u32 %v1595, 4294901760
    %2591 = vmatpush1.msra.mxu0 %v2590
    %2592 = vmatprep.subr.mxu0 0.0
    %v2593 = vand.u32 %v1596, 4294901760
    %2594 = vmatpush1.msra.mxu0 %v2593
    %2595 = vmatprep.subr.mxu0 0.0
    %v2596 = vand.u32 %v1597, 4294901760
    %2597 = vmatpush1.msra.mxu0 %v2596
    %2598 = vmatprep.subr.mxu0 0.0
    %v2599 = vand.u32 %v1598, 4294901760
    %2600 = vmatpush1.msra.mxu0 %v2599
    %2601 = vmatprep.subr.mxu0 0.0
    %v2602 = vand.u32 %v1599, 4294901760
    %2603 = vmatpush1.msra.mxu0 %v2602
    %2604 = vmatprep.subr.mxu0 0.0
    %v2605 = vand.u32 %v1600, 4294901760
    %2606 = vmatpush1.msra.mxu0 %v2605
    %2607 = vmatprep.subr.mxu0 0.0
    %v2608 = vand.u32 %v1601, 4294901760
    %2609 = vmatpush1.msra.mxu0 %v2608
    %2610 = vmatprep.subr.mxu0 0.0
    %v2611 = vand.u32 %v1602, 4294901760
    %2612 = vmatpush1.msra.mxu0 %v2611
    %2613 = vmatprep.subr.mxu0 0.0
    %v2614 = vand.u32 %v1603, 4294901760
    %2615 = vmatpush1.msra.mxu0 %v2614
    %2616 = vmatprep.subr.mxu0 0.0
    %v2617 = vand.u32 %v1604, 4294901760
    %2618 = vmatpush1.msra.mxu0 %v2617
    %2619 = vmatprep.subr.mxu0 0.0
    %v2620 = vand.u32 %v1605, 4294901760
    %2621 = vmatpush1.msra.mxu0 %v2620
    %2622 = vmatprep.subr.mxu0 0.0
    %v2623 = vand.u32 %v1606, 4294901760
    %2624 = vmatpush1.msra.mxu0 %v2623
    %2625 = vmatprep.subr.mxu0 0.0
    %v2626 = vand.u32 %v1607, 4294901760
    %2627 = vmatpush1.msra.mxu0 %v2626
    %2628 = vmatprep.subr.mxu0 0.0
    %v2629 = vand.u32 %v1608, 4294901760
    %2630 = vmatpush1.msra.mxu0 %v2629
    %2631 = vmatprep.subr.mxu0 0.0
    %v2632 = vand.u32 %v1609, 4294901760
    %2633 = vmatpush1.msra.mxu0 %v2632
    %v2634 = vand.u32 %v1487, 4294901760
    %2635 = vmatprep.mubr.f32.mxu0 %v2634
    %v2636 = vand.u32 %v1557, 4294901760
    %2637 = vmatmul.mubr.f32.gmra.mrb[0].mxu0 %v2636
    %v2638 = vpop.f32.mrb[0].mxu0
    %v2639 = vadd.f32 %v2514, %v2638
    %v2640 = vpop.f32.mrb[0].mxu0
    %v2641 = vand.u32 %v1488, 4294901760
    %2642 = vmatprep.mubr.f32.mxu0 %v2641
    %v2643 = vand.u32 %v1558, 4294901760
    %2644 = vmatmul.mubr.f32.gmra.mrb[0].mxu0 %v2643
    %v2645 = vpop.f32.mrb[0].mxu0
    %v2646 = vadd.f32 %v2521, %v2645
    %v2647 = vpop.f32.mrb[0].mxu0
    %v2648 = vand.u32 %v1489, 4294901760
    %2649 = vmatprep.mubr.f32.mxu0 %v2648
    %v2650 = vand.u32 %v1559, 4294901760
    %2651 = vmatmul.mubr.f32.gmra.mrb[0].mxu0 %v2650
    %v2652 = vpop.f32.mrb[0].mxu0
    %v2653 = vadd.f32 %v2528, %v2652
    %v2654 = vpop.f32.mrb[0].mxu0
    %v2655 = vand.u32 %v1490, 4294901760
    %2656 = vmatprep.mubr.f32.mxu0 %v2655
    %v2657 = vand.u32 %v1560, 4294901760
    %2658 = vmatmul.mubr.f32.gmra.mrb[0].mxu0 %v2657
    %v2659 = vpop.f32.mrb[0].mxu0
    %v2660 = vadd.f32 %v2535, %v2659
    %v2661 = vpop.f32.mrb[0].mxu0
    %2662 = vdwg.mxu0
    %2663 = vmatprep.subr.mxu0 0.0
    %v2664 = vand.u32 %v1610, 4294901760
    %2665 = vmatpush1.msra.mxu0 %v2664
    %2666 = vmatprep.subr.mxu0 0.0
    %v2667 = vand.u32 %v1611, 4294901760
    %2668 = vmatpush1.msra.mxu0 %v2667
    %2669 = vmatprep.subr.mxu0 0.0
    %v2670 = vand.u32 %v1612, 4294901760
    %2671 = vmatpush1.msra.mxu0 %v2670
    %2672 = vmatprep.subr.mxu0 0.0
    %v2673 = vand.u32 %v1613, 4294901760
    %2674 = vmatpush1.msra.mxu0 %v2673
    %2675 = vmatprep.subr.mxu0 0.0
    %v2676 = vand.u32 %v1614, 4294901760
    %2677 = vmatpush1.msra.mxu0 %v2676
    %2678 = vmatprep.subr.mxu0 0.0
    %v2679 = vand.u32 %v1615, 4294901760
    %2680 = vmatpush1.msra.mxu0 %v2679
    %2681 = vmatprep.subr.mxu0 0.0
    %v2682 = vand.u32 %v1616, 4294901760
    %2683 = vmatpush1.msra.mxu0 %v2682
    %2684 = vmatprep.subr.mxu0 0.0
    %v2685 = vand.u32 %v1617, 4294901760
    %2686 = vmatpush1.msra.mxu0 %v2685
    %2687 = vmatprep.subr.mxu0 0.0
    %v2688 = vand.u32 %v1618, 4294901760
    %2689 = vmatpush1.msra.mxu0 %v2688
    %2690 = vmatprep.subr.mxu0 0.0
    %v2691 = vand.u32 %v1619, 4294901760
    %2692 = vmatpush1.msra.mxu0 %v2691
    %2693 = vmatprep.subr.mxu0 0.0
    %v2694 = vand.u32 %v1620, 4294901760
    %2695 = vmatpush1.msra.mxu0 %v2694
    %2696 = vmatprep.subr.mxu0 0.0
    %v2697 = vand.u32 %v1621, 4294901760
    %2698 = vmatpush1.msra.mxu0 %v2697
    %2699 = vmatprep.subr.mxu0 0.0
    %v2700 = vand.u32 %v1622, 4294901760
    %2701 = vmatpush1.msra.mxu0 %v2700
    %2702 = vmatprep.subr.mxu0 0.0
    %v2703 = vand.u32 %v1623, 4294901760
    %2704 = vmatpush1.msra.mxu0 %v2703
    %2705 = vmatprep.subr.mxu0 0.0
    %v2706 = vand.u32 %v1624, 4294901760
    %2707 = vmatpush1.msra.mxu0 %v2706
    %2708 = vmatprep.subr.mxu0 0.0
    %v2709 = vand.u32 %v1625, 4294901760
    %2710 = vmatpush1.msra.mxu0 %v2709
    %2711 = vmatprep.subr.mxu0 0.0
    %2712 = vmatpush1.msra.mxu0 0.0
    %2713 = vmatprep.subr.mxu0 0.0
    %2714 = vmatpush1.msra.mxu0 0.0
    %2715 = vmatprep.subr.mxu0 0.0
    %2716 = vmatpush1.msra.mxu0 0.0
    %2717 = vmatprep.subr.mxu0 0.0
    %2718 = vmatpush1.msra.mxu0 0.0
    %2719 = vmatprep.subr.mxu0 0.0
    %2720 = vmatpush1.msra.mxu0 0.0
    %2721 = vmatprep.subr.mxu0 0.0
    %2722 = vmatpush1.msra.mxu0 0.0
    %2723 = vmatprep.subr.mxu0 0.0
    %2724 = vmatpush1.msra.mxu0 0.0
    %2725 = vmatprep.subr.mxu0 0.0
    %2726 = vmatpush1.msra.mxu0 0.0
    %2727 = vmatprep.subr.mxu0 0.0
    %2728 = vmatpush1.msra.mxu0 0.0
    %2729 = vmatprep.subr.mxu0 0.0
    %2730 = vmatpush1.msra.mxu0 0.0
    %2731 = vmatprep.subr.mxu0 0.0
    %2732 = vmatpush1.msra.mxu0 0.0
    %2733 = vmatprep.subr.mxu0 0.0
    %2734 = vmatpush1.msra.mxu0 0.0
    %2735 = vmatprep.subr.mxu0 0.0
    %2736 = vmatpush1.msra.mxu0 0.0
    %2737 = vmatprep.subr.mxu0 0.0
    %2738 = vmatpush1.msra.mxu0 0.0
    %2739 = vmatprep.subr.mxu0 0.0
    %2740 = vmatpush1.msra.mxu0 0.0
    %2741 = vmatprep.subr.mxu0 0.0
    %2742 = vmatpush1.msra.mxu0 0.0
    %2743 = vmatprep.mubr.f32.mxu0 0.0
    %v2744 = vand.u32 %v1574, 4294901760
    %v2745 = vsub.f32 %v1574, %v2744
    %v2746 = vand.u32 %v2745, 4294901760
    %v2747 = vsub.f32 %v2745, %v2746
    %v2748 = vand.u32 %v2747, 4294901760
    %2749 = vmatmul.mubr.f32.gmra.mrb[0].mxu0 %v2748
    %v2750 = vpop.f32.mrb[0].mxu0
    %v2751 = vadd.f32 %v2639, %v2750
    %v2752 = vpop.f32.mrb[0].mxu0
    %2753 = vmatprep.mubr.f32.mxu0 0.0
    %v2754 = vand.u32 %v1575, 4294901760
    %v2755 = vsub.f32 %v1575, %v2754
    %v2756 = vand.u32 %v2755, 4294901760
    %v2757 = vsub.f32 %v2755, %v2756
    %v2758 = vand.u32 %v2757, 4294901760
    %2759 = vmatmul.mubr.f32.gmra.mrb[0].mxu0 %v2758
    %v2760 = vpop.f32.mrb[0].mxu0
    %v2761 = vadd.f32 %v2646, %v2760
    %v2762 = vpop.f32.mrb[0].mxu0
    %2763 = vmatprep.mubr.f32.mxu0 0.0
    %v2764 = vand.u32 %v1576, 4294901760
    %v2765 = vsub.f32 %v1576, %v2764
    %v2766 = vand.u32 %v2765, 4294901760
    %v2767 = vsub.f32 %v2765, %v2766
    %v2768 = vand.u32 %v2767, 4294901760
    %2769 = vmatmul.mubr.f32.gmra.mrb[0].mxu0 %v2768
    %v2770 = vpop.f32.mrb[0].mxu0
    %v2771 = vadd.f32 %v2653, %v2770
    %v2772 = vpop.f32.mrb[0].mxu0
    %2773 = vmatprep.mubr.f32.mxu0 0.0
    %v2774 = vand.u32 %v1577, 4294901760
    %v2775 = vsub.f32 %v1577, %v2774
    %v2776 = vand.u32 %v2775, 4294901760
    %v2777 = vsub.f32 %v2775, %v2776
    %v2778 = vand.u32 %v2777, 4294901760
    %2779 = vmatmul.mubr.f32.gmra.mrb[0].mxu0 %v2778
    %v2780 = vpop.f32.mrb[0].mxu0
    %v2781 = vadd.f32 %v2660, %v2780
    %v2782 = vpop.f32.mrb[0].mxu0
    %2783 = vdwg.mxu0
    %2784 = vmatprep.subr.mxu0 0.0
    %v2785 = vand.u32 %v1610, 4294901760
    %v2786 = vsub.f32 %v1610, %v2785
    %v2787 = vand.u32 %v2786, 4294901760
    %v2788 = vsub.f32 %v2786, %v2787
    %v2789 = vand.u32 %v2788, 4294901760
    %2790 = vmatpush1.msra.mxu0 %v2789
    %2791 = vmatprep.subr.mxu0 0.0
    %v2792 = vand.u32 %v1611, 4294901760
    %v2793 = vsub.f32 %v1611, %v2792
    %v2794 = vand.u32 %v2793, 4294901760
    %v2795 = vsub.f32 %v2793, %v2794
    %v2796 = vand.u32 %v2795, 4294901760
    %2797 = vmatpush1.msra.mxu0 %v2796
    %2798 = vmatprep.subr.mxu0 0.0
    %v2799 = vand.u32 %v1612, 4294901760
    %v2800 = vsub.f32 %v1612, %v2799
    %v2801 = vand.u32 %v2800, 4294901760
    %v2802 = vsub.f32 %v2800, %v2801
    %v2803 = vand.u32 %v2802, 4294901760
    %2804 = vmatpush1.msra.mxu0 %v2803
    %2805 = vmatprep.subr.mxu0 0.0
    %v2806 = vand.u32 %v1613, 4294901760
    %v2807 = vsub.f32 %v1613, %v2806
    %v2808 = vand.u32 %v2807, 4294901760
    %v2809 = vsub.f32 %v2807, %v2808
    %v2810 = vand.u32 %v2809, 4294901760
    %2811 = vmatpush1.msra.mxu0 %v2810
    %2812 = vmatprep.subr.mxu0 0.0
    %v2813 = vand.u32 %v1614, 4294901760
    %v2814 = vsub.f32 %v1614, %v2813
    %v2815 = vand.u32 %v2814, 4294901760
    %v2816 = vsub.f32 %v2814, %v2815
    %v2817 = vand.u32 %v2816, 4294901760
    %2818 = vmatpush1.msra.mxu0 %v2817
    %2819 = vmatprep.subr.mxu0 0.0
    %v2820 = vand.u32 %v1615, 4294901760
    %v2821 = vsub.f32 %v1615, %v2820
    %v2822 = vand.u32 %v2821, 4294901760
    %v2823 = vsub.f32 %v2821, %v2822
    %v2824 = vand.u32 %v2823, 4294901760
    %2825 = vmatpush1.msra.mxu0 %v2824
    %2826 = vmatprep.subr.mxu0 0.0
    %v2827 = vand.u32 %v1616, 4294901760
    %v2828 = vsub.f32 %v1616, %v2827
    %v2829 = vand.u32 %v2828, 4294901760
    %v2830 = vsub.f32 %v2828, %v2829
    %v2831 = vand.u32 %v2830, 4294901760
    %2832 = vmatpush1.msra.mxu0 %v2831
    %2833 = vmatprep.subr.mxu0 0.0
    %v2834 = vand.u32 %v1617, 4294901760
    %v2835 = vsub.f32 %v1617, %v2834
    %v2836 = vand.u32 %v2835, 4294901760
    %v2837 = vsub.f32 %v2835, %v2836
    %v2838 = vand.u32 %v2837, 4294901760
    %2839 = vmatpush1.msra.mxu0 %v2838
    %2840 = vmatprep.subr.mxu0 0.0
    %v2841 = vand.u32 %v1618, 4294901760
    %v2842 = vsub.f32 %v1618, %v2841
    %v2843 = vand.u32 %v2842, 4294901760
    %v2844 = vsub.f32 %v2842, %v2843
    %v2845 = vand.u32 %v2844, 4294901760
    %2846 = vmatpush1.msra.mxu0 %v2845
    %2847 = vmatprep.subr.mxu0 0.0
    %v2848 = vand.u32 %v1619, 4294901760
    %v2849 = vsub.f32 %v1619, %v2848
    %v2850 = vand.u32 %v2849, 4294901760
    %v2851 = vsub.f32 %v2849, %v2850
    %v2852 = vand.u32 %v2851, 4294901760
    %2853 = vmatpush1.msra.mxu0 %v2852
    %2854 = vmatprep.subr.mxu0 0.0
    %v2855 = vand.u32 %v1620, 4294901760
    %v2856 = vsub.f32 %v1620, %v2855
    %v2857 = vand.u32 %v2856, 4294901760
    %v2858 = vsub.f32 %v2856, %v2857
    %v2859 = vand.u32 %v2858, 4294901760
    %2860 = vmatpush1.msra.mxu0 %v2859
    %2861 = vmatprep.subr.mxu0 0.0
    %v2862 = vand.u32 %v1621, 4294901760
    %v2863 = vsub.f32 %v1621, %v2862
    %v2864 = vand.u32 %v2863, 4294901760
    %v2865 = vsub.f32 %v2863, %v2864
    %v2866 = vand.u32 %v2865, 4294901760
    %2867 = vmatpush1.msra.mxu0 %v2866
    %2868 = vmatprep.subr.mxu0 0.0
    %v2869 = vand.u32 %v1622, 4294901760
    %v2870 = vsub.f32 %v1622, %v2869
    %v2871 = vand.u32 %v2870, 4294901760
    %v2872 = vsub.f32 %v2870, %v2871
    %v2873 = vand.u32 %v2872, 4294901760
    %2874 = vmatpush1.msra.mxu0 %v2873
    %2875 = vmatprep.subr.mxu0 0.0
    %v2876 = vand.u32 %v1623, 4294901760
    %v2877 = vsub.f32 %v1623, %v2876
    %v2878 = vand.u32 %v2877, 4294901760
    %v2879 = vsub.f32 %v2877, %v2878
    %v2880 = vand.u32 %v2879, 4294901760
    %2881 = vmatpush1.msra.mxu0 %v2880
    %2882 = vmatprep.subr.mxu0 0.0
    %v2883 = vand.u32 %v1624, 4294901760
    %v2884 = vsub.f32 %v1624, %v2883
    %v2885 = vand.u32 %v2884, 4294901760
    %v2886 = vsub.f32 %v2884, %v2885
    %v2887 = vand.u32 %v2886, 4294901760
    %2888 = vmatpush1.msra.mxu0 %v2887
    %2889 = vmatprep.subr.mxu0 0.0
    %v2890 = vand.u32 %v1625, 4294901760
    %v2891 = vsub.f32 %v1625, %v2890
    %v2892 = vand.u32 %v2891, 4294901760
    %v2893 = vsub.f32 %v2891, %v2892
    %v2894 = vand.u32 %v2893, 4294901760
    %2895 = vmatpush1.msra.mxu0 %v2894
    %2896 = vmatprep.subr.mxu0 0.0
    %2897 = vmatpush1.msra.mxu0 0.0
    %2898 = vmatprep.subr.mxu0 0.0
    %2899 = vmatpush1.msra.mxu0 0.0
    %2900 = vmatprep.subr.mxu0 0.0
    %2901 = vmatpush1.msra.mxu0 0.0
    %2902 = vmatprep.subr.mxu0 0.0
    %2903 = vmatpush1.msra.mxu0 0.0
    %2904 = vmatprep.subr.mxu0 0.0
    %2905 = vmatpush1.msra.mxu0 0.0
    %2906 = vmatprep.subr.mxu0 0.0
    %2907 = vmatpush1.msra.mxu0 0.0
    %2908 = vmatprep.subr.mxu0 0.0
    %2909 = vmatpush1.msra.mxu0 0.0
    %2910 = vmatprep.subr.mxu0 0.0
    %2911 = vmatpush1.msra.mxu0 0.0
    %2912 = vmatprep.subr.mxu0 0.0
    %2913 = vmatpush1.msra.mxu0 0.0
    %2914 = vmatprep.subr.mxu0 0.0
    %2915 = vmatpush1.msra.mxu0 0.0
    %2916 = vmatprep.subr.mxu0 0.0
    %2917 = vmatpush1.msra.mxu0 0.0
    %2918 = vmatprep.subr.mxu0 0.0
    %2919 = vmatpush1.msra.mxu0 0.0
    %2920 = vmatprep.subr.mxu0 0.0
    %2921 = vmatpush1.msra.mxu0 0.0
    %2922 = vmatprep.subr.mxu0 0.0
    %2923 = vmatpush1.msra.mxu0 0.0
    %2924 = vmatprep.subr.mxu0 0.0
    %2925 = vmatpush1.msra.mxu0 0.0
    %2926 = vmatprep.subr.mxu0 0.0
    %2927 = vmatpush1.msra.mxu0 0.0
    %2928 = vmatprep.mubr.f32.mxu0 0.0
    %v2929 = vand.u32 %v1574, 4294901760
    %2930 = vmatmul.mubr.f32.gmra.mrb[0].mxu0 %v2929
    %v2931 = vpop.f32.mrb[0].mxu0
    %v2932 = vadd.f32 %v2751, %v2931
    %v2933 = vpop.f32.mrb[0].mxu0
    %2934 = vmatprep.mubr.f32.mxu0 0.0
    %v2935 = vand.u32 %v1575, 4294901760
    %2936 = vmatmul.mubr.f32.gmra.mrb[0].mxu0 %v2935
    %v2937 = vpop.f32.mrb[0].mxu0
    %v2938 = vadd.f32 %v2761, %v2937
    %v2939 = vpop.f32.mrb[0].mxu0
    %2940 = vmatprep.mubr.f32.mxu0 0.0
    %v2941 = vand.u32 %v1576, 4294901760
    %2942 = vmatmul.mubr.f32.gmra.mrb[0].mxu0 %v2941
    %v2943 = vpop.f32.mrb[0].mxu0
    %v2944 = vadd.f32 %v2771, %v2943
    %v2945 = vpop.f32.mrb[0].mxu0
    %2946 = vmatprep.mubr.f32.mxu0 0.0
    %v2947 = vand.u32 %v1577, 4294901760
    %2948 = vmatmul.mubr.f32.gmra.mrb[0].mxu0 %v2947
    %v2949 = vpop.f32.mrb[0].mxu0
    %v2950 = vadd.f32 %v2781, %v2949
    %v2951 = vpop.f32.mrb[0].mxu0
    %2952 = vdwg.mxu0
    %2953 = vmatprep.subr.mxu0 0.0
    %v2954 = vand.u32 %v1610, 4294901760
    %v2955 = vsub.f32 %v1610, %v2954
    %2956 = vmatpush1.msra.mxu0 %v2955
    %2957 = vmatprep.subr.mxu0 0.0
    %v2958 = vand.u32 %v1611, 4294901760
    %v2959 = vsub.f32 %v1611, %v2958
    %2960 = vmatpush1.msra.mxu0 %v2959
    %2961 = vmatprep.subr.mxu0 0.0
    %v2962 = vand.u32 %v1612, 4294901760
    %v2963 = vsub.f32 %v1612, %v2962
    %2964 = vmatpush1.msra.mxu0 %v2963
    %2965 = vmatprep.subr.mxu0 0.0
    %v2966 = vand.u32 %v1613, 4294901760
    %v2967 = vsub.f32 %v1613, %v2966
    %2968 = vmatpush1.msra.mxu0 %v2967
    %2969 = vmatprep.subr.mxu0 0.0
    %v2970 = vand.u32 %v1614, 4294901760
    %v2971 = vsub.f32 %v1614, %v2970
    %2972 = vmatpush1.msra.mxu0 %v2971
    %2973 = vmatprep.subr.mxu0 0.0
    %v2974 = vand.u32 %v1615, 4294901760
    %v2975 = vsub.f32 %v1615, %v2974
    %2976 = vmatpush1.msra.mxu0 %v2975
    %2977 = vmatprep.subr.mxu0 0.0
    %v2978 = vand.u32 %v1616, 4294901760
    %v2979 = vsub.f32 %v1616, %v2978
    %2980 = vmatpush1.msra.mxu0 %v2979
    %2981 = vmatprep.subr.mxu0 0.0
    %v2982 = vand.u32 %v1617, 4294901760
    %v2983 = vsub.f32 %v1617, %v2982
    %2984 = vmatpush1.msra.mxu0 %v2983
    %2985 = vmatprep.subr.mxu0 0.0
    %v2986 = vand.u32 %v1618, 4294901760
    %v2987 = vsub.f32 %v1618, %v2986
    %2988 = vmatpush1.msra.mxu0 %v2987
    %2989 = vmatprep.subr.mxu0 0.0
    %v2990 = vand.u32 %v1619, 4294901760
    %v2991 = vsub.f32 %v1619, %v2990
    %2992 = vmatpush1.msra.mxu0 %v2991
    %2993 = vmatprep.subr.mxu0 0.0
    %v2994 = vand.u32 %v1620, 4294901760
    %v2995 = vsub.f32 %v1620, %v2994
    %2996 = vmatpush1.msra.mxu0 %v2995
    %2997 = vmatprep.subr.mxu0 0.0
    %v2998 = vand.u32 %v1621, 4294901760
    %v2999 = vsub.f32 %v1621, %v2998
    %3000 = vmatpush1.msra.mxu0 %v2999
    %3001 = vmatprep.subr.mxu0 0.0
    %v3002 = vand.u32 %v1622, 4294901760
    %v3003 = vsub.f32 %v1622, %v3002
    %3004 = vmatpush1.msra.mxu0 %v3003
    %3005 = vmatprep.subr.mxu0 0.0
    %v3006 = vand.u32 %v1623, 4294901760
    %v3007 = vsub.f32 %v1623, %v3006
    %3008 = vmatpush1.msra.mxu0 %v3007
    %3009 = vmatprep.subr.mxu0 0.0
    %v3010 = vand.u32 %v1624, 4294901760
    %v3011 = vsub.f32 %v1624, %v3010
    %3012 = vmatpush1.msra.mxu0 %v3011
    %3013 = vmatprep.subr.mxu0 0.0
    %v3014 = vand.u32 %v1625, 4294901760
    %v3015 = vsub.f32 %v1625, %v3014
    %3016 = vmatpush1.msra.mxu0 %v3015
    %3017 = vmatprep.subr.mxu0 0.0
    %3018 = vmatpush1.msra.mxu0 0.0
    %3019 = vmatprep.subr.mxu0 0.0
    %3020 = vmatpush1.msra.mxu0 0.0
    %3021 = vmatprep.subr.mxu0 0.0
    %3022 = vmatpush1.msra.mxu0 0.0
    %3023 = vmatprep.subr.mxu0 0.0
    %3024 = vmatpush1.msra.mxu0 0.0
    %3025 = vmatprep.subr.mxu0 0.0
    %3026 = vmatpush1.msra.mxu0 0.0
    %3027 = vmatprep.subr.mxu0 0.0
    %3028 = vmatpush1.msra.mxu0 0.0
    %3029 = vmatprep.subr.mxu0 0.0
    %3030 = vmatpush1.msra.mxu0 0.0
    %3031 = vmatprep.subr.mxu0 0.0
    %3032 = vmatpush1.msra.mxu0 0.0
    %3033 = vmatprep.subr.mxu0 0.0
    %3034 = vmatpush1.msra.mxu0 0.0
    %3035 = vmatprep.subr.mxu0 0.0
    %3036 = vmatpush1.msra.mxu0 0.0
    %3037 = vmatprep.subr.mxu0 0.0
    %3038 = vmatpush1.msra.mxu0 0.0
    %3039 = vmatprep.subr.mxu0 0.0
    %3040 = vmatpush1.msra.mxu0 0.0
    %3041 = vmatprep.subr.mxu0 0.0
    %3042 = vmatpush1.msra.mxu0 0.0
    %3043 = vmatprep.subr.mxu0 0.0
    %3044 = vmatpush1.msra.mxu0 0.0
    %3045 = vmatprep.subr.mxu0 0.0
    %3046 = vmatpush1.msra.mxu0 0.0
    %3047 = vmatprep.subr.mxu0 0.0
    %3048 = vmatpush1.msra.mxu0 0.0
    %3049 = vmatprep.mubr.f32.mxu0 0.0
    %v3050 = vand.u32 %v1574, 4294901760
    %v3051 = vsub.f32 %v1574, %v3050
    %3052 = vmatmul.mubr.f32.gmra.mrb[0].mxu0 %v3051
    %v3053 = vpop.f32.mrb[0].mxu0
    %v3054 = vadd.f32 %v2932, %v3053
    %v3055 = vpop.f32.mrb[0].mxu0
    %3056 = vmatprep.mubr.f32.mxu0 0.0
    %v3057 = vand.u32 %v1575, 4294901760
    %v3058 = vsub.f32 %v1575, %v3057
    %3059 = vmatmul.mubr.f32.gmra.mrb[0].mxu0 %v3058
    %v3060 = vpop.f32.mrb[0].mxu0
    %v3061 = vadd.f32 %v2938, %v3060
    %v3062 = vpop.f32.mrb[0].mxu0
    %3063 = vmatprep.mubr.f32.mxu0 0.0
    %v3064 = vand.u32 %v1576, 4294901760
    %v3065 = vsub.f32 %v1576, %v3064
    %3066 = vmatmul.mubr.f32.gmra.mrb[0].mxu0 %v3065
    %v3067 = vpop.f32.mrb[0].mxu0
    %v3068 = vadd.f32 %v2944, %v3067
    %v3069 = vpop.f32.mrb[0].mxu0
    %3070 = vmatprep.mubr.f32.mxu0 0.0
    %v3071 = vand.u32 %v1577, 4294901760
    %v3072 = vsub.f32 %v1577, %v3071
    %3073 = vmatmul.mubr.f32.gmra.mrb[0].mxu0 %v3072
    %v3074 = vpop.f32.mrb[0].mxu0
    %v3075 = vadd.f32 %v2950, %v3074
    %v3076 = vpop.f32.mrb[0].mxu0
    %3077 = vdwg.mxu0
    %3078 = vmatprep.subr.mxu0 0.0
    %v3079 = vand.u32 %v1610, 4294901760
    %3080 = vmatpush1.msra.mxu0 %v3079
    %3081 = vmatprep.subr.mxu0 0.0
    %v3082 = vand.u32 %v1611, 4294901760
    %3083 = vmatpush1.msra.mxu0 %v3082
    %3084 = vmatprep.subr.mxu0 0.0
    %v3085 = vand.u32 %v1612, 4294901760
    %3086 = vmatpush1.msra.mxu0 %v3085
    %3087 = vmatprep.subr.mxu0 0.0
    %v3088 = vand.u32 %v1613, 4294901760
    %3089 = vmatpush1.msra.mxu0 %v3088
    %3090 = vmatprep.subr.mxu0 0.0
    %v3091 = vand.u32 %v1614, 4294901760
    %3092 = vmatpush1.msra.mxu0 %v3091
    %3093 = vmatprep.subr.mxu0 0.0
    %v3094 = vand.u32 %v1615, 4294901760
    %3095 = vmatpush1.msra.mxu0 %v3094
    %3096 = vmatprep.subr.mxu0 0.0
    %v3097 = vand.u32 %v1616, 4294901760
    %3098 = vmatpush1.msra.mxu0 %v3097
    %3099 = vmatprep.subr.mxu0 0.0
    %v3100 = vand.u32 %v1617, 4294901760
    %3101 = vmatpush1.msra.mxu0 %v3100
    %3102 = vmatprep.subr.mxu0 0.0
    %v3103 = vand.u32 %v1618, 4294901760
    %3104 = vmatpush1.msra.mxu0 %v3103
    %3105 = vmatprep.subr.mxu0 0.0
    %v3106 = vand.u32 %v1619, 4294901760
    %3107 = vmatpush1.msra.mxu0 %v3106
    %3108 = vmatprep.subr.mxu0 0.0
    %v3109 = vand.u32 %v1620, 4294901760
    %3110 = vmatpush1.msra.mxu0 %v3109
    %3111 = vmatprep.subr.mxu0 0.0
    %v3112 = vand.u32 %v1621, 4294901760
    %3113 = vmatpush1.msra.mxu0 %v3112
    %3114 = vmatprep.subr.mxu0 0.0
    %v3115 = vand.u32 %v1622, 4294901760
    %3116 = vmatpush1.msra.mxu0 %v3115
    %3117 = vmatprep.subr.mxu0 0.0
    %v3118 = vand.u32 %v1623, 4294901760
    %3119 = vmatpush1.msra.mxu0 %v3118
    %3120 = vmatprep.subr.mxu0 0.0
    %v3121 = vand.u32 %v1624, 4294901760
    %3122 = vmatpush1.msra.mxu0 %v3121
    %3123 = vmatprep.subr.mxu0 0.0
    %v3124 = vand.u32 %v1625, 4294901760
    %3125 = vmatpush1.msra.mxu0 %v3124
    %3126 = vmatprep.subr.mxu0 0.0
    %3127 = vmatpush1.msra.mxu0 0.0
    %3128 = vmatprep.subr.mxu0 0.0
    %3129 = vmatpush1.msra.mxu0 0.0
    %3130 = vmatprep.subr.mxu0 0.0
    %3131 = vmatpush1.msra.mxu0 0.0
    %3132 = vmatprep.subr.mxu0 0.0
    %3133 = vmatpush1.msra.mxu0 0.0
    %3134 = vmatprep.subr.mxu0 0.0
    %3135 = vmatpush1.msra.mxu0 0.0
    %3136 = vmatprep.subr.mxu0 0.0
    %3137 = vmatpush1.msra.mxu0 0.0
    %3138 = vmatprep.subr.mxu0 0.0
    %3139 = vmatpush1.msra.mxu0 0.0
    %3140 = vmatprep.subr.mxu0 0.0
    %3141 = vmatpush1.msra.mxu0 0.0
    %3142 = vmatprep.subr.mxu0 0.0
    %3143 = vmatpush1.msra.mxu0 0.0
    %3144 = vmatprep.subr.mxu0 0.0
    %3145 = vmatpush1.msra.mxu0 0.0
    %3146 = vmatprep.subr.mxu0 0.0
    %3147 = vmatpush1.msra.mxu0 0.0
    %3148 = vmatprep.subr.mxu0 0.0
    %3149 = vmatpush1.msra.mxu0 0.0
    %3150 = vmatprep.subr.mxu0 0.0
    %3151 = vmatpush1.msra.mxu0 0.0
    %3152 = vmatprep.subr.mxu0 0.0
    %3153 = vmatpush1.msra.mxu0 0.0
    %3154 = vmatprep.subr.mxu0 0.0
    %3155 = vmatpush1.msra.mxu0 0.0
    %3156 = vmatprep.subr.mxu0 0.0
    %3157 = vmatpush1.msra.mxu0 0.0
    %3158 = vmatprep.mubr.f32.mxu0 0.0
    %v3159 = vand.u32 %v1574, 4294901760
    %v3160 = vsub.f32 %v1574, %v3159
    %v3161 = vand.u32 %v3160, 4294901760
    %3162 = vmatmul.mubr.f32.gmra.mrb[0].mxu0 %v3161
    %v3163 = vpop.f32.mrb[0].mxu0
    %v3164 = vadd.f32 %v3054, %v3163
    %v3165 = vpop.f32.mrb[0].mxu0
    %3166 = vmatprep.mubr.f32.mxu0 0.0
    %v3167 = vand.u32 %v1575, 4294901760
    %v3168 = vsub.f32 %v1575, %v3167
    %v3169 = vand.u32 %v3168, 4294901760
    %3170 = vmatmul.mubr.f32.gmra.mrb[0].mxu0 %v3169
    %v3171 = vpop.f32.mrb[0].mxu0
    %v3172 = vadd.f32 %v3061, %v3171
    %v3173 = vpop.f32.mrb[0].mxu0
    %3174 = vmatprep.mubr.f32.mxu0 0.0
    %v3175 = vand.u32 %v1576, 4294901760
    %v3176 = vsub.f32 %v1576, %v3175
    %v3177 = vand.u32 %v3176, 4294901760
    %3178 = vmatmul.mubr.f32.gmra.mrb[0].mxu0 %v3177
    %v3179 = vpop.f32.mrb[0].mxu0
    %v3180 = vadd.f32 %v3068, %v3179
    %v3181 = vpop.f32.mrb[0].mxu0
    %3182 = vmatprep.mubr.f32.mxu0 0.0
    %v3183 = vand.u32 %v1577, 4294901760
    %v3184 = vsub.f32 %v1577, %v3183
    %v3185 = vand.u32 %v3184, 4294901760
    %3186 = vmatmul.mubr.f32.gmra.mrb[0].mxu0 %v3185
    %v3187 = vpop.f32.mrb[0].mxu0
    %v3188 = vadd.f32 %v3075, %v3187
    %v3189 = vpop.f32.mrb[0].mxu0
    %3190 = vdwg.mxu0
    %3191 = vmatprep.subr.mxu0 0.0
    %v3192 = vand.u32 %v1610, 4294901760
    %v3193 = vsub.f32 %v1610, %v3192
    %v3194 = vand.u32 %v3193, 4294901760
    %3195 = vmatpush1.msra.mxu0 %v3194
    %3196 = vmatprep.subr.mxu0 0.0
    %v3197 = vand.u32 %v1611, 4294901760
    %v3198 = vsub.f32 %v1611, %v3197
    %v3199 = vand.u32 %v3198, 4294901760
    %3200 = vmatpush1.msra.mxu0 %v3199
    %3201 = vmatprep.subr.mxu0 0.0
    %v3202 = vand.u32 %v1612, 4294901760
    %v3203 = vsub.f32 %v1612, %v3202
    %v3204 = vand.u32 %v3203, 4294901760
    %3205 = vmatpush1.msra.mxu0 %v3204
    %3206 = vmatprep.subr.mxu0 0.0
    %v3207 = vand.u32 %v1613, 4294901760
    %v3208 = vsub.f32 %v1613, %v3207
    %v3209 = vand.u32 %v3208, 4294901760
    %3210 = vmatpush1.msra.mxu0 %v3209
    %3211 = vmatprep.subr.mxu0 0.0
    %v3212 = vand.u32 %v1614, 4294901760
    %v3213 = vsub.f32 %v1614, %v3212
    %v3214 = vand.u32 %v3213, 4294901760
    %3215 = vmatpush1.msra.mxu0 %v3214
    %3216 = vmatprep.subr.mxu0 0.0
    %v3217 = vand.u32 %v1615, 4294901760
    %v3218 = vsub.f32 %v1615, %v3217
    %v3219 = vand.u32 %v3218, 4294901760
    %3220 = vmatpush1.msra.mxu0 %v3219
    %3221 = vmatprep.subr.mxu0 0.0
    %v3222 = vand.u32 %v1616, 4294901760
    %v3223 = vsub.f32 %v1616, %v3222
    %v3224 = vand.u32 %v3223, 4294901760
    %3225 = vmatpush1.msra.mxu0 %v3224
    %3226 = vmatprep.subr.mxu0 0.0
    %v3227 = vand.u32 %v1617, 4294901760
    %v3228 = vsub.f32 %v1617, %v3227
    %v3229 = vand.u32 %v3228, 4294901760
    %3230 = vmatpush1.msra.mxu0 %v3229
    %3231 = vmatprep.subr.mxu0 0.0
    %v3232 = vand.u32 %v1618, 4294901760
    %v3233 = vsub.f32 %v1618, %v3232
    %v3234 = vand.u32 %v3233, 4294901760
    %3235 = vmatpush1.msra.mxu0 %v3234
    %3236 = vmatprep.subr.mxu0 0.0
    %v3237 = vand.u32 %v1619, 4294901760
    %v3238 = vsub.f32 %v1619, %v3237
    %v3239 = vand.u32 %v3238, 4294901760
    %3240 = vmatpush1.msra.mxu0 %v3239
    %3241 = vmatprep.subr.mxu0 0.0
    %v3242 = vand.u32 %v1620, 4294901760
    %v3243 = vsub.f32 %v1620, %v3242
    %v3244 = vand.u32 %v3243, 4294901760
    %3245 = vmatpush1.msra.mxu0 %v3244
    %3246 = vmatprep.subr.mxu0 0.0
    %v3247 = vand.u32 %v1621, 4294901760
    %v3248 = vsub.f32 %v1621, %v3247
    %v3249 = vand.u32 %v3248, 4294901760
    %3250 = vmatpush1.msra.mxu0 %v3249
    %3251 = vmatprep.subr.mxu0 0.0
    %v3252 = vand.u32 %v1622, 4294901760
    %v3253 = vsub.f32 %v1622, %v3252
    %v3254 = vand.u32 %v3253, 4294901760
    %3255 = vmatpush1.msra.mxu0 %v3254
    %3256 = vmatprep.subr.mxu0 0.0
    %v3257 = vand.u32 %v1623, 4294901760
    %v3258 = vsub.f32 %v1623, %v3257
    %v3259 = vand.u32 %v3258, 4294901760
    %3260 = vmatpush1.msra.mxu0 %v3259
    %3261 = vmatprep.subr.mxu0 0.0
    %v3262 = vand.u32 %v1624, 4294901760
    %v3263 = vsub.f32 %v1624, %v3262
    %v3264 = vand.u32 %v3263, 4294901760
    %3265 = vmatpush1.msra.mxu0 %v3264
    %3266 = vmatprep.subr.mxu0 0.0
    %v3267 = vand.u32 %v1625, 4294901760
    %v3268 = vsub.f32 %v1625, %v3267
    %v3269 = vand.u32 %v3268, 4294901760
    %3270 = vmatpush1.msra.mxu0 %v3269
    %3271 = vmatprep.subr.mxu0 0.0
    %3272 = vmatpush1.msra.mxu0 0.0
    %3273 = vmatprep.subr.mxu0 0.0
    %3274 = vmatpush1.msra.mxu0 0.0
    %3275 = vmatprep.subr.mxu0 0.0
    %3276 = vmatpush1.msra.mxu0 0.0
    %3277 = vmatprep.subr.mxu0 0.0
    %3278 = vmatpush1.msra.mxu0 0.0
    %3279 = vmatprep.subr.mxu0 0.0
    %3280 = vmatpush1.msra.mxu0 0.0
    %3281 = vmatprep.subr.mxu0 0.0
    %3282 = vmatpush1.msra.mxu0 0.0
    %3283 = vmatprep.subr.mxu0 0.0
    %3284 = vmatpush1.msra.mxu0 0.0
    %3285 = vmatprep.subr.mxu0 0.0
    %3286 = vmatpush1.msra.mxu0 0.0
    %3287 = vmatprep.subr.mxu0 0.0
    %3288 = vmatpush1.msra.mxu0 0.0
    %3289 = vmatprep.subr.mxu0 0.0
    %3290 = vmatpush1.msra.mxu0 0.0
    %3291 = vmatprep.subr.mxu0 0.0
    %3292 = vmatpush1.msra.mxu0 0.0
    %3293 = vmatprep.subr.mxu0 0.0
    %3294 = vmatpush1.msra.mxu0 0.0
    %3295 = vmatprep.subr.mxu0 0.0
    %3296 = vmatpush1.msra.mxu0 0.0
    %3297 = vmatprep.subr.mxu0 0.0
    %3298 = vmatpush1.msra.mxu0 0.0
    %3299 = vmatprep.subr.mxu0 0.0
    %3300 = vmatpush1.msra.mxu0 0.0
    %3301 = vmatprep.subr.mxu0 0.0
    %3302 = vmatpush1.msra.mxu0 0.0
    %3303 = vmatprep.mubr.f32.mxu0 0.0
    %v3304 = vand.u32 %v1574, 4294901760
    %3305 = vmatmul.mubr.f32.gmra.mrb[0].mxu0 %v3304
    %v3306 = vpop.f32.mrb[0].mxu0
    %v3307 = vadd.f32 %v3164, %v3306
    %v3308 = vpop.f32.mrb[0].mxu0
    %3309 = vmatprep.mubr.f32.mxu0 0.0
    %v3310 = vand.u32 %v1575, 4294901760
    %3311 = vmatmul.mubr.f32.gmra.mrb[0].mxu0 %v3310
    %v3312 = vpop.f32.mrb[0].mxu0
    %v3313 = vadd.f32 %v3172, %v3312
    %v3314 = vpop.f32.mrb[0].mxu0
    %3315 = vmatprep.mubr.f32.mxu0 0.0
    %v3316 = vand.u32 %v1576, 4294901760
    %3317 = vmatmul.mubr.f32.gmra.mrb[0].mxu0 %v3316
    %v3318 = vpop.f32.mrb[0].mxu0
    %v3319 = vadd.f32 %v3180, %v3318
    %v3320 = vpop.f32.mrb[0].mxu0
    %3321 = vmatprep.mubr.f32.mxu0 0.0
    %v3322 = vand.u32 %v1577, 4294901760
    %3323 = vmatmul.mubr.f32.gmra.mrb[0].mxu0 %v3322
    %v3324 = vpop.f32.mrb[0].mxu0
    %v3325 = vadd.f32 %v3188, %v3324
    %v3326 = vpop.f32.mrb[0].mxu0
    %3327 = vdwg.mxu0
    %3328 = vmatprep.subr.mxu0 0.0
    %v3329 = vand.u32 %v1610, 4294901760
    %3330 = vmatpush1.msra.mxu0 %v3329
    %3331 = vmatprep.subr.mxu0 0.0
    %v3332 = vand.u32 %v1611, 4294901760
    %3333 = vmatpush1.msra.mxu0 %v3332
    %3334 = vmatprep.subr.mxu0 0.0
    %v3335 = vand.u32 %v1612, 4294901760
    %3336 = vmatpush1.msra.mxu0 %v3335
    %3337 = vmatprep.subr.mxu0 0.0
    %v3338 = vand.u32 %v1613, 4294901760
    %3339 = vmatpush1.msra.mxu0 %v3338
    %3340 = vmatprep.subr.mxu0 0.0
    %v3341 = vand.u32 %v1614, 4294901760
    %3342 = vmatpush1.msra.mxu0 %v3341
    %3343 = vmatprep.subr.mxu0 0.0
    %v3344 = vand.u32 %v1615, 4294901760
    %3345 = vmatpush1.msra.mxu0 %v3344
    %3346 = vmatprep.subr.mxu0 0.0
    %v3347 = vand.u32 %v1616, 4294901760
    %3348 = vmatpush1.msra.mxu0 %v3347
    %3349 = vmatprep.subr.mxu0 0.0
    %v3350 = vand.u32 %v1617, 4294901760
    %3351 = vmatpush1.msra.mxu0 %v3350
    %3352 = vmatprep.subr.mxu0 0.0
    %v3353 = vand.u32 %v1618, 4294901760
    %3354 = vmatpush1.msra.mxu0 %v3353
    %3355 = vmatprep.subr.mxu0 0.0
    %v3356 = vand.u32 %v1619, 4294901760
    %3357 = vmatpush1.msra.mxu0 %v3356
    %3358 = vmatprep.subr.mxu0 0.0
    %v3359 = vand.u32 %v1620, 4294901760
    %3360 = vmatpush1.msra.mxu0 %v3359
    %3361 = vmatprep.subr.mxu0 0.0
    %v3362 = vand.u32 %v1621, 4294901760
    %3363 = vmatpush1.msra.mxu0 %v3362
    %3364 = vmatprep.subr.mxu0 0.0
    %v3365 = vand.u32 %v1622, 4294901760
    %3366 = vmatpush1.msra.mxu0 %v3365
    %3367 = vmatprep.subr.mxu0 0.0
    %v3368 = vand.u32 %v1623, 4294901760
    %3369 = vmatpush1.msra.mxu0 %v3368
    %3370 = vmatprep.subr.mxu0 0.0
    %v3371 = vand.u32 %v1624, 4294901760
    %3372 = vmatpush1.msra.mxu0 %v3371
    %3373 = vmatprep.subr.mxu0 0.0
    %v3374 = vand.u32 %v1625, 4294901760
    %3375 = vmatpush1.msra.mxu0 %v3374
    %3376 = vmatprep.subr.mxu0 0.0
    %3377 = vmatpush1.msra.mxu0 0.0
    %3378 = vmatprep.subr.mxu0 0.0
    %3379 = vmatpush1.msra.mxu0 0.0
    %3380 = vmatprep.subr.mxu0 0.0
    %3381 = vmatpush1.msra.mxu0 0.0
    %3382 = vmatprep.subr.mxu0 0.0
    %3383 = vmatpush1.msra.mxu0 0.0
    %3384 = vmatprep.subr.mxu0 0.0
    %3385 = vmatpush1.msra.mxu0 0.0
    %3386 = vmatprep.subr.mxu0 0.0
    %3387 = vmatpush1.msra.mxu0 0.0
    %3388 = vmatprep.subr.mxu0 0.0
    %3389 = vmatpush1.msra.mxu0 0.0
    %3390 = vmatprep.subr.mxu0 0.0
    %3391 = vmatpush1.msra.mxu0 0.0
    %3392 = vmatprep.subr.mxu0 0.0
    %3393 = vmatpush1.msra.mxu0 0.0
    %3394 = vmatprep.subr.mxu0 0.0
    %3395 = vmatpush1.msra.mxu0 0.0
    %3396 = vmatprep.subr.mxu0 0.0
    %3397 = vmatpush1.msra.mxu0 0.0
    %3398 = vmatprep.subr.mxu0 0.0
    %3399 = vmatpush1.msra.mxu0 0.0
    %3400 = vmatprep.subr.mxu0 0.0
    %3401 = vmatpush1.msra.mxu0 0.0
    %3402 = vmatprep.subr.mxu0 0.0
    %3403 = vmatpush1.msra.mxu0 0.0
    %3404 = vmatprep.subr.mxu0 0.0
    %3405 = vmatpush1.msra.mxu0 0.0
    %3406 = vmatprep.subr.mxu0 0.0
    %3407 = vmatpush1.msra.mxu0 0.0
    %3408 = vmatprep.mubr.f32.mxu0 0.0
    %v3409 = vand.u32 %v1574, 4294901760
    %3410 = vmatmul.mubr.f32.gmra.mrb[0].mxu0 %v3409
    %v3411 = vpop.f32.mrb[0].mxu0
    %v3412 = vadd.f32 %v3307, %v3411
    %v3413 = vpop.f32.mrb[0].mxu0
    %3414 = vmatprep.mubr.f32.mxu0 0.0
    %v3415 = vand.u32 %v1575, 4294901760
    %3416 = vmatmul.mubr.f32.gmra.mrb[0].mxu0 %v3415
    %v3417 = vpop.f32.mrb[0].mxu0
    %v3418 = vadd.f32 %v3313, %v3417
    %v3419 = vpop.f32.mrb[0].mxu0
    %3420 = vmatprep.mubr.f32.mxu0 0.0
    %v3421 = vand.u32 %v1576, 4294901760
    %3422 = vmatmul.mubr.f32.gmra.mrb[0].mxu0 %v3421
    %v3423 = vpop.f32.mrb[0].mxu0
    %v3424 = vadd.f32 %v3319, %v3423
    %v3425 = vpop.f32.mrb[0].mxu0
    %3426 = vmatprep.mubr.f32.mxu0 0.0
    %v3427 = vand.u32 %v1577, 4294901760
    %3428 = vmatmul.mubr.f32.gmra.mrb[0].mxu0 %v3427
    %v3429 = vpop.f32.mrb[0].mxu0
    %v3430 = vadd.f32 %v3325, %v3429
    %v3431 = vpop.f32.mrb[0].mxu0
    %3432 = vdwg.mxu0
    %3433 = vst [vmem:[#allocation11] sm:$0xff] %v3412
    %3434 = vst [vmem:[#allocation11 + $0x8] sm:$0xff] %v3418
    %3435 = vst [vmem:[#allocation11 + $0x10] sm:$0xff] %v3424
    %3436 = vst [vmem:[#allocation11 + $0x18] sm:$0xff] %v3430
    // Predicated region
    $region50: #{tpu_custom_call.1} parent=1 // pred_check
      _
    $region51: #{tpu_custom_call.1} parent=1 // pred_check_branch
      %3438 = sbr.rel (0) target = $region53
    $region52: #{tpu_custom_call.1} parent=1 // pred_region
      %s3440 = ssub.s32 512, 512
      %3441 = vsyncadd [#allocation4], %s3440
      %s3442 = sshll.u32 [#allocation11], 4
      %s3443 = int_to_ptr.vmem [resolvable:$true] %s3442
      %3448 = dma.vmem_to_hbm [thread:$0]  %s3443, 512, %s7, [#allocation4], 128, 128, 8
    $region53: #{tpu_custom_call.1} parent=1 // pred_fallthru
      _
    // Predicated region
    $region54: #{tpu_custom_call.1} parent=1 // pred_check
      _
    $region55: #{tpu_custom_call.1} parent=1 // pred_check_branch
      %3450 = sbr.rel (0) target = $region57
    $region56: #{tpu_custom_call.1} parent=1 // pred_region
      %3451 = dma.done [#allocation4], 512
    $region57: #{tpu_custom_call.1} parent=1 // pred_fallthru
      _
    %3452 = vsyncpa [#allocation3], 1
    %3453 = vsyncpa [#allocation6], 1
    %3454 = vsyncpa [#allocation9], 1
    %3455 = vsyncpa [#allocation4], 1

</llo_original>
